<compile_context>
chip_gen: v6e
topology: v6e:2x2x1
jax: 0.10.0
libtpu: 0.0.40
codegen_flags: <defaults>
</compile_context>

<pallas_src>
import jax
import jax.numpy as jnp
from jax import lax
from jax.experimental import pallas as pl
from jax.experimental.pallas import tpu as pltpu


def _silu(x):
    return x * jax.nn.sigmoid(x)


def _round_up(x, m):
    return (x + m - 1) // m * m


def egcl_kernel(h_ref, coord_ref, row_s_ref, col_s_ref, row_l_ref,
                w1hr_ref, w1hc_ref, w1rad_ref, b1_ref, w2_ref, b2_ref,
                wc1_ref, bc1_ref, wc2_ref,
                wn1h_ref, wn1a_ref, bn1_ref, wn2_ref, bn2_ref,
                h_out_ref, coord_out_ref,
                ntab_ref, agg_ref):
    f32 = jnp.float32
    bf16 = jnp.bfloat16
    N = h_ref.shape[0]
    D = coord_ref.shape[1]
    H = w2_ref.shape[0]            # hidden_nf
    C = agg_ref.shape[1]           # lane-padded packed width (mult of 128)
    TE = row_s_ref.shape[0]        # edge-tile size
    pad_w = C - H - D
    step = pl.program_id(0)
    last = pl.num_programs(0) - 1

    # ---- step 0: hoist edge-MLP layer 1 to node granularity; build the
    #      packed bf16 node table [ h@W1_row | +coord ; h@W1_col | -coord ]
    #      (negated coords in the col half => the fused gather matmul emits
    #      pre_row+pre_col in the feature lanes and coord_diff in the coord
    #      lanes directly); zero the f32 accumulator.
    @pl.when(step == 0)
    def _init():
        h = h_ref[...]
        coord = coord_ref[...]
        top = [jnp.dot(h, w1hr_ref[...], preferred_element_type=f32), coord]
        bot = [jnp.dot(h, w1hc_ref[...], preferred_element_type=f32), -coord]
        if pad_w:
            zpad = jnp.zeros((N, pad_w), f32)
            top.append(zpad)
            bot.append(zpad)
        ntab = jnp.concatenate(
            [jnp.concatenate(top, axis=1), jnp.concatenate(bot, axis=1)], axis=0)
        ntab_ref[...] = ntab.astype(bf16)
        agg_ref[...] = jnp.zeros_like(agg_ref)

    # ---- fused index -> one-hot gather.  Masks are rebuilt in-kernel from
    #      the per-tile int32 indices (only O(E) index bytes stream from HBM).
    #      They are exact 0/1 in bf16, so both MXU matmuls take the fast bf16
    #      path with f32 accumulation.  Padded edges carry out-of-range
    #      indices -> all-zero mask rows (no-op gather and scatter).
    row_s = row_s_ref[...]                                    # [TE, 1] (pad: 2N)
    col_s = col_s_ref[...]                                    # [TE, 1] (pad: N)
    eiota = lax.broadcasted_iota(jnp.int32, (TE, 2 * N), 1)
    mask2 = (jnp.logical_or(eiota == row_s, eiota == col_s + N)
             .astype(f32).astype(bf16))                       # [TE, 2N]

    g = jnp.dot(mask2, ntab_ref[...], preferred_element_type=f32)   # [TE, C]
    pre_rc = g[:, :H]                  # h[row] @ W1_r + h[col] @ W1_c
    coord_diff = g[:, H:H + D]         # coord[row] - coord[col]

    # ---- coord2radial (norm_diff=True); reciprocal stays on the EUP slot
    radial = jnp.sum(coord_diff * coord_diff, axis=1, keepdims=True)  # [TE, 1]
    inv = pl.reciprocal(jnp.sqrt(radial + 1e-8) + 1.0, approx=True)
    coord_diff = coord_diff * inv

    # ---- edge MLP (layer 1 already applied per node; radial term is a VPU
    #      broadcast-multiply instead of a K=1 MXU matmul)
    pre1 = pre_rc + radial * w1rad_ref[...] + b1_ref[...]
    e1 = _silu(pre1)
    edge_feat = _silu(jnp.dot(e1, w2_ref[...], preferred_element_type=f32)
                      + b2_ref[...])                                  # [TE, H]

    # ---- coord MLP (final Linear(H->1, no bias) as VPU mul + lane reduction)
    cm = _silu(jnp.dot(edge_feat, wc1_ref[...], preferred_element_type=f32)
               + bc1_ref[...])
    scal = jnp.sum(cm * wc2_ref[...], axis=1, keepdims=True)          # [TE, 1]
    trans = coord_diff * scal                                         # [TE, D]

    # ---- fused segment-sum over `row`:  rowmask^T @ [edge_feat | trans | 0]
    #      The transposed mask is built directly from the lane-major copy of
    #      the row indices, so the scatter matmul stays in standard form.
    row_l = row_l_ref[...]                                    # [1, TE] (pad: N)
    niota = lax.broadcasted_iota(jnp.int32, (N, TE), 0)
    m_rowT = (niota == row_l).astype(f32).astype(bf16)        # [N, TE]

    parts = [edge_feat, trans]
    if pad_w:
        parts.append(jnp.zeros((TE, pad_w), f32))
    scat = jnp.concatenate(parts, axis=1).astype(bf16)        # [TE, C]
    agg_ref[...] += jnp.dot(m_rowT, scat, preferred_element_type=f32)  # [N, C]

    # ---- last step: node MLP + recurrent residual + coordinate update
    @pl.when(step == last)
    def _finalize():
        h = h_ref[...]
        agg = agg_ref[...]
        agg_edge = agg[:, :H]
        agg_trans = agg[:, H:H + D]
        npre = (jnp.dot(h, wn1h_ref[...], preferred_element_type=f32)
                + jnp.dot(agg_edge, wn1a_ref[...], preferred_element_type=f32)
                + bn1_ref[...])
        n1 = _silu(npre)
        out = jnp.dot(n1, wn2_ref[...], preferred_element_type=f32) + bn2_ref[...]
        h_out_ref[...] = (h + out).astype(h_out_ref.dtype)          # recurrent
        coord_out_ref[...] = (coord_ref[...] + agg_trans).astype(coord_out_ref.dtype)


def egcl_forward(h, coord, row, col, p, *, edge_tile=512):
    N, F = h.shape
    D = coord.shape[1]
    H = p['w2'].shape[0]
    O = p['wn2'].shape[1]
    assert O == F, "recurrent residual requires output_nf == input_nf"
    E = row.shape[0]

    # lane-padded packed width of [features | coords]
    C = _round_up(H + D, 128)

    # edge tile: multiple of 128 (lane-major index tile must be lane aligned);
    # padded edges carry out-of-range indices -> exact no-ops in the kernel.
    te = min(edge_tile, _round_up(E, 128))
    te = _round_up(te, 128)
    E_pad = _round_up(E, te)

    row_i = row.astype(jnp.int32)
    col_i = col.astype(jnp.int32)
    row_s = jnp.pad(row_i, (0, E_pad - E), constant_values=2 * N).reshape(E_pad, 1)
    col_s = jnp.pad(col_i, (0, E_pad - E), constant_values=N).reshape(E_pad, 1)
    row_l = jnp.pad(row_i, (0, E_pad - E), constant_values=N).reshape(1, E_pad)

    wc2_row = p['wc2'].T   # [1, H] -> VPU broadcast-mul + lane reduce in-kernel

    inputs = (h, coord, row_s, col_s, row_l,
              p['w1hr'], p['w1hc'], p['w1rad'], p['b1'], p['w2'], p['b2'],
              p['wc1'], p['bc1'], wc2_row,
              p['wn1h'], p['wn1a'], p['bn1'], p['wn2'], p['bn2'])

    def full(x):
        nd = x.ndim
        return pl.BlockSpec(x.shape, lambda e, _nd=nd: (0,) * _nd)

    grid = (E_pad // te,)
    in_specs = [full(h), full(coord),
                pl.BlockSpec((te, 1), lambda e: (e, 0)),
                pl.BlockSpec((te, 1), lambda e: (e, 0)),
                pl.BlockSpec((1, te), lambda e: (0, e))]
    in_specs += [full(w) for w in inputs[5:]]

    out_shape = (jax.ShapeDtypeStruct((N, O), h.dtype),
                 jax.ShapeDtypeStruct((N, D), coord.dtype))
    out_specs = (pl.BlockSpec((N, O), lambda e: (0, 0)),
                 pl.BlockSpec((N, D), lambda e: (0, 0)))

    scratch = [pltpu.VMEM((2 * N, C), jnp.bfloat16),  # packed bf16 node table
               pltpu.VMEM((N, C), jnp.float32)]       # f32 [agg_edge | agg_trans]

    h_out, coord_out = pl.pallas_call(
        egcl_kernel,
        out_shape=out_shape,
        grid_spec=pltpu.PrefetchScalarGridSpec(
            num_scalar_prefetch=0,
            grid=grid,
            in_specs=in_specs,
            out_specs=out_specs,
            scratch_shapes=scratch),
        input_output_aliases={0: 0, 1: 1},   # h -> h_out, coord -> coord_out
        compiler_params=pltpu.CompilerParams(
            dimension_semantics=("arbitrary",),
            # explicit scoped-VMEM budget (raises v5e's 16 MiB default; safe
            # on v6e/v7x).  VMEM use here is only the tiny index tiles plus
            # O(N*C) node-table / accumulator scratch.
            vmem_limit_bytes=32 * 1024 * 1024),
    )(*inputs)
    return h_out, coord_out


def init_params(key, input_nf, output_nf, hidden_nf):
    """Deterministic init matching the nn.Linear shapes of E_GCL.__init__.

    Weights are stored as [in, out] (transposed vs. torch)."""
    def linear(k, fan_in, fan_out, bias=True, bound=None):
        kw, kb = jax.random.split(k)
        if bound is None:
            bound = 1.0 / jnp.sqrt(fan_in)
        w = jax.random.uniform(kw, (fan_in, fan_out), jnp.float32, -bound, bound)
        if not bias:
            return w, None
        b = jax.random.uniform(kb, (1, fan_out), jnp.float32, -bound, bound)
        return w, b

    ks = jax.random.split(key, 8)
    input_edge = 2 * input_nf + 1  # + edge_coords_nf (edges_in_d = 0)

    w1, b1 = linear(ks[0], input_edge, hidden_nf)
    w2, b2 = linear(ks[1], hidden_nf, hidden_nf)
    wc1, bc1 = linear(ks[2], hidden_nf, hidden_nf)
    xav = 0.001 * jnp.sqrt(6.0 / (hidden_nf + 1))
    wc2, _ = linear(ks[3], hidden_nf, 1, bias=False, bound=xav)
    wn1, bn1 = linear(ks[4], hidden_nf + input_nf, hidden_nf)
    wn2, bn2 = linear(ks[5], hidden_nf, output_nf)

    return dict(
        w1hr=w1[:input_nf], w1hc=w1[input_nf:2 * input_nf],
        w1rad=w1[2 * input_nf:2 * input_nf + 1], b1=b1,
        w2=w2, b2=b2,
        wc1=wc1, bc1=bc1, wc2=wc2,
        wn1h=wn1[:input_nf], wn1a=wn1[input_nf:], bn1=bn1,
        wn2=wn2, bn2=bn2,
    )


def egcl_reference(h, coord, row, col, p):
    """Pure-JAX reference mirroring the PyTorch forward."""
    coord_diff = coord[row] - coord[col]
    radial = jnp.sum(coord_diff ** 2, axis=1, keepdims=True)
    norm = jnp.sqrt(radial + 1e-8)
    coord_diff = coord_diff / (norm + 1.0)

    w1 = jnp.concatenate([p['w1hr'], p['w1hc'], p['w1rad']], axis=0)
    edge_in = jnp.concatenate([h[row], h[col], radial], axis=1)
    e1 = jax.nn.silu(edge_in @ w1 + p['b1'])
    edge_feat = jax.nn.silu(e1 @ p['w2'] + p['b2'])

    cm = jax.nn.silu(edge_feat @ p['wc1'] + p['bc1'])
    trans = coord_diff * (cm @ p['wc2'])
    N = h.shape[0]
    agg_trans = jnp.zeros((N, coord.shape[1]), coord.dtype).at[row].add(trans)
    coord_out = coord + agg_trans

    agg_edge = jnp.zeros((N, edge_feat.shape[1]), h.dtype).at[row].add(edge_feat)
    wn1 = jnp.concatenate([p['wn1h'], p['wn1a']], axis=0)
    n1 = jax.nn.silu(jnp.concatenate([h, agg_edge], axis=1) @ wn1 + p['bn1'])
    h_out = h + (n1 @ p['wn2'] + p['bn2'])
    return h_out, coord_out


if __name__ == "__main__":
    N = 24         # nodes
    F = 32         # input_nf == output_nf == hidden_nf
    key = jax.random.PRNGKey(0)
    k_h, k_c, k_p = jax.random.split(key, 3)

    h = jax.random.normal(k_h, (N, F), jnp.float32)
    coord = jax.random.normal(k_c, (N, 3), jnp.float32)

    # fully-connected graph without self loops -> E = N*(N-1) = 552 edges
    row = jnp.array([i for i in range(N) for j in range(N) if i != j], jnp.int32)
    col = jnp.array([j for i in range(N) for j in range(N) if i != j], jnp.int32)

    params = init_params(k_p, F, F, F)

    fwd = jax.jit(egcl_forward, static_argnames=("edge_tile",))
    # edge_tile=128 -> 5 grid steps over the 640 padded edges: exercises the
    # init / accumulate / finalize pipeline path.
    h_out, coord_out = fwd(h, coord, row, col, params, edge_tile=128)
    jax.block_until_ready((h_out, coord_out))

    h_ref, coord_ref = egcl_reference(h, coord, row, col, params)
    # The gather/scatter matmuls run on the bf16 MXU fast path (node table /
    # scatter operand rounded to bf16, accumulation in f32), so h carries
    # ~1e-2-level rounding vs. the pure-f32 reference; coords stay near f32
    # accuracy because the residual coordinate update is tiny.
    assert jnp.allclose(h_out, h_ref, rtol=4e-2, atol=4e-2), "h mismatch"
    assert jnp.allclose(coord_out, coord_ref, rtol=1e-3, atol=1e-3), "coord mismatch"

    print("KERNEL_OK")
</pallas_src>

<mosaic_0001>
module attributes {stable_mosaic.version = 11 : i64} {
  func.func @egcl_kernel(%arg0: i32, %arg1: memref<24x32xf32, #tpu.memory_space<vmem>>, %arg2: memref<24x3xf32, #tpu.memory_space<vmem>>, %arg3: memref<128x1xi32, #tpu.memory_space<vmem>>, %arg4: memref<128x1xi32, #tpu.memory_space<vmem>>, %arg5: memref<1x128xi32, #tpu.memory_space<vmem>>, %arg6: memref<32x32xf32, #tpu.memory_space<vmem>>, %arg7: memref<32x32xf32, #tpu.memory_space<vmem>>, %arg8: memref<1x32xf32, #tpu.memory_space<vmem>>, %arg9: memref<1x32xf32, #tpu.memory_space<vmem>>, %arg10: memref<32x32xf32, #tpu.memory_space<vmem>>, %arg11: memref<1x32xf32, #tpu.memory_space<vmem>>, %arg12: memref<32x32xf32, #tpu.memory_space<vmem>>, %arg13: memref<1x32xf32, #tpu.memory_space<vmem>>, %arg14: memref<1x32xf32, #tpu.memory_space<vmem>>, %arg15: memref<32x32xf32, #tpu.memory_space<vmem>>, %arg16: memref<32x32xf32, #tpu.memory_space<vmem>>, %arg17: memref<1x32xf32, #tpu.memory_space<vmem>>, %arg18: memref<32x32xf32, #tpu.memory_space<vmem>>, %arg19: memref<1x32xf32, #tpu.memory_space<vmem>>, %arg20: memref<24x32xf32, #tpu.memory_space<vmem>>, %arg21: memref<24x3xf32, #tpu.memory_space<vmem>>, %arg22: memref<48x128xbf16, #tpu.memory_space<vmem>>, %arg23: memref<24x128xf32, #tpu.memory_space<vmem>>) attributes {dimension_semantics = [#tpu.dimension_semantics<arbitrary>], iteration_bounds = array<i64: 5>, scalar_prefetch = 0 : i64, scratch_operands = 2 : i64, tpu.core_type = #tpu.core_type<tc>, window_params = [{pipeline_mode = #tpu.pipeline_mode<synchronous>, transform_indices = @transform_0, window_bounds = array<i64: 24, 32>}, {pipeline_mode = #tpu.pipeline_mode<synchronous>, transform_indices = @transform_1, window_bounds = array<i64: 24, 3>}, {transform_indices = @transform_2, window_bounds = array<i64: 128, 1>}, {transform_indices = @transform_3, window_bounds = array<i64: 128, 1>}, {transform_indices = @transform_4, window_bounds = array<i64: 1, 128>}, {pipeline_mode = #tpu.pipeline_mode<synchronous>, transform_indices = @transform_5, window_bounds = array<i64: 32, 32>}, {pipeline_mode = #tpu.pipeline_mode<synchronous>, transform_indices = @transform_6, window_bounds = array<i64: 32, 32>}, {pipeline_mode = #tpu.pipeline_mode<synchronous>, transform_indices = @transform_7, window_bounds = array<i64: 1, 32>}, {pipeline_mode = #tpu.pipeline_mode<synchronous>, transform_indices = @transform_8, window_bounds = array<i64: 1, 32>}, {pipeline_mode = #tpu.pipeline_mode<synchronous>, transform_indices = @transform_9, window_bounds = array<i64: 32, 32>}, {pipeline_mode = #tpu.pipeline_mode<synchronous>, transform_indices = @transform_10, window_bounds = array<i64: 1, 32>}, {pipeline_mode = #tpu.pipeline_mode<synchronous>, transform_indices = @transform_11, window_bounds = array<i64: 32, 32>}, {pipeline_mode = #tpu.pipeline_mode<synchronous>, transform_indices = @transform_12, window_bounds = array<i64: 1, 32>}, {pipeline_mode = #tpu.pipeline_mode<synchronous>, transform_indices = @transform_13, window_bounds = array<i64: 1, 32>}, {pipeline_mode = #tpu.pipeline_mode<synchronous>, transform_indices = @transform_14, window_bounds = array<i64: 32, 32>}, {pipeline_mode = #tpu.pipeline_mode<synchronous>, transform_indices = @transform_15, window_bounds = array<i64: 32, 32>}, {pipeline_mode = #tpu.pipeline_mode<synchronous>, transform_indices = @transform_16, window_bounds = array<i64: 1, 32>}, {pipeline_mode = #tpu.pipeline_mode<synchronous>, transform_indices = @transform_17, window_bounds = array<i64: 32, 32>}, {pipeline_mode = #tpu.pipeline_mode<synchronous>, transform_indices = @transform_18, window_bounds = array<i64: 1, 32>}, {pipeline_mode = #tpu.pipeline_mode<synchronous>, transform_indices = @transform_19, window_bounds = array<i64: 24, 32>}, {pipeline_mode = #tpu.pipeline_mode<synchronous>, transform_indices = @transform_20, window_bounds = array<i64: 24, 3>}]} {
    %c0_i32 = arith.constant 0 : i32
    %0 = arith.cmpi eq, %arg0, %c0_i32 : i32
    %1 = arith.extui %0 : i1 to i32
    %c0_i32_0 = arith.constant 0 : i32
    %2 = arith.cmpi ne, %1, %c0_i32_0 : i32
    scf.if %2 {
      %c0_38 = arith.constant 0 : index
      %c0_39 = arith.constant 0 : index
      %91 = vector.load %arg1[%c0_38, %c0_39] : memref<24x32xf32, #tpu.memory_space<vmem>>, vector<24x32xf32>
      %c0_40 = arith.constant 0 : index
      %c0_41 = arith.constant 0 : index
      %92 = vector.load %arg2[%c0_40, %c0_41] : memref<24x3xf32, #tpu.memory_space<vmem>>, vector<24x3xf32>
      %c0_42 = arith.constant 0 : index
      %c0_43 = arith.constant 0 : index
      %93 = vector.load %arg6[%c0_42, %c0_43] : memref<32x32xf32, #tpu.memory_space<vmem>>, vector<32x32xf32>
      %cst_44 = arith.constant dense<0.000000e+00> : vector<24x32xf32>
      %94 = tpu.matmul %91, %93, %cst_44 {dimension_numbers = #tpu.dot_dimension_numbers<[1], [0], [0], [1], [0, 0, 1, 1], [], []>} : vector<24x32xf32>, vector<32x32xf32>, vector<24x32xf32> -> vector<24x32xf32>
      %c0_45 = arith.constant 0 : index
      %c0_46 = arith.constant 0 : index
      %95 = vector.load %arg7[%c0_45, %c0_46] : memref<32x32xf32, #tpu.memory_space<vmem>>, vector<32x32xf32>
      %cst_47 = arith.constant dense<0.000000e+00> : vector<24x32xf32>
      %96 = tpu.matmul %91, %95, %cst_47 {dimension_numbers = #tpu.dot_dimension_numbers<[1], [0], [0], [1], [0, 0, 1, 1], [], []>} : vector<24x32xf32>, vector<32x32xf32>, vector<24x32xf32> -> vector<24x32xf32>
      %cst_48 = arith.constant 0.000000e+00 : f32
      %97 = vector.broadcast %cst_48 : f32 to vector<24x3xf32>
      %98 = arith.subf %97, %92 : vector<24x3xf32>
      %cst_49 = arith.constant 0.000000e+00 : f32
      %99 = vector.broadcast %cst_49 : f32 to vector<24x93xf32>
      %100 = tpu.concatenate %94, %92, %99 in 1 : vector<24x32xf32>, vector<24x3xf32>, vector<24x93xf32> -> vector<24x128xf32>
      %101 = tpu.concatenate %96, %98, %99 in 1 : vector<24x32xf32>, vector<24x3xf32>, vector<24x93xf32> -> vector<24x128xf32>
      %102 = tpu.concatenate %100, %101 in 0 : vector<24x128xf32>, vector<24x128xf32> -> vector<48x128xf32>
      %103 = arith.truncf %102 : vector<48x128xf32> to vector<48x128xbf16>
      %c0_50 = arith.constant 0 : index
      %c0_51 = arith.constant 0 : index
      %104 = vector.load %arg22[%c0_50, %c0_51] : memref<48x128xbf16, #tpu.memory_space<vmem>>, vector<48x128xbf16>
      tpu.vector_store %arg22[%c0_50, %c0_51], %103 {strides = array<i32>} : memref<48x128xbf16, #tpu.memory_space<vmem>>, vector<48x128xbf16>,
      %cst_52 = arith.constant 0.000000e+00 : f32
      %105 = vector.broadcast %cst_52 : f32 to vector<24x128xf32>
      %c0_53 = arith.constant 0 : index
      %c0_54 = arith.constant 0 : index
      %106 = vector.load %arg23[%c0_53, %c0_54] : memref<24x128xf32, #tpu.memory_space<vmem>>, vector<24x128xf32>
      tpu.vector_store %arg23[%c0_53, %c0_54], %105 {strides = array<i32>} : memref<24x128xf32, #tpu.memory_space<vmem>>, vector<24x128xf32>,
    } else {
    }
    %c0 = arith.constant 0 : index
    %c0_1 = arith.constant 0 : index
    %3 = vector.load %arg3[%c0, %c0_1] : memref<128x1xi32, #tpu.memory_space<vmem>>, vector<128x1xi32>
    %c0_2 = arith.constant 0 : index
    %c0_3 = arith.constant 0 : index
    %4 = vector.load %arg4[%c0_2, %c0_3] : memref<128x1xi32, #tpu.memory_space<vmem>>, vector<128x1xi32>
    %5 = tpu.iota {dimensions = array<i32: 1>} : vector<128x48xi32>
    %6 = vector.broadcast %3 : vector<128x1xi32> to vector<128x48xi32>
    %7 = arith.cmpi eq, %5, %6 : vector<128x48xi32>
    %c24_i32 = arith.constant 24 : i32
    %8 = vector.broadcast %c24_i32 : i32 to vector<128x1xi32>
    %9 = arith.addi %4, %8 : vector<128x1xi32>
    %10 = vector.broadcast %9 : vector<128x1xi32> to vector<128x48xi32>
    %11 = arith.cmpi eq, %5, %10 : vector<128x48xi32>
    %12 = arith.ori %7, %11 : vector<128x48xi1>
    %13 = arith.extui %12 : vector<128x48xi1> to vector<128x48xi32>
    %14 = arith.sitofp %13 : vector<128x48xi32> to vector<128x48xf32>
    %15 = arith.truncf %14 : vector<128x48xf32> to vector<128x48xbf16>
    %c0_4 = arith.constant 0 : index
    %c0_5 = arith.constant 0 : index
    %16 = vector.load %arg22[%c0_4, %c0_5] : memref<48x128xbf16, #tpu.memory_space<vmem>>, vector<48x128xbf16>
    %cst = arith.constant dense<0.000000e+00> : vector<128x128xf32>
    %17 = tpu.matmul %15, %16, %cst {dimension_numbers = #tpu.dot_dimension_numbers<[1], [0], [0], [1], [0, 0, 1, 1], [], []>} : vector<128x48xbf16>, vector<48x128xbf16>, vector<128x128xf32> -> vector<128x128xf32>
    %18 = vector.extract_strided_slice %17 {offsets = [0, 0], sizes = [128, 32], strides = [1, 1]} : vector<128x128xf32> to vector<128x32xf32>
    %19 = vector.extract_strided_slice %17 {offsets = [0, 32], sizes = [128, 3], strides = [1, 1]} : vector<128x128xf32> to vector<128x3xf32>
    %20 = arith.mulf %19, %19 : vector<128x3xf32>
    %cst_6 = arith.constant dense<0.000000e+00> : vector<128xf32>
    %21 = vector.multi_reduction <add>, %20, %cst_6 [1] : vector<128x3xf32> to vector<128xf32>
    %22 = vector.shape_cast %21 : vector<128xf32> to vector<128x1xf32>
    %cst_7 = arith.constant 9.99999993E-9 : f32
    %23 = vector.broadcast %cst_7 : f32 to vector<128x1xf32>
    %24 = arith.addf %22, %23 : vector<128x1xf32>
    %25 = math.sqrt %24 : vector<128x1xf32>
    %cst_8 = arith.constant 1.000000e+00 : f32
    %26 = vector.broadcast %cst_8 : f32 to vector<128x1xf32>
    %27 = arith.addf %25, %26 : vector<128x1xf32>
    %28 = tpu.reciprocal %27 {approx = true} : vector<128x1xf32> -> vector<128x1xf32>
    %29 = vector.broadcast %28 : vector<128x1xf32> to vector<128x3xf32>
    %30 = arith.mulf %19, %29 : vector<128x3xf32>
    %c0_9 = arith.constant 0 : index
    %c0_10 = arith.constant 0 : index
    %31 = vector.load %arg8[%c0_9, %c0_10] : memref<1x32xf32, #tpu.memory_space<vmem>>, vector<1x32xf32>
    %32 = vector.broadcast %22 : vector<128x1xf32> to vector<128x32xf32>
    %33 = vector.broadcast %31 : vector<1x32xf32> to vector<128x32xf32>
    %34 = arith.mulf %32, %33 : vector<128x32xf32>
    %35 = arith.addf %18, %34 : vector<128x32xf32>
    %c0_11 = arith.constant 0 : index
    %c0_12 = arith.constant 0 : index
    %36 = vector.load %arg9[%c0_11, %c0_12] : memref<1x32xf32, #tpu.memory_space<vmem>>, vector<1x32xf32>
    %37 = vector.broadcast %36 : vector<1x32xf32> to vector<128x32xf32>
    %38 = arith.addf %35, %37 : vector<128x32xf32>
    %39 = arith.negf %38 : vector<128x32xf32>
    %40 = math.exp %39 : vector<128x32xf32>
    %cst_13 = arith.constant 1.000000e+00 : f32
    %41 = vector.broadcast %cst_13 : f32 to vector<128x32xf32>
    %42 = arith.addf %41, %40 : vector<128x32xf32>
    %43 = arith.divf %41, %42 : vector<128x32xf32>
    %44 = arith.mulf %38, %43 : vector<128x32xf32>
    %c0_14 = arith.constant 0 : index
    %c0_15 = arith.constant 0 : index
    %45 = vector.load %arg10[%c0_14, %c0_15] : memref<32x32xf32, #tpu.memory_space<vmem>>, vector<32x32xf32>
    %cst_16 = arith.constant dense<0.000000e+00> : vector<128x32xf32>
    %46 = tpu.matmul %44, %45, %cst_16 {dimension_numbers = #tpu.dot_dimension_numbers<[1], [0], [0], [1], [0, 0, 1, 1], [], []>} : vector<128x32xf32>, vector<32x32xf32>, vector<128x32xf32> -> vector<128x32xf32>
    %c0_17 = arith.constant 0 : index
    %c0_18 = arith.constant 0 : index
    %47 = vector.load %arg11[%c0_17, %c0_18] : memref<1x32xf32, #tpu.memory_space<vmem>>, vector<1x32xf32>
    %48 = vector.broadcast %47 : vector<1x32xf32> to vector<128x32xf32>
    %49 = arith.addf %46, %48 : vector<128x32xf32>
    %50 = arith.negf %49 : vector<128x32xf32>
    %51 = math.exp %50 : vector<128x32xf32>
    %cst_19 = arith.constant 1.000000e+00 : f32
    %52 = vector.broadcast %cst_19 : f32 to vector<128x32xf32>
    %53 = arith.addf %52, %51 : vector<128x32xf32>
    %54 = arith.divf %52, %53 : vector<128x32xf32>
    %55 = arith.mulf %49, %54 : vector<128x32xf32>
    %c0_20 = arith.constant 0 : index
    %c0_21 = arith.constant 0 : index
    %56 = vector.load %arg12[%c0_20, %c0_21] : memref<32x32xf32, #tpu.memory_space<vmem>>, vector<32x32xf32>
    %cst_22 = arith.constant dense<0.000000e+00> : vector<128x32xf32>
    %57 = tpu.matmul %55, %56, %cst_22 {dimension_numbers = #tpu.dot_dimension_numbers<[1], [0], [0], [1], [0, 0, 1, 1], [], []>} : vector<128x32xf32>, vector<32x32xf32>, vector<128x32xf32> -> vector<128x32xf32>
    %c0_23 = arith.constant 0 : index
    %c0_24 = arith.constant 0 : index
    %58 = vector.load %arg13[%c0_23, %c0_24] : memref<1x32xf32, #tpu.memory_space<vmem>>, vector<1x32xf32>
    %59 = vector.broadcast %58 : vector<1x32xf32> to vector<128x32xf32>
    %60 = arith.addf %57, %59 : vector<128x32xf32>
    %61 = arith.negf %60 : vector<128x32xf32>
    %62 = math.exp %61 : vector<128x32xf32>
    %cst_25 = arith.constant 1.000000e+00 : f32
    %63 = vector.broadcast %cst_25 : f32 to vector<128x32xf32>
    %64 = arith.addf %63, %62 : vector<128x32xf32>
    %65 = arith.divf %63, %64 : vector<128x32xf32>
    %66 = arith.mulf %60, %65 : vector<128x32xf32>
    %c0_26 = arith.constant 0 : index
    %c0_27 = arith.constant 0 : index
    %67 = vector.load %arg14[%c0_26, %c0_27] : memref<1x32xf32, #tpu.memory_space<vmem>>, vector<1x32xf32>
    %68 = vector.broadcast %67 : vector<1x32xf32> to vector<128x32xf32>
    %69 = arith.mulf %66, %68 : vector<128x32xf32>
    %cst_28 = arith.constant dense<0.000000e+00> : vector<128xf32>
    %70 = vector.multi_reduction <add>, %69, %cst_28 [1] : vector<128x32xf32> to vector<128xf32>
    %71 = vector.shape_cast %70 : vector<128xf32> to vector<128x1xf32>
    %72 = vector.broadcast %71 : vector<128x1xf32> to vector<128x3xf32>
    %73 = arith.mulf %30, %72 : vector<128x3xf32>
    %c0_29 = arith.constant 0 : index
    %c0_30 = arith.constant 0 : index
    %74 = vector.load %arg5[%c0_29, %c0_30] : memref<1x128xi32, #tpu.memory_space<vmem>>, vector<1x128xi32>
    %75 = tpu.iota {dimensions = array<i32: 0>} : vector<24x128xi32>
    %76 = vector.broadcast %74 : vector<1x128xi32> to vector<24x128xi32>
    %77 = arith.cmpi eq, %75, %76 : vector<24x128xi32>
    %78 = arith.extui %77 : vector<24x128xi1> to vector<24x128xi32>
    %79 = arith.sitofp %78 : vector<24x128xi32> to vector<24x128xf32>
    %80 = arith.truncf %79 : vector<24x128xf32> to vector<24x128xbf16>
    %cst_31 = arith.constant 0.000000e+00 : f32
    %81 = vector.broadcast %cst_31 : f32 to vector<128x93xf32>
    %82 = tpu.concatenate %55, %73, %81 in 1 : vector<128x32xf32>, vector<128x3xf32>, vector<128x93xf32> -> vector<128x128xf32>
    %83 = arith.truncf %82 : vector<128x128xf32> to vector<128x128xbf16>
    %c0_32 = arith.constant 0 : index
    %c0_33 = arith.constant 0 : index
    %84 = vector.load %arg23[%c0_32, %c0_33] : memref<24x128xf32, #tpu.memory_space<vmem>>, vector<24x128xf32>
    %cst_34 = arith.constant dense<0.000000e+00> : vector<24x128xf32>
    %85 = tpu.matmul %80, %83, %cst_34 {dimension_numbers = #tpu.dot_dimension_numbers<[1], [0], [0], [1], [0, 0, 1, 1], [], []>} : vector<24x128xbf16>, vector<128x128xbf16>, vector<24x128xf32> -> vector<24x128xf32>
    %86 = arith.addf %84, %85 : vector<24x128xf32>
    %c0_35 = arith.constant 0 : index
    %c0_36 = arith.constant 0 : index
    %87 = vector.load %arg23[%c0_35, %c0_36] : memref<24x128xf32, #tpu.memory_space<vmem>>, vector<24x128xf32>
    tpu.vector_store %arg23[%c0_35, %c0_36], %86 {strides = array<i32>} : memref<24x128xf32, #tpu.memory_space<vmem>>, vector<24x128xf32>,
    %c4_i32 = arith.constant 4 : i32
    %88 = arith.cmpi eq, %arg0, %c4_i32 : i32
    %89 = arith.extui %88 : i1 to i32
    %c0_i32_37 = arith.constant 0 : i32
    %90 = arith.cmpi ne, %89, %c0_i32_37 : i32
    scf.if %90 {
      %c0_38 = arith.constant 0 : index
      %c0_39 = arith.constant 0 : index
      %91 = vector.load %arg1[%c0_38, %c0_39] : memref<24x32xf32, #tpu.memory_space<vmem>>, vector<24x32xf32>
      %c0_40 = arith.constant 0 : index
      %c0_41 = arith.constant 0 : index
      %92 = vector.load %arg23[%c0_40, %c0_41] : memref<24x128xf32, #tpu.memory_space<vmem>>, vector<24x128xf32>
      %93 = vector.extract_strided_slice %92 {offsets = [0, 0], sizes = [24, 32], strides = [1, 1]} : vector<24x128xf32> to vector<24x32xf32>
      %94 = vector.extract_strided_slice %92 {offsets = [0, 32], sizes = [24, 3], strides = [1, 1]} : vector<24x128xf32> to vector<24x3xf32>
      %c0_42 = arith.constant 0 : index
      %c0_43 = arith.constant 0 : index
      %95 = vector.load %arg15[%c0_42, %c0_43] : memref<32x32xf32, #tpu.memory_space<vmem>>, vector<32x32xf32>
      %cst_44 = arith.constant dense<0.000000e+00> : vector<24x32xf32>
      %96 = tpu.matmul %91, %95, %cst_44 {dimension_numbers = #tpu.dot_dimension_numbers<[1], [0], [0], [1], [0, 0, 1, 1], [], []>} : vector<24x32xf32>, vector<32x32xf32>, vector<24x32xf32> -> vector<24x32xf32>
      %c0_45 = arith.constant 0 : index
      %c0_46 = arith.constant 0 : index
      %97 = vector.load %arg16[%c0_45, %c0_46] : memref<32x32xf32, #tpu.memory_space<vmem>>, vector<32x32xf32>
      %cst_47 = arith.constant dense<0.000000e+00> : vector<24x32xf32>
      %98 = tpu.matmul %93, %97, %cst_47 {dimension_numbers = #tpu.dot_dimension_numbers<[1], [0], [0], [1], [0, 0, 1, 1], [], []>} : vector<24x32xf32>, vector<32x32xf32>, vector<24x32xf32> -> vector<24x32xf32>
      %99 = arith.addf %96, %98 : vector<24x32xf32>
      %c0_48 = arith.constant 0 : index
      %c0_49 = arith.constant 0 : index
      %100 = vector.load %arg17[%c0_48, %c0_49] : memref<1x32xf32, #tpu.memory_space<vmem>>, vector<1x32xf32>
      %101 = vector.broadcast %100 : vector<1x32xf32> to vector<24x32xf32>
      %102 = arith.addf %99, %101 : vector<24x32xf32>
      %103 = arith.negf %102 : vector<24x32xf32>
      %104 = math.exp %103 : vector<24x32xf32>
      %cst_50 = arith.constant 1.000000e+00 : f32
      %105 = vector.broadcast %cst_50 : f32 to vector<24x32xf32>
      %106 = arith.addf %105, %104 : vector<24x32xf32>
      %107 = arith.divf %105, %106 : vector<24x32xf32>
      %108 = arith.mulf %102, %107 : vector<24x32xf32>
      %c0_51 = arith.constant 0 : index
      %c0_52 = arith.constant 0 : index
      %109 = vector.load %arg18[%c0_51, %c0_52] : memref<32x32xf32, #tpu.memory_space<vmem>>, vector<32x32xf32>
      %cst_53 = arith.constant dense<0.000000e+00> : vector<24x32xf32>
      %110 = tpu.matmul %108, %109, %cst_53 {dimension_numbers = #tpu.dot_dimension_numbers<[1], [0], [0], [1], [0, 0, 1, 1], [], []>} : vector<24x32xf32>, vector<32x32xf32>, vector<24x32xf32> -> vector<24x32xf32>
      %c0_54 = arith.constant 0 : index
      %c0_55 = arith.constant 0 : index
      %111 = vector.load %arg19[%c0_54, %c0_55] : memref<1x32xf32, #tpu.memory_space<vmem>>, vector<1x32xf32>
      %112 = vector.broadcast %111 : vector<1x32xf32> to vector<24x32xf32>
      %113 = arith.addf %110, %112 : vector<24x32xf32>
      %114 = arith.addf %91, %113 : vector<24x32xf32>
      %c0_56 = arith.constant 0 : index
      %c0_57 = arith.constant 0 : index
      %115 = vector.load %arg20[%c0_56, %c0_57] : memref<24x32xf32, #tpu.memory_space<vmem>>, vector<24x32xf32>
      tpu.vector_store %arg20[%c0_56, %c0_57], %114 {strides = array<i32>} : memref<24x32xf32, #tpu.memory_space<vmem>>, vector<24x32xf32>,
      %c0_58 = arith.constant 0 : index
      %c0_59 = arith.constant 0 : index
      %116 = vector.load %arg2[%c0_58, %c0_59] : memref<24x3xf32, #tpu.memory_space<vmem>>, vector<24x3xf32>
      %117 = arith.addf %116, %94 : vector<24x3xf32>
      %c0_60 = arith.constant 0 : index
      %c0_61 = arith.constant 0 : index
      %118 = vector.load %arg21[%c0_60, %c0_61] : memref<24x3xf32, #tpu.memory_space<vmem>>, vector<24x3xf32>
      tpu.vector_store %arg21[%c0_60, %c0_61], %117 {strides = array<i32>} : memref<24x3xf32, #tpu.memory_space<vmem>>, vector<24x3xf32>,
    } else {
    }
    return
  }
  func.func @transform_0(%arg0: i32) -> (i32, i32) {
    %c0_i32 = arith.constant 0 : i32
    %c0_i32_0 = arith.constant 0 : i32
    %c0_i32_1 = arith.constant 0 : i32
    return %c0_i32, %c0_i32_0 : i32, i32
  }
  func.func @transform_1(%arg0: i32) -> (i32, i32) {
    %c0_i32 = arith.constant 0 : i32
    %c0_i32_0 = arith.constant 0 : i32
    %c0_i32_1 = arith.constant 0 : i32
    return %c0_i32, %c0_i32_0 : i32, i32
  }
  func.func @transform_2(%arg0: i32) -> (i32, i32) {
    %c0_i32 = arith.constant 0 : i32
    %c0_i32_0 = arith.constant 0 : i32
    return %arg0, %c0_i32 : i32, i32
  }
  func.func @transform_3(%arg0: i32) -> (i32, i32) {
    %c0_i32 = arith.constant 0 : i32
    %c0_i32_0 = arith.constant 0 : i32
    return %arg0, %c0_i32 : i32, i32
  }
  func.func @transform_4(%arg0: i32) -> (i32, i32) {
    %c0_i32 = arith.constant 0 : i32
    %c0_i32_0 = arith.constant 0 : i32
    return %c0_i32, %arg0 : i32, i32
  }
  func.func @transform_5(%arg0: i32) -> (i32, i32) {
    %c0_i32 = arith.constant 0 : i32
    %c0_i32_0 = arith.constant 0 : i32
    %c0_i32_1 = arith.constant 0 : i32
    return %c0_i32, %c0_i32_0 : i32, i32
  }
  func.func @transform_6(%arg0: i32) -> (i32, i32) {
    %c0_i32 = arith.constant 0 : i32
    %c0_i32_0 = arith.constant 0 : i32
    %c0_i32_1 = arith.constant 0 : i32
    return %c0_i32, %c0_i32_0 : i32, i32
  }
  func.func @transform_7(%arg0: i32) -> (i32, i32) {
    %c0_i32 = arith.constant 0 : i32
    %c0_i32_0 = arith.constant 0 : i32
    %c0_i32_1 = arith.constant 0 : i32
    return %c0_i32, %c0_i32_0 : i32, i32
  }
  func.func @transform_8(%arg0: i32) -> (i32, i32) {
    %c0_i32 = arith.constant 0 : i32
    %c0_i32_0 = arith.constant 0 : i32
    %c0_i32_1 = arith.constant 0 : i32
    return %c0_i32, %c0_i32_0 : i32, i32
  }
  func.func @transform_9(%arg0: i32) -> (i32, i32) {
    %c0_i32 = arith.constant 0 : i32
    %c0_i32_0 = arith.constant 0 : i32
    %c0_i32_1 = arith.constant 0 : i32
    return %c0_i32, %c0_i32_0 : i32, i32
  }
  func.func @transform_10(%arg0: i32) -> (i32, i32) {
    %c0_i32 = arith.constant 0 : i32
    %c0_i32_0 = arith.constant 0 : i32
    %c0_i32_1 = arith.constant 0 : i32
    return %c0_i32, %c0_i32_0 : i32, i32
  }
  func.func @transform_11(%arg0: i32) -> (i32, i32) {
    %c0_i32 = arith.constant 0 : i32
    %c0_i32_0 = arith.constant 0 : i32
    %c0_i32_1 = arith.constant 0 : i32
    return %c0_i32, %c0_i32_0 : i32, i32
  }
  func.func @transform_12(%arg0: i32) -> (i32, i32) {
    %c0_i32 = arith.constant 0 : i32
    %c0_i32_0 = arith.constant 0 : i32
    %c0_i32_1 = arith.constant 0 : i32
    return %c0_i32, %c0_i32_0 : i32, i32
  }
  func.func @transform_13(%arg0: i32) -> (i32, i32) {
    %c0_i32 = arith.constant 0 : i32
    %c0_i32_0 = arith.constant 0 : i32
    %c0_i32_1 = arith.constant 0 : i32
    return %c0_i32, %c0_i32_0 : i32, i32
  }
  func.func @transform_14(%arg0: i32) -> (i32, i32) {
    %c0_i32 = arith.constant 0 : i32
    %c0_i32_0 = arith.constant 0 : i32
    %c0_i32_1 = arith.constant 0 : i32
    return %c0_i32, %c0_i32_0 : i32, i32
  }
  func.func @transform_15(%arg0: i32) -> (i32, i32) {
    %c0_i32 = arith.constant 0 : i32
    %c0_i32_0 = arith.constant 0 : i32
    %c0_i32_1 = arith.constant 0 : i32
    return %c0_i32, %c0_i32_0 : i32, i32
  }
  func.func @transform_16(%arg0: i32) -> (i32, i32) {
    %c0_i32 = arith.constant 0 : i32
    %c0_i32_0 = arith.constant 0 : i32
    %c0_i32_1 = arith.constant 0 : i32
    return %c0_i32, %c0_i32_0 : i32, i32
  }
  func.func @transform_17(%arg0: i32) -> (i32, i32) {
    %c0_i32 = arith.constant 0 : i32
    %c0_i32_0 = arith.constant 0 : i32
    %c0_i32_1 = arith.constant 0 : i32
    return %c0_i32, %c0_i32_0 : i32, i32
  }
  func.func @transform_18(%arg0: i32) -> (i32, i32) {
    %c0_i32 = arith.constant 0 : i32
    %c0_i32_0 = arith.constant 0 : i32
    %c0_i32_1 = arith.constant 0 : i32
    return %c0_i32, %c0_i32_0 : i32, i32
  }
  func.func @transform_19(%arg0: i32) -> (i32, i32) {
    %c0_i32 = arith.constant 0 : i32
    %c0_i32_0 = arith.constant 0 : i32
    %c0_i32_1 = arith.constant 0 : i32
    return %c0_i32, %c0_i32_0 : i32, i32
  }
  func.func @transform_20(%arg0: i32) -> (i32, i32) {
    %c0_i32 = arith.constant 0 : i32
    %c0_i32_0 = arith.constant 0 : i32
    %c0_i32_1 = arith.constant 0 : i32
    return %c0_i32, %c0_i32_0 : i32, i32
  }
}

</mosaic_0001>

<llo_original>
// kernel: egcl_forward.1
$region0: #{egcl_forward.1}
  #allocation0 [shape = 'u32[]', space=smem, size = 0x4, offset = 0x4, fixed_abs, tag = 'smem constant byte address 0x4 - core index']
  #allocation1 [shape = 'u32[144,128]{1,0:T(1,128)}', space=vmem, size = 0x12000, scoped, tag = 'internal scratch']
  #allocation2 [shape = 'bf16[48,128]{1,0:T(8,128)(2,1)}', space=vmem, size = 0x3000, scoped, tag = 'scratch operand']
  #allocation3 [shape = 'f32[24,128]{1,0:T(8,128)}', space=vmem, size = 0x3000, scoped, tag = 'scratch operand']
  %s0 = inlined_call_operand.vmem [shape: f32[24,32], index: 0, kind: input, shape index: {}, may-alias: {0,19}]
  %s1 = inlined_call_operand.vmem [shape: f32[24,3], index: 1, kind: input, shape index: {}, may-alias: {1,20}]
  %s2 = inlined_call_operand.vmem [shape: s32[640,1], index: 2, kind: input, shape index: {}]
  %s3 = inlined_call_operand.vmem [shape: s32[640,1], index: 3, kind: input, shape index: {}]
  %s4 = inlined_call_operand.vmem [shape: s32[1,640], index: 4, kind: input, shape index: {}]
  %s5 = inlined_call_operand.vmem [shape: f32[32,32], index: 5, kind: input, shape index: {}]
  %s6 = inlined_call_operand.vmem [shape: f32[32,32], index: 6, kind: input, shape index: {}]
  %s7 = inlined_call_operand.vmem [shape: f32[1,32], index: 7, kind: input, shape index: {}]
  %s8 = inlined_call_operand.vmem [shape: f32[1,32], index: 8, kind: input, shape index: {}]
  %s9 = inlined_call_operand.vmem [shape: f32[32,32], index: 9, kind: input, shape index: {}]
  %s10 = inlined_call_operand.vmem [shape: f32[1,32], index: 10, kind: input, shape index: {}]
  %s11 = inlined_call_operand.vmem [shape: f32[32,32], index: 11, kind: input, shape index: {}]
  %s12 = inlined_call_operand.vmem [shape: f32[1,32], index: 12, kind: input, shape index: {}]
  %s13 = inlined_call_operand.vmem [shape: f32[1,32], index: 13, kind: input, shape index: {}]
  %s14 = inlined_call_operand.vmem [shape: f32[32,32], index: 14, kind: input, shape index: {}]
  %s15 = inlined_call_operand.vmem [shape: f32[32,32], index: 15, kind: input, shape index: {}]
  %s16 = inlined_call_operand.vmem [shape: f32[1,32], index: 16, kind: input, shape index: {}]
  %s17 = inlined_call_operand.vmem [shape: f32[32,32], index: 17, kind: input, shape index: {}]
  %s18 = inlined_call_operand.vmem [shape: f32[1,32], index: 18, kind: input, shape index: {}]
  %s19 = inlined_call_operand.vmem [shape: f32[24,32], index: 19, kind: output, shape index: {0}, may-alias: {0,19}]
  %s20 = inlined_call_operand.vmem [shape: f32[24,3], index: 20, kind: output, shape index: {1}, may-alias: {1,20}]
  %21 = xla_tuple %s19, %s20
  %s22 = sld [smem:[#allocation0]]
  $region125: #{egcl_forward.1} parent=0
    _
  %s24 = ssub.s32 1, %s22
  %s25 = scalar_select 0, %s24, %s22
  loop: start=0, step=1, limit=7
  $region2: #{egcl_forward.1} parent=0 // loop_pre_header
    _
  $region3: #{egcl_forward.1} parent=0 // loop_header
    %s27 = sphi 0, %s31
    %p28 = scmp.ge.s32.totalorder %s27, 7
    %s35 = sphi 0, %s35
    %s37 = sphi 0, %s35
    %s38 = sphi 0, %s37
    %s52 = sphi 0, %s38
    %s56 = sphi 0, %s56
    %s58 = sphi 0, %s56
    %s59 = sphi 0, %s58
    %s73 = sphi 0, %s59
    %s79 = sphi 0, %s81
    %s82 = sphi 0, %s79
    %s83 = sphi 0, %s82
    %s99 = sphi 0, %s83
    %s105 = sphi 0, %s107
    %s108 = sphi 0, %s105
    %s109 = sphi 0, %s108
    %s125 = sphi 0, %s109
    %s131 = sphi 0, %s133
    %s134 = sphi 0, %s131
    %s135 = sphi 0, %s134
    %s151 = sphi 0, %s135
    %s155 = sphi 0, %s155
    %s157 = sphi 0, %s155
    %s158 = sphi 0, %s157
    %s172 = sphi 0, %s158
    %s176 = sphi 0, %s176
    %s178 = sphi 0, %s176
    %s179 = sphi 0, %s178
    %s193 = sphi 0, %s179
    %s197 = sphi 0, %s197
    %s199 = sphi 0, %s197
    %s200 = sphi 0, %s199
    %s214 = sphi 0, %s200
    %s218 = sphi 0, %s218
    %s220 = sphi 0, %s218
    %s221 = sphi 0, %s220
    %s235 = sphi 0, %s221
    %s239 = sphi 0, %s239
    %s241 = sphi 0, %s239
    %s242 = sphi 0, %s241
    %s256 = sphi 0, %s242
    %s260 = sphi 0, %s260
    %s262 = sphi 0, %s260
    %s263 = sphi 0, %s262
    %s277 = sphi 0, %s263
    %s281 = sphi 0, %s281
    %s283 = sphi 0, %s281
    %s284 = sphi 0, %s283
    %s298 = sphi 0, %s284
    %s302 = sphi 0, %s302
    %s304 = sphi 0, %s302
    %s305 = sphi 0, %s304
    %s319 = sphi 0, %s305
    %s323 = sphi 0, %s323
    %s325 = sphi 0, %s323
    %s326 = sphi 0, %s325
    %s340 = sphi 0, %s326
    %s344 = sphi 0, %s344
    %s346 = sphi 0, %s344
    %s347 = sphi 0, %s346
    %s361 = sphi 0, %s347
    %s365 = sphi 0, %s365
    %s367 = sphi 0, %s365
    %s368 = sphi 0, %s367
    %s382 = sphi 0, %s368
    %s386 = sphi 0, %s386
    %s388 = sphi 0, %s386
    %s389 = sphi 0, %s388
    %s403 = sphi 0, %s389
    %s407 = sphi 0, %s407
    %s409 = sphi 0, %s407
    %s410 = sphi 0, %s409
    %s424 = sphi 0, %s410
    %s428 = sphi 0, %s428
    %s430 = sphi 0, %s428
    %s431 = sphi 0, %s430
    %s445 = sphi 0, %s431
    %s449 = sphi 0, %s449
    %s451 = sphi 0, %s449
    %s452 = sphi 0, %s451
    %s466 = sphi 0, %s452
    %s470 = sphi 0, %s470
    %s472 = sphi 0, %s470
    %s473 = sphi 0, %s472
    %s487 = sphi 0, %s473
  $region4: #{egcl_forward.1} parent=0 // loop_header_branch
    %30 = sbr.rel (%p28) target = $region8
  $region5: #{egcl_forward.1} parent=0 // loop_body
    %s32 = ssub.s32 %s27, 1
    %s33 = ssub.s32 %s27, 2
    %s34 = sadd.s32 %s27, 1
    %s36 = sadd.s32 %s35, 1
    %p39 = scmp.eq.s32.totalorder %s27, 4
    %p40 = scmp.ne.s32.totalorder %s35, %s37
    %p41 = scmp.eq.s32.totalorder %s27, 0
    %p42 = por %p40, %p41
    %p43 = scmp.ne.s32.totalorder %s35, %s37
    %p44 = scmp.eq.s32.totalorder %s32, 4
    %p45 = por %p43, %p44
    %p46 = scmp.ne.s32.totalorder %s37, %s38
    %p47 = scmp.eq.s32.totalorder %s32, 0
    %p48 = por %p46, %p47
    %p49 = scmp.ne.s32.totalorder %s37, %s38
    %p50 = scmp.eq.s32.totalorder %s33, 4
    %p51 = por %p49, %p50
    %p53 = scmp.ne.s32.totalorder %s38, %s52
    %p54 = scmp.eq.s32.totalorder %s33, 0
    %p55 = por %p53, %p54
    %s57 = sadd.s32 %s56, 1
    %p60 = scmp.eq.s32.totalorder %s27, 4
    %p61 = scmp.ne.s32.totalorder %s56, %s58
    %p62 = scmp.eq.s32.totalorder %s27, 0
    %p63 = por %p61, %p62
    %p64 = scmp.ne.s32.totalorder %s56, %s58
    %p65 = scmp.eq.s32.totalorder %s32, 4
    %p66 = por %p64, %p65
    %p67 = scmp.ne.s32.totalorder %s58, %s59
    %p68 = scmp.eq.s32.totalorder %s32, 0
    %p69 = por %p67, %p68
    %p70 = scmp.ne.s32.totalorder %s58, %s59
    %p71 = scmp.eq.s32.totalorder %s33, 4
    %p72 = por %p70, %p71
    %p74 = scmp.ne.s32.totalorder %s59, %s73
    %p75 = scmp.eq.s32.totalorder %s33, 0
    %p76 = por %p74, %p75
    %s77 = ssub.s32 %s27, %s34
    %p78 = scmp.eq.s32.totalorder %s77, 0
    %s80 = sadd.s32 %s79, 1
    %s81 = scalar_select %p78, %s79, %s80
    %p84 = pneg %p78
    %p85 = scmp.eq.s32.totalorder %s27, 4
    %p86 = por %p84, %p85
    %p87 = scmp.ne.s32.totalorder %s79, %s82
    %p88 = scmp.eq.s32.totalorder %s27, 0
    %p89 = por %p87, %p88
    %p90 = scmp.ne.s32.totalorder %s79, %s82
    %p91 = scmp.eq.s32.totalorder %s32, 4
    %p92 = por %p90, %p91
    %p93 = scmp.ne.s32.totalorder %s82, %s83
    %p94 = scmp.eq.s32.totalorder %s32, 0
    %p95 = por %p93, %p94
    %p96 = scmp.ne.s32.totalorder %s82, %s83
    %p97 = scmp.eq.s32.totalorder %s33, 4
    %p98 = por %p96, %p97
    %p100 = scmp.ne.s32.totalorder %s83, %s99
    %p101 = scmp.eq.s32.totalorder %s33, 0
    %p102 = por %p100, %p101
    %s103 = ssub.s32 %s27, %s34
    %p104 = scmp.eq.s32.totalorder %s103, 0
    %s106 = sadd.s32 %s105, 1
    %s107 = scalar_select %p104, %s105, %s106
    %p110 = pneg %p104
    %p111 = scmp.eq.s32.totalorder %s27, 4
    %p112 = por %p110, %p111
    %p113 = scmp.ne.s32.totalorder %s105, %s108
    %p114 = scmp.eq.s32.totalorder %s27, 0
    %p115 = por %p113, %p114
    %p116 = scmp.ne.s32.totalorder %s105, %s108
    %p117 = scmp.eq.s32.totalorder %s32, 4
    %p118 = por %p116, %p117
    %p119 = scmp.ne.s32.totalorder %s108, %s109
    %p120 = scmp.eq.s32.totalorder %s32, 0
    %p121 = por %p119, %p120
    %p122 = scmp.ne.s32.totalorder %s108, %s109
    %p123 = scmp.eq.s32.totalorder %s33, 4
    %p124 = por %p122, %p123
    %p126 = scmp.ne.s32.totalorder %s109, %s125
    %p127 = scmp.eq.s32.totalorder %s33, 0
    %p128 = por %p126, %p127
    %s129 = ssub.s32 %s27, %s34
    %p130 = scmp.eq.s32.totalorder %s129, 0
    %s132 = sadd.s32 %s131, 1
    %s133 = scalar_select %p130, %s131, %s132
    %p136 = pneg %p130
    %p137 = scmp.eq.s32.totalorder %s27, 4
    %p138 = por %p136, %p137
    %p139 = scmp.ne.s32.totalorder %s131, %s134
    %p140 = scmp.eq.s32.totalorder %s27, 0
    %p141 = por %p139, %p140
    %p142 = scmp.ne.s32.totalorder %s131, %s134
    %p143 = scmp.eq.s32.totalorder %s32, 4
    %p144 = por %p142, %p143
    %p145 = scmp.ne.s32.totalorder %s134, %s135
    %p146 = scmp.eq.s32.totalorder %s32, 0
    %p147 = por %p145, %p146
    %p148 = scmp.ne.s32.totalorder %s134, %s135
    %p149 = scmp.eq.s32.totalorder %s33, 4
    %p150 = por %p148, %p149
    %p152 = scmp.ne.s32.totalorder %s135, %s151
    %p153 = scmp.eq.s32.totalorder %s33, 0
    %p154 = por %p152, %p153
    %s156 = sadd.s32 %s155, 1
    %p159 = scmp.eq.s32.totalorder %s27, 4
    %p160 = scmp.ne.s32.totalorder %s155, %s157
    %p161 = scmp.eq.s32.totalorder %s27, 0
    %p162 = por %p160, %p161
    %p163 = scmp.ne.s32.totalorder %s155, %s157
    %p164 = scmp.eq.s32.totalorder %s32, 4
    %p165 = por %p163, %p164
    %p166 = scmp.ne.s32.totalorder %s157, %s158
    %p167 = scmp.eq.s32.totalorder %s32, 0
    %p168 = por %p166, %p167
    %p169 = scmp.ne.s32.totalorder %s157, %s158
    %p170 = scmp.eq.s32.totalorder %s33, 4
    %p171 = por %p169, %p170
    %p173 = scmp.ne.s32.totalorder %s158, %s172
    %p174 = scmp.eq.s32.totalorder %s33, 0
    %p175 = por %p173, %p174
    %s177 = sadd.s32 %s176, 1
    %p180 = scmp.eq.s32.totalorder %s27, 4
    %p181 = scmp.ne.s32.totalorder %s176, %s178
    %p182 = scmp.eq.s32.totalorder %s27, 0
    %p183 = por %p181, %p182
    %p184 = scmp.ne.s32.totalorder %s176, %s178
    %p185 = scmp.eq.s32.totalorder %s32, 4
    %p186 = por %p184, %p185
    %p187 = scmp.ne.s32.totalorder %s178, %s179
    %p188 = scmp.eq.s32.totalorder %s32, 0
    %p189 = por %p187, %p188
    %p190 = scmp.ne.s32.totalorder %s178, %s179
    %p191 = scmp.eq.s32.totalorder %s33, 4
    %p192 = por %p190, %p191
    %p194 = scmp.ne.s32.totalorder %s179, %s193
    %p195 = scmp.eq.s32.totalorder %s33, 0
    %p196 = por %p194, %p195
    %s198 = sadd.s32 %s197, 1
    %p201 = scmp.eq.s32.totalorder %s27, 4
    %p202 = scmp.ne.s32.totalorder %s197, %s199
    %p203 = scmp.eq.s32.totalorder %s27, 0
    %p204 = por %p202, %p203
    %p205 = scmp.ne.s32.totalorder %s197, %s199
    %p206 = scmp.eq.s32.totalorder %s32, 4
    %p207 = por %p205, %p206
    %p208 = scmp.ne.s32.totalorder %s199, %s200
    %p209 = scmp.eq.s32.totalorder %s32, 0
    %p210 = por %p208, %p209
    %p211 = scmp.ne.s32.totalorder %s199, %s200
    %p212 = scmp.eq.s32.totalorder %s33, 4
    %p213 = por %p211, %p212
    %p215 = scmp.ne.s32.totalorder %s200, %s214
    %p216 = scmp.eq.s32.totalorder %s33, 0
    %p217 = por %p215, %p216
    %s219 = sadd.s32 %s218, 1
    %p222 = scmp.eq.s32.totalorder %s27, 4
    %p223 = scmp.ne.s32.totalorder %s218, %s220
    %p224 = scmp.eq.s32.totalorder %s27, 0
    %p225 = por %p223, %p224
    %p226 = scmp.ne.s32.totalorder %s218, %s220
    %p227 = scmp.eq.s32.totalorder %s32, 4
    %p228 = por %p226, %p227
    %p229 = scmp.ne.s32.totalorder %s220, %s221
    %p230 = scmp.eq.s32.totalorder %s32, 0
    %p231 = por %p229, %p230
    %p232 = scmp.ne.s32.totalorder %s220, %s221
    %p233 = scmp.eq.s32.totalorder %s33, 4
    %p234 = por %p232, %p233
    %p236 = scmp.ne.s32.totalorder %s221, %s235
    %p237 = scmp.eq.s32.totalorder %s33, 0
    %p238 = por %p236, %p237
    %s240 = sadd.s32 %s239, 1
    %p243 = scmp.eq.s32.totalorder %s27, 4
    %p244 = scmp.ne.s32.totalorder %s239, %s241
    %p245 = scmp.eq.s32.totalorder %s27, 0
    %p246 = por %p244, %p245
    %p247 = scmp.ne.s32.totalorder %s239, %s241
    %p248 = scmp.eq.s32.totalorder %s32, 4
    %p249 = por %p247, %p248
    %p250 = scmp.ne.s32.totalorder %s241, %s242
    %p251 = scmp.eq.s32.totalorder %s32, 0
    %p252 = por %p250, %p251
    %p253 = scmp.ne.s32.totalorder %s241, %s242
    %p254 = scmp.eq.s32.totalorder %s33, 4
    %p255 = por %p253, %p254
    %p257 = scmp.ne.s32.totalorder %s242, %s256
    %p258 = scmp.eq.s32.totalorder %s33, 0
    %p259 = por %p257, %p258
    %s261 = sadd.s32 %s260, 1
    %p264 = scmp.eq.s32.totalorder %s27, 4
    %p265 = scmp.ne.s32.totalorder %s260, %s262
    %p266 = scmp.eq.s32.totalorder %s27, 0
    %p267 = por %p265, %p266
    %p268 = scmp.ne.s32.totalorder %s260, %s262
    %p269 = scmp.eq.s32.totalorder %s32, 4
    %p270 = por %p268, %p269
    %p271 = scmp.ne.s32.totalorder %s262, %s263
    %p272 = scmp.eq.s32.totalorder %s32, 0
    %p273 = por %p271, %p272
    %p274 = scmp.ne.s32.totalorder %s262, %s263
    %p275 = scmp.eq.s32.totalorder %s33, 4
    %p276 = por %p274, %p275
    %p278 = scmp.ne.s32.totalorder %s263, %s277
    %p279 = scmp.eq.s32.totalorder %s33, 0
    %p280 = por %p278, %p279
    %s282 = sadd.s32 %s281, 1
    %p285 = scmp.eq.s32.totalorder %s27, 4
    %p286 = scmp.ne.s32.totalorder %s281, %s283
    %p287 = scmp.eq.s32.totalorder %s27, 0
    %p288 = por %p286, %p287
    %p289 = scmp.ne.s32.totalorder %s281, %s283
    %p290 = scmp.eq.s32.totalorder %s32, 4
    %p291 = por %p289, %p290
    %p292 = scmp.ne.s32.totalorder %s283, %s284
    %p293 = scmp.eq.s32.totalorder %s32, 0
    %p294 = por %p292, %p293
    %p295 = scmp.ne.s32.totalorder %s283, %s284
    %p296 = scmp.eq.s32.totalorder %s33, 4
    %p297 = por %p295, %p296
    %p299 = scmp.ne.s32.totalorder %s284, %s298
    %p300 = scmp.eq.s32.totalorder %s33, 0
    %p301 = por %p299, %p300
    %s303 = sadd.s32 %s302, 1
    %p306 = scmp.eq.s32.totalorder %s27, 4
    %p307 = scmp.ne.s32.totalorder %s302, %s304
    %p308 = scmp.eq.s32.totalorder %s27, 0
    %p309 = por %p307, %p308
    %p310 = scmp.ne.s32.totalorder %s302, %s304
    %p311 = scmp.eq.s32.totalorder %s32, 4
    %p312 = por %p310, %p311
    %p313 = scmp.ne.s32.totalorder %s304, %s305
    %p314 = scmp.eq.s32.totalorder %s32, 0
    %p315 = por %p313, %p314
    %p316 = scmp.ne.s32.totalorder %s304, %s305
    %p317 = scmp.eq.s32.totalorder %s33, 4
    %p318 = por %p316, %p317
    %p320 = scmp.ne.s32.totalorder %s305, %s319
    %p321 = scmp.eq.s32.totalorder %s33, 0
    %p322 = por %p320, %p321
    %s324 = sadd.s32 %s323, 1
    %p327 = scmp.eq.s32.totalorder %s27, 4
    %p328 = scmp.ne.s32.totalorder %s323, %s325
    %p329 = scmp.eq.s32.totalorder %s27, 0
    %p330 = por %p328, %p329
    %p331 = scmp.ne.s32.totalorder %s323, %s325
    %p332 = scmp.eq.s32.totalorder %s32, 4
    %p333 = por %p331, %p332
    %p334 = scmp.ne.s32.totalorder %s325, %s326
    %p335 = scmp.eq.s32.totalorder %s32, 0
    %p336 = por %p334, %p335
    %p337 = scmp.ne.s32.totalorder %s325, %s326
    %p338 = scmp.eq.s32.totalorder %s33, 4
    %p339 = por %p337, %p338
    %p341 = scmp.ne.s32.totalorder %s326, %s340
    %p342 = scmp.eq.s32.totalorder %s33, 0
    %p343 = por %p341, %p342
    %s345 = sadd.s32 %s344, 1
    %p348 = scmp.eq.s32.totalorder %s27, 4
    %p349 = scmp.ne.s32.totalorder %s344, %s346
    %p350 = scmp.eq.s32.totalorder %s27, 0
    %p351 = por %p349, %p350
    %p352 = scmp.ne.s32.totalorder %s344, %s346
    %p353 = scmp.eq.s32.totalorder %s32, 4
    %p354 = por %p352, %p353
    %p355 = scmp.ne.s32.totalorder %s346, %s347
    %p356 = scmp.eq.s32.totalorder %s32, 0
    %p357 = por %p355, %p356
    %p358 = scmp.ne.s32.totalorder %s346, %s347
    %p359 = scmp.eq.s32.totalorder %s33, 4
    %p360 = por %p358, %p359
    %p362 = scmp.ne.s32.totalorder %s347, %s361
    %p363 = scmp.eq.s32.totalorder %s33, 0
    %p364 = por %p362, %p363
    %s366 = sadd.s32 %s365, 1
    %p369 = scmp.eq.s32.totalorder %s27, 4
    %p370 = scmp.ne.s32.totalorder %s365, %s367
    %p371 = scmp.eq.s32.totalorder %s27, 0
    %p372 = por %p370, %p371
    %p373 = scmp.ne.s32.totalorder %s365, %s367
    %p374 = scmp.eq.s32.totalorder %s32, 4
    %p375 = por %p373, %p374
    %p376 = scmp.ne.s32.totalorder %s367, %s368
    %p377 = scmp.eq.s32.totalorder %s32, 0
    %p378 = por %p376, %p377
    %p379 = scmp.ne.s32.totalorder %s367, %s368
    %p380 = scmp.eq.s32.totalorder %s33, 4
    %p381 = por %p379, %p380
    %p383 = scmp.ne.s32.totalorder %s368, %s382
    %p384 = scmp.eq.s32.totalorder %s33, 0
    %p385 = por %p383, %p384
    %s387 = sadd.s32 %s386, 1
    %p390 = scmp.eq.s32.totalorder %s27, 4
    %p391 = scmp.ne.s32.totalorder %s386, %s388
    %p392 = scmp.eq.s32.totalorder %s27, 0
    %p393 = por %p391, %p392
    %p394 = scmp.ne.s32.totalorder %s386, %s388
    %p395 = scmp.eq.s32.totalorder %s32, 4
    %p396 = por %p394, %p395
    %p397 = scmp.ne.s32.totalorder %s388, %s389
    %p398 = scmp.eq.s32.totalorder %s32, 0
    %p399 = por %p397, %p398
    %p400 = scmp.ne.s32.totalorder %s388, %s389
    %p401 = scmp.eq.s32.totalorder %s33, 4
    %p402 = por %p400, %p401
    %p404 = scmp.ne.s32.totalorder %s389, %s403
    %p405 = scmp.eq.s32.totalorder %s33, 0
    %p406 = por %p404, %p405
    %s408 = sadd.s32 %s407, 1
    %p411 = scmp.eq.s32.totalorder %s27, 4
    %p412 = scmp.ne.s32.totalorder %s407, %s409
    %p413 = scmp.eq.s32.totalorder %s27, 0
    %p414 = por %p412, %p413
    %p415 = scmp.ne.s32.totalorder %s407, %s409
    %p416 = scmp.eq.s32.totalorder %s32, 4
    %p417 = por %p415, %p416
    %p418 = scmp.ne.s32.totalorder %s409, %s410
    %p419 = scmp.eq.s32.totalorder %s32, 0
    %p420 = por %p418, %p419
    %p421 = scmp.ne.s32.totalorder %s409, %s410
    %p422 = scmp.eq.s32.totalorder %s33, 4
    %p423 = por %p421, %p422
    %p425 = scmp.ne.s32.totalorder %s410, %s424
    %p426 = scmp.eq.s32.totalorder %s33, 0
    %p427 = por %p425, %p426
    %s429 = sadd.s32 %s428, 1
    %p432 = scmp.eq.s32.totalorder %s27, 4
    %p433 = scmp.ne.s32.totalorder %s428, %s430
    %p434 = scmp.eq.s32.totalorder %s27, 0
    %p435 = por %p433, %p434
    %p436 = scmp.ne.s32.totalorder %s428, %s430
    %p437 = scmp.eq.s32.totalorder %s32, 4
    %p438 = por %p436, %p437
    %p439 = scmp.ne.s32.totalorder %s430, %s431
    %p440 = scmp.eq.s32.totalorder %s32, 0
    %p441 = por %p439, %p440
    %p442 = scmp.ne.s32.totalorder %s430, %s431
    %p443 = scmp.eq.s32.totalorder %s33, 4
    %p444 = por %p442, %p443
    %p446 = scmp.ne.s32.totalorder %s431, %s445
    %p447 = scmp.eq.s32.totalorder %s33, 0
    %p448 = por %p446, %p447
    %s450 = sadd.s32 %s449, 1
    %p453 = scmp.eq.s32.totalorder %s27, 4
    %p454 = scmp.ne.s32.totalorder %s449, %s451
    %p455 = scmp.eq.s32.totalorder %s27, 0
    %p456 = por %p454, %p455
    %p457 = scmp.ne.s32.totalorder %s449, %s451
    %p458 = scmp.eq.s32.totalorder %s32, 4
    %p459 = por %p457, %p458
    %p460 = scmp.ne.s32.totalorder %s451, %s452
    %p461 = scmp.eq.s32.totalorder %s32, 0
    %p462 = por %p460, %p461
    %p463 = scmp.ne.s32.totalorder %s451, %s452
    %p464 = scmp.eq.s32.totalorder %s33, 4
    %p465 = por %p463, %p464
    %p467 = scmp.ne.s32.totalorder %s452, %s466
    %p468 = scmp.eq.s32.totalorder %s33, 0
    %p469 = por %p467, %p468
    %s471 = sadd.s32 %s470, 1
    %p474 = scmp.eq.s32.totalorder %s27, 4
    %p475 = scmp.ne.s32.totalorder %s470, %s472
    %p476 = scmp.eq.s32.totalorder %s27, 0
    %p477 = por %p475, %p476
    %p478 = scmp.ne.s32.totalorder %s470, %s472
    %p479 = scmp.eq.s32.totalorder %s32, 4
    %p480 = por %p478, %p479
    %p481 = scmp.ne.s32.totalorder %s472, %s473
    %p482 = scmp.eq.s32.totalorder %s32, 0
    %p483 = por %p481, %p482
    %p484 = scmp.ne.s32.totalorder %s472, %s473
    %p485 = scmp.eq.s32.totalorder %s33, 4
    %p486 = por %p484, %p485
    %p488 = scmp.ne.s32.totalorder %s473, %s487
    %p489 = scmp.eq.s32.totalorder %s33, 0
    %p490 = por %p488, %p489
    %p491 = scmp.le.s32.totalorder 1, %s27
    %p492 = scmp.lt.s32.totalorder %s27, 6
    %p493 = pnand %p491, %p492
    %p494 = pneg %p493
    // Predicated region
    $region9: #{egcl_forward.1} parent=5 // pred_check
      _
    $region10: #{egcl_forward.1} parent=5 // pred_check_branch
      %496 = sbr.rel (%p493) target = $region12
    $region11: #{egcl_forward.1} parent=5 // pred_region
      %s497 = ssub.s32 %s27, 1
      // Predicated region
      $region13: #{egcl_forward.1} parent=11 // pred_check
        %p498 = pneg %p48
      $region14: #{egcl_forward.1} parent=11 // pred_check_branch
        %500 = sbr.rel (%p498) target = $region16
      $region15: #{egcl_forward.1} parent=11 // pred_region
        _
      $region16: #{egcl_forward.1} parent=11 // pred_fallthru
        _
      // Predicated region
      $region17: #{egcl_forward.1} parent=11 // pred_check
        %p501 = pneg %p69
      $region18: #{egcl_forward.1} parent=11 // pred_check_branch
        %503 = sbr.rel (%p501) target = $region20
      $region19: #{egcl_forward.1} parent=11 // pred_region
        _
      $region20: #{egcl_forward.1} parent=11 // pred_fallthru
        _
      // Predicated region
      $region21: #{egcl_forward.1} parent=11 // pred_check
        %p504 = pneg %p168
      $region22: #{egcl_forward.1} parent=11 // pred_check_branch
        %506 = sbr.rel (%p504) target = $region24
      $region23: #{egcl_forward.1} parent=11 // pred_region
        _
      $region24: #{egcl_forward.1} parent=11 // pred_fallthru
        _
      // Predicated region
      $region25: #{egcl_forward.1} parent=11 // pred_check
        %p507 = pneg %p189
      $region26: #{egcl_forward.1} parent=11 // pred_check_branch
        %509 = sbr.rel (%p507) target = $region28
      $region27: #{egcl_forward.1} parent=11 // pred_region
        _
      $region28: #{egcl_forward.1} parent=11 // pred_fallthru
        _
      // Predicated region
      $region29: #{egcl_forward.1} parent=11 // pred_check
        %p510 = pneg %p210
      $region30: #{egcl_forward.1} parent=11 // pred_check_branch
        %512 = sbr.rel (%p510) target = $region32
      $region31: #{egcl_forward.1} parent=11 // pred_region
        _
      $region32: #{egcl_forward.1} parent=11 // pred_fallthru
        _
      // Predicated region
      $region33: #{egcl_forward.1} parent=11 // pred_check
        %p513 = pneg %p231
      $region34: #{egcl_forward.1} parent=11 // pred_check_branch
        %515 = sbr.rel (%p513) target = $region36
      $region35: #{egcl_forward.1} parent=11 // pred_region
        _
      $region36: #{egcl_forward.1} parent=11 // pred_fallthru
        _
      // Predicated region
      $region37: #{egcl_forward.1} parent=11 // pred_check
        %p516 = pneg %p252
      $region38: #{egcl_forward.1} parent=11 // pred_check_branch
        %518 = sbr.rel (%p516) target = $region40
      $region39: #{egcl_forward.1} parent=11 // pred_region
        _
      $region40: #{egcl_forward.1} parent=11 // pred_fallthru
        _
      // Predicated region
      $region41: #{egcl_forward.1} parent=11 // pred_check
        %p519 = pneg %p273
      $region42: #{egcl_forward.1} parent=11 // pred_check_branch
        %521 = sbr.rel (%p519) target = $region44
      $region43: #{egcl_forward.1} parent=11 // pred_region
        _
      $region44: #{egcl_forward.1} parent=11 // pred_fallthru
        _
      // Predicated region
      $region45: #{egcl_forward.1} parent=11 // pred_check
        %p522 = pneg %p294
      $region46: #{egcl_forward.1} parent=11 // pred_check_branch
        %524 = sbr.rel (%p522) target = $region48
      $region47: #{egcl_forward.1} parent=11 // pred_region
        _
      $region48: #{egcl_forward.1} parent=11 // pred_fallthru
        _
      // Predicated region
      $region49: #{egcl_forward.1} parent=11 // pred_check
        %p525 = pneg %p315
      $region50: #{egcl_forward.1} parent=11 // pred_check_branch
        %527 = sbr.rel (%p525) target = $region52
      $region51: #{egcl_forward.1} parent=11 // pred_region
        _
      $region52: #{egcl_forward.1} parent=11 // pred_fallthru
        _
      // Predicated region
      $region53: #{egcl_forward.1} parent=11 // pred_check
        %p528 = pneg %p336
      $region54: #{egcl_forward.1} parent=11 // pred_check_branch
        %530 = sbr.rel (%p528) target = $region56
      $region55: #{egcl_forward.1} parent=11 // pred_region
        _
      $region56: #{egcl_forward.1} parent=11 // pred_fallthru
        _
      // Predicated region
      $region57: #{egcl_forward.1} parent=11 // pred_check
        %p531 = pneg %p357
      $region58: #{egcl_forward.1} parent=11 // pred_check_branch
        %533 = sbr.rel (%p531) target = $region60
      $region59: #{egcl_forward.1} parent=11 // pred_region
        _
      $region60: #{egcl_forward.1} parent=11 // pred_fallthru
        _
      // Predicated region
      $region61: #{egcl_forward.1} parent=11 // pred_check
        %p534 = pneg %p378
      $region62: #{egcl_forward.1} parent=11 // pred_check_branch
        %536 = sbr.rel (%p534) target = $region64
      $region63: #{egcl_forward.1} parent=11 // pred_region
        _
      $region64: #{egcl_forward.1} parent=11 // pred_fallthru
        _
      // Predicated region
      $region65: #{egcl_forward.1} parent=11 // pred_check
        %p537 = pneg %p399
      $region66: #{egcl_forward.1} parent=11 // pred_check_branch
        %539 = sbr.rel (%p537) target = $region68
      $region67: #{egcl_forward.1} parent=11 // pred_region
        _
      $region68: #{egcl_forward.1} parent=11 // pred_fallthru
        _
      // Predicated region
      $region69: #{egcl_forward.1} parent=11 // pred_check
        %p540 = pneg %p420
      $region70: #{egcl_forward.1} parent=11 // pred_check_branch
        %542 = sbr.rel (%p540) target = $region72
      $region71: #{egcl_forward.1} parent=11 // pred_region
        _
      $region72: #{egcl_forward.1} parent=11 // pred_fallthru
        _
      // Predicated region
      $region73: #{egcl_forward.1} parent=11 // pred_check
        %p543 = pneg %p441
      $region74: #{egcl_forward.1} parent=11 // pred_check_branch
        %545 = sbr.rel (%p543) target = $region76
      $region75: #{egcl_forward.1} parent=11 // pred_region
        _
      $region76: #{egcl_forward.1} parent=11 // pred_fallthru
        _
    $region12: #{egcl_forward.1} parent=5 // pred_fallthru
      _
    %p546 = scmp.lt.s32.totalorder %s27, 5
    // Predicated region
    $region77: #{egcl_forward.1} parent=5 // pred_check
      %p547 = pneg %p546
    $region78: #{egcl_forward.1} parent=5 // pred_check_branch
      %549 = sbr.rel (%p547) target = $region80
    $region79: #{egcl_forward.1} parent=5 // pred_region
      // Predicated region
      $region81: #{egcl_forward.1} parent=79 // pred_check
        %p550 = pneg %p89
      $region82: #{egcl_forward.1} parent=79 // pred_check_branch
        %552 = sbr.rel (%p550) target = $region84
      $region83: #{egcl_forward.1} parent=79 // pred_region
        %s553 = smul.u32 16, %s27
        %p554 = scmp.lt.s32.totalorder %s553, 79
        %s555 = scalar_select %p554, %s553, 79
        %s556 = smul.addr %s555, 8
        %s557 = scalar_lea.vmem %s2, %s556
        %s558 = smul.u32 16, %s27
      $region84: #{egcl_forward.1} parent=79 // pred_fallthru
        _
      // Predicated region
      $region85: #{egcl_forward.1} parent=79 // pred_check
        %p559 = pneg %p115
      $region86: #{egcl_forward.1} parent=79 // pred_check_branch
        %561 = sbr.rel (%p559) target = $region88
      $region87: #{egcl_forward.1} parent=79 // pred_region
        %s562 = smul.u32 16, %s27
        %p563 = scmp.lt.s32.totalorder %s562, 79
        %s564 = scalar_select %p563, %s562, 79
        %s565 = smul.addr %s564, 8
        %s566 = scalar_lea.vmem %s3, %s565
        %s567 = smul.u32 16, %s27
      $region88: #{egcl_forward.1} parent=79 // pred_fallthru
        _
      // Predicated region
      $region89: #{egcl_forward.1} parent=79 // pred_check
        %p568 = pneg %p141
      $region90: #{egcl_forward.1} parent=79 // pred_check_branch
        %570 = sbr.rel (%p568) target = $region92
      $region91: #{egcl_forward.1} parent=79 // pred_region
        %p571 = scmp.lt.s32.totalorder %s27, 4
        %s572 = scalar_select %p571, %s27, 4
        %s573 = scalar_lea.vmem %s4, %s572
      $region92: #{egcl_forward.1} parent=79 // pred_fallthru
        _
    $region80: #{egcl_forward.1} parent=5 // pred_fallthru
      _
    %p574 = scmp.le.s32.totalorder 1, %s27
    %p575 = scmp.lt.s32.totalorder %s27, 6
    %p576 = pnand %p574, %p575
    %p577 = pneg %p576
    // Predicated region
    $region93: #{egcl_forward.1} parent=5 // pred_check
      _
    $region94: #{egcl_forward.1} parent=5 // pred_check_branch
      %579 = sbr.rel (%p576) target = $region96
    $region95: #{egcl_forward.1} parent=5 // pred_region
      %s580 = ssub.s32 %s27, 1
      %p581 = pneg %p48
      %p582 = pneg %p45
      %p583 = pneg %p69
      %p584 = pneg %p66
      %s585 = smul.u32 16, %s32
      %p586 = scmp.lt.s32.totalorder %s585, 79
      %s587 = scalar_select %p586, %s585, 79
      %s588 = smul.addr %s587, 8
      %s589 = scalar_lea.vmem %s2, %s588
      %p590 = pneg %p95
      %p591 = pneg %p92
      %s592 = smul.u32 16, %s32
      %p593 = scmp.lt.s32.totalorder %s592, 79
      %s594 = scalar_select %p593, %s592, 79
      %s595 = smul.addr %s594, 8
      %s596 = scalar_lea.vmem %s3, %s595
      %p597 = pneg %p121
      %p598 = pneg %p118
      %p599 = scmp.lt.s32.totalorder %s32, 4
      %s600 = scalar_select %p599, %s32, 4
      %s601 = scalar_lea.vmem %s4, %s600
      %p602 = pneg %p147
      %p603 = pneg %p144
      %p604 = pneg %p168
      %p605 = pneg %p165
      %p606 = pneg %p189
      %p607 = pneg %p186
      %p608 = pneg %p210
      %p609 = pneg %p207
      %p610 = pneg %p231
      %p611 = pneg %p228
      %p612 = pneg %p252
      %p613 = pneg %p249
      %p614 = pneg %p273
      %p615 = pneg %p270
      %p616 = pneg %p294
      %p617 = pneg %p291
      %p618 = pneg %p315
      %p619 = pneg %p312
      %p620 = pneg %p336
      %p621 = pneg %p333
      %p622 = pneg %p357
      %p623 = pneg %p354
      %p624 = pneg %p378
      %p625 = pneg %p375
      %p626 = pneg %p399
      %p627 = pneg %p396
      %p628 = pneg %p420
      %p629 = pneg %p417
      %p630 = pneg %p441
      %p631 = pneg %p438
      %p632 = pneg %p462
      %p633 = pneg %p459
      %p634 = pneg %p483
      %p635 = pneg %p480
      %s636 = smul.u32 16, %s32
      %p637 = scmp.lt.s32.totalorder %s636, 79
      %s638 = scalar_select %p637, %s636, 79
      %s639 = smul.addr %s638, 8
      %s640 = scalar_lea.vmem %s2, %s639
      %s641 = smul.u32 16, %s32
      %s642 = smul.u32 16, %s32
      %p643 = scmp.lt.s32.totalorder %s642, 79
      %s644 = scalar_select %p643, %s642, 79
      %s645 = smul.addr %s644, 8
      %s646 = scalar_lea.vmem %s3, %s645
      %s647 = smul.u32 16, %s32
      %p648 = scmp.lt.s32.totalorder %s32, 4
      %s649 = scalar_select %p648, %s32, 4
      %s650 = scalar_lea.vmem %s4, %s649
      %p652 = scmp.eq.s32.totalorder %s32, 0
      // Predicated region
      $region97: #{egcl_forward.1} parent=95 // pred_check
        %p653 = pneg %p652
      $region98: #{egcl_forward.1} parent=95 // pred_check_branch
        %655 = sbr.rel (%p653) target = $region100
      $region99: #{egcl_forward.1} parent=95 // pred_region
        %v656 = vld [vmem:[%s0] sm:$0xff]
        %v657 = vld [vmem:[%s0 + $0x8] sm:$0xff]
        %v658 = vld [vmem:[%s0 + $0x10] sm:$0xff]
        %v659 = vld [vmem:[%s1] sm:$0xff]
        %v660 = vld [vmem:[%s1 + $0x8] sm:$0xff]
        %v661 = vld [vmem:[%s1 + $0x10] sm:$0xff]
        %v662 = vld [vmem:[%s5] sm:$0xff]
        %v663 = vld [vmem:[%s5 + $0x8] sm:$0xff]
        %v664 = vld [vmem:[%s5 + $0x10] sm:$0xff]
        %v665 = vld [vmem:[%s5 + $0x18] sm:$0xff]
        %vm666 = vcmask 261120
        %v668 = vsel %vm666, %v656, 0
        %v671 = vsel %vm666, %v657, 0
        %v674 = vsel %vm666, %v658, 0
        %676 = vmatprep.subr.mxu0 0.0
        %677 = vmatpush1.msra.mxu0 0.0
        %678 = vmatprep.subr.mxu0 0.0
        %679 = vmatpush1.msra.mxu0 0.0
        %680 = vmatprep.subr.mxu0 0.0
        %681 = vmatpush1.msra.mxu0 0.0
        %682 = vmatprep.subr.mxu0 0.0
        %683 = vmatpush1.msra.mxu0 0.0
        %684 = vmatprep.subr.mxu0 0.0
        %685 = vmatpush1.msra.mxu0 0.0
        %686 = vmatprep.subr.mxu0 0.0
        %687 = vmatpush1.msra.mxu0 0.0
        %688 = vmatprep.subr.mxu0 0.0
        %689 = vmatpush1.msra.mxu0 0.0
        %690 = vmatprep.subr.mxu0 0.0
        %691 = vmatpush1.msra.mxu0 0.0
        %692 = vmatprep.subr.mxu0 0.0
        %693 = vmatpush1.msra.mxu0 0.0
        %694 = vmatprep.subr.mxu0 0.0
        %695 = vmatpush1.msra.mxu0 0.0
        %696 = vmatprep.subr.mxu0 0.0
        %697 = vmatpush1.msra.mxu0 0.0
        %698 = vmatprep.subr.mxu0 0.0
        %699 = vmatpush1.msra.mxu0 0.0
        %700 = vmatprep.subr.mxu0 0.0
        %701 = vmatpush1.msra.mxu0 %v665
        %702 = vmatprep.subr.mxu0 0.0
        %703 = vmatpush1.msra.mxu0 %v664
        %704 = vmatprep.subr.mxu0 0.0
        %705 = vmatpush1.msra.mxu0 %v663
        %706 = vmatprep.subr.mxu0 0.0
        %707 = vmatpush1.msra.mxu0 %v662
        %708 = vmatprep.subr.mxu0 0.0
        %709 = vmatpush2.msra.mxu0 0.0
        %710 = vmatprep.subr.mxu0 0.0
        %711 = vmatpush2.msra.mxu0 0.0
        %712 = vmatprep.subr.mxu0 0.0
        %713 = vmatpush2.msra.mxu0 0.0
        %714 = vmatprep.subr.mxu0 0.0
        %715 = vmatpush2.msra.mxu0 0.0
        %716 = vmatprep.subr.mxu0 0.0
        %717 = vmatpush2.msra.mxu0 0.0
        %718 = vmatprep.subr.mxu0 0.0
        %719 = vmatpush2.msra.mxu0 0.0
        %720 = vmatprep.subr.mxu0 0.0
        %721 = vmatpush2.msra.mxu0 0.0
        %722 = vmatprep.subr.mxu0 0.0
        %723 = vmatpush2.msra.mxu0 0.0
        %724 = vmatprep.subr.mxu0 0.0
        %725 = vmatpush2.msra.mxu0 0.0
        %726 = vmatprep.subr.mxu0 0.0
        %727 = vmatpush2.msra.mxu0 0.0
        %728 = vmatprep.subr.mxu0 0.0
        %729 = vmatpush2.msra.mxu0 0.0
        %730 = vmatprep.subr.mxu0 0.0
        %731 = vmatpush2.msra.mxu0 0.0
        %732 = vmatprep.subr.mxu0 0.0
        %733 = vmatpush2.msra.mxu0 0.0
        %734 = vmatprep.subr.mxu0 0.0
        %735 = vmatpush2.msra.mxu0 0.0
        %736 = vmatprep.subr.mxu0 0.0
        %737 = vmatpush2.msra.mxu0 0.0
        %738 = vmatprep.subr.mxu0 0.0
        %739 = vmatpush2.msra.mxu0 0.0
        %740 = vmatprep.mubr.f32.mxu0 0.0
        %741 = vmatmul.mubr.f32.gmra.mxu0 %v668
        %v742 = vpop.f32.mrf.mxu0
        %v743 = vadd.f32 0.0, %v742
        %v744 = vpop.f32.mrf.mxu0
        %745 = vmatprep.mubr.f32.mxu0 0.0
        %746 = vmatmul.mubr.f32.gmra.mxu0 %v671
        %v747 = vpop.f32.mrf.mxu0
        %v748 = vadd.f32 0.0, %v747
        %v749 = vpop.f32.mrf.mxu0
        %750 = vmatprep.mubr.f32.mxu0 0.0
        %751 = vmatmul.mubr.f32.gmra.mxu0 %v674
        %v752 = vpop.f32.mrf.mxu0
        %v753 = vadd.f32 0.0, %v752
        %v754 = vpop.f32.mrf.mxu0
        %755 = vdwg.mxu0
        %v756 = vld [vmem:[%s6] sm:$0xff]
        %v757 = vld [vmem:[%s6 + $0x8] sm:$0xff]
        %v758 = vld [vmem:[%s6 + $0x10] sm:$0xff]
        %v759 = vld [vmem:[%s6 + $0x18] sm:$0xff]
        %760 = vmatprep.subr.mxu0 0.0
        %761 = vmatpush1.msra.mxu0 0.0
        %762 = vmatprep.subr.mxu0 0.0
        %763 = vmatpush1.msra.mxu0 0.0
        %764 = vmatprep.subr.mxu0 0.0
        %765 = vmatpush1.msra.mxu0 0.0
        %766 = vmatprep.subr.mxu0 0.0
        %767 = vmatpush1.msra.mxu0 0.0
        %768 = vmatprep.subr.mxu0 0.0
        %769 = vmatpush1.msra.mxu0 0.0
        %770 = vmatprep.subr.mxu0 0.0
        %771 = vmatpush1.msra.mxu0 0.0
        %772 = vmatprep.subr.mxu0 0.0
        %773 = vmatpush1.msra.mxu0 0.0
        %774 = vmatprep.subr.mxu0 0.0
        %775 = vmatpush1.msra.mxu0 0.0
        %776 = vmatprep.subr.mxu0 0.0
        %777 = vmatpush1.msra.mxu0 0.0
        %778 = vmatprep.subr.mxu0 0.0
        %779 = vmatpush1.msra.mxu0 0.0
        %780 = vmatprep.subr.mxu0 0.0
        %781 = vmatpush1.msra.mxu0 0.0
        %782 = vmatprep.subr.mxu0 0.0
        %783 = vmatpush1.msra.mxu0 0.0
        %784 = vmatprep.subr.mxu0 0.0
        %785 = vmatpush1.msra.mxu0 %v759
        %786 = vmatprep.subr.mxu0 0.0
        %787 = vmatpush1.msra.mxu0 %v758
        %788 = vmatprep.subr.mxu0 0.0
        %789 = vmatpush1.msra.mxu0 %v757
        %790 = vmatprep.subr.mxu0 0.0
        %791 = vmatpush1.msra.mxu0 %v756
        %792 = vmatprep.subr.mxu0 0.0
        %793 = vmatpush2.msra.mxu0 0.0
        %794 = vmatprep.subr.mxu0 0.0
        %795 = vmatpush2.msra.mxu0 0.0
        %796 = vmatprep.subr.mxu0 0.0
        %797 = vmatpush2.msra.mxu0 0.0
        %798 = vmatprep.subr.mxu0 0.0
        %799 = vmatpush2.msra.mxu0 0.0
        %800 = vmatprep.subr.mxu0 0.0
        %801 = vmatpush2.msra.mxu0 0.0
        %802 = vmatprep.subr.mxu0 0.0
        %803 = vmatpush2.msra.mxu0 0.0
        %804 = vmatprep.subr.mxu0 0.0
        %805 = vmatpush2.msra.mxu0 0.0
        %806 = vmatprep.subr.mxu0 0.0
        %807 = vmatpush2.msra.mxu0 0.0
        %808 = vmatprep.subr.mxu0 0.0
        %809 = vmatpush2.msra.mxu0 0.0
        %810 = vmatprep.subr.mxu0 0.0
        %811 = vmatpush2.msra.mxu0 0.0
        %812 = vmatprep.subr.mxu0 0.0
        %813 = vmatpush2.msra.mxu0 0.0
        %814 = vmatprep.subr.mxu0 0.0
        %815 = vmatpush2.msra.mxu0 0.0
        %816 = vmatprep.subr.mxu0 0.0
        %817 = vmatpush2.msra.mxu0 0.0
        %818 = vmatprep.subr.mxu0 0.0
        %819 = vmatpush2.msra.mxu0 0.0
        %820 = vmatprep.subr.mxu0 0.0
        %821 = vmatpush2.msra.mxu0 0.0
        %822 = vmatprep.subr.mxu0 0.0
        %823 = vmatpush2.msra.mxu0 0.0
        %824 = vmatprep.mubr.f32.mxu0 0.0
        %825 = vmatmul.mubr.f32.gmra.mxu0 %v668
        %v826 = vpop.f32.mrf.mxu0
        %v827 = vadd.f32 0.0, %v826
        %v828 = vpop.f32.mrf.mxu0
        %829 = vmatprep.mubr.f32.mxu0 0.0
        %830 = vmatmul.mubr.f32.gmra.mxu0 %v671
        %v831 = vpop.f32.mrf.mxu0
        %v832 = vadd.f32 0.0, %v831
        %v833 = vpop.f32.mrf.mxu0
        %834 = vmatprep.mubr.f32.mxu0 0.0
        %835 = vmatmul.mubr.f32.gmra.mxu0 %v674
        %v836 = vpop.f32.mrf.mxu0
        %v837 = vadd.f32 0.0, %v836
        %v838 = vpop.f32.mrf.mxu0
        %839 = vdwg.mxu0
        %v840 = vsub.f32 0.0, %v659
        %v841 = vsub.f32 0.0, %v660
        %v842 = vsub.f32 0.0, %v661
        %846 = vrot.lane.b32.xlu0 %v659, 32
        %v847 = vpop.permute.xlu0 %846
        %848 = vrot.lane.b32.xlu0 %v660, 32
        %v849 = vpop.permute.xlu0 %848
        %850 = vrot.lane.b32.xlu0 %v661, 32
        %v851 = vpop.permute.xlu0 %850
        %v855 = vsel %vm666, %v743, %v847
        %v856 = vsel %vm666, %v748, %v849
        %v857 = vsel %vm666, %v753, %v851
        %vm858 = vcmask 285696
        %v859 = vsel %vm858, %v855, 0.0
        %v860 = vsel %vm858, %v856, 0.0
        %v861 = vsel %vm858, %v857, 0.0
        %865 = vrot.lane.b32.xlu0 %v840, 32
        %v866 = vpop.permute.xlu0 %865
        %867 = vrot.lane.b32.xlu0 %v841, 32
        %v868 = vpop.permute.xlu0 %867
        %869 = vrot.lane.b32.xlu0 %v842, 32
        %v870 = vpop.permute.xlu0 %869
        %v874 = vsel %vm666, %v827, %v866
        %v875 = vsel %vm666, %v832, %v868
        %v876 = vsel %vm666, %v837, %v870
        %v877 = vsel %vm858, %v874, 0.0
        %v878 = vsel %vm858, %v875, 0.0
        %v879 = vsel %vm858, %v876, 0.0
        %v880 = vpack.c.bf16 %v860, %v859
        %v881 = vpack.c.bf16 %v877, %v861
        %v882 = vpack.c.bf16 %v879, %v878
        %v886 = vunpack.c.l.b16 %v880
        %v887 = vunpack.c.h.b16 %v880
        %v888 = vunpack.c.l.b16 %v881
        %v889 = vunpack.c.h.b16 %v881
        %v890 = vunpack.c.l.b16 %v882
        %v891 = vunpack.c.h.b16 %v882
        %v892 = vpack.c.b16 %v886, %v886
        %v893 = vpack.c.b16 %v887, %v887
        %v894 = vpack.c.b16 %v888, %v888
        %v895 = vpack.c.b16 %v889, %v889
        %v896 = vpack.c.b16 %v890, %v890
        %v897 = vpack.c.b16 %v891, %v891
        %904 = vst [vmem:[#allocation2] sm:$0xf] %v892
        %905 = vst [vmem:[#allocation2 + $0x4] sm:$0xf] %v893
        %906 = vst [vmem:[#allocation2 + $0x8] sm:$0xf] %v894
        %907 = vst [vmem:[#allocation2 + $0xc] sm:$0xf] %v895
        %908 = vst [vmem:[#allocation2 + $0x10] sm:$0xf] %v896
        %909 = vst [vmem:[#allocation2 + $0x14] sm:$0xf] %v897
        %910 = vst [vmem:[#allocation3] sm:$0xff] 0.0
        %911 = vst [vmem:[#allocation3 + $0x8] sm:$0xff] 0.0
        %912 = vst [vmem:[#allocation3 + $0x10] sm:$0xff] 0.0
      $region100: #{egcl_forward.1} parent=95 // pred_fallthru
        _
      %v913 = vld [vmem:[%s640] sm:$0xff]
      %v914 = vld [vmem:[%s640 + $0x8] sm:$0xff]
      %v915 = vld [vmem:[%s640 + $0x10] sm:$0xff]
      %v916 = vld [vmem:[%s640 + $0x18] sm:$0xff]
      %v917 = vld [vmem:[%s640 + $0x20] sm:$0xff]
      %v918 = vld [vmem:[%s640 + $0x28] sm:$0xff]
      %v919 = vld [vmem:[%s640 + $0x30] sm:$0xff]
      %v920 = vld [vmem:[%s640 + $0x38] sm:$0xff]
      %v921 = vld [vmem:[%s640 + $0x40] sm:$0xff]
      %v922 = vld [vmem:[%s640 + $0x48] sm:$0xff]
      %v923 = vld [vmem:[%s640 + $0x50] sm:$0xff]
      %v924 = vld [vmem:[%s640 + $0x58] sm:$0xff]
      %v925 = vld [vmem:[%s640 + $0x60] sm:$0xff]
      %v926 = vld [vmem:[%s640 + $0x68] sm:$0xff]
      %v927 = vld [vmem:[%s640 + $0x70] sm:$0xff]
      %v928 = vld [vmem:[%s640 + $0x78] sm:$0xff]
      %v929 = vld [vmem:[%s646] sm:$0xff]
      %v930 = vld [vmem:[%s646 + $0x8] sm:$0xff]
      %v931 = vld [vmem:[%s646 + $0x10] sm:$0xff]
      %v932 = vld [vmem:[%s646 + $0x18] sm:$0xff]
      %v933 = vld [vmem:[%s646 + $0x20] sm:$0xff]
      %v934 = vld [vmem:[%s646 + $0x28] sm:$0xff]
      %v935 = vld [vmem:[%s646 + $0x30] sm:$0xff]
      %v936 = vld [vmem:[%s646 + $0x38] sm:$0xff]
      %v937 = vld [vmem:[%s646 + $0x40] sm:$0xff]
      %v938 = vld [vmem:[%s646 + $0x48] sm:$0xff]
      %v939 = vld [vmem:[%s646 + $0x50] sm:$0xff]
      %v940 = vld [vmem:[%s646 + $0x58] sm:$0xff]
      %v941 = vld [vmem:[%s646 + $0x60] sm:$0xff]
      %v942 = vld [vmem:[%s646 + $0x68] sm:$0xff]
      %v943 = vld [vmem:[%s646 + $0x70] sm:$0xff]
      %v944 = vld [vmem:[%s646 + $0x78] sm:$0xff]
      %v945 = vlaneseq
      %v946 = vand.u32 %v945, 127
      %947 = vset.pattern.permute.xlu0 0
      %948 = vperm.xlu0 %947, %v913
      %v949 = vpop.permute.xlu0 %948
      %950 = vset.pattern.permute.xlu0 0
      %951 = vperm.xlu0 %950, %v914
      %v952 = vpop.permute.xlu0 %951
      %953 = vset.pattern.permute.xlu0 0
      %954 = vperm.xlu0 %953, %v915
      %v955 = vpop.permute.xlu0 %954
      %956 = vset.pattern.permute.xlu0 0
      %957 = vperm.xlu0 %956, %v916
      %v958 = vpop.permute.xlu0 %957
      %959 = vset.pattern.permute.xlu0 0
      %960 = vperm.xlu0 %959, %v917
      %v961 = vpop.permute.xlu0 %960
      %962 = vset.pattern.permute.xlu0 0
      %963 = vperm.xlu0 %962, %v918
      %v964 = vpop.permute.xlu0 %963
      %965 = vset.pattern.permute.xlu0 0
      %966 = vperm.xlu0 %965, %v919
      %v967 = vpop.permute.xlu0 %966
      %968 = vset.pattern.permute.xlu0 0
      %969 = vperm.xlu0 %968, %v920
      %v970 = vpop.permute.xlu0 %969
      %971 = vset.pattern.permute.xlu0 0
      %972 = vperm.xlu0 %971, %v921
      %v973 = vpop.permute.xlu0 %972
      %974 = vset.pattern.permute.xlu0 0
      %975 = vperm.xlu0 %974, %v922
      %v976 = vpop.permute.xlu0 %975
      %977 = vset.pattern.permute.xlu0 0
      %978 = vperm.xlu0 %977, %v923
      %v979 = vpop.permute.xlu0 %978
      %980 = vset.pattern.permute.xlu0 0
      %981 = vperm.xlu0 %980, %v924
      %v982 = vpop.permute.xlu0 %981
      %983 = vset.pattern.permute.xlu0 0
      %984 = vperm.xlu0 %983, %v925
      %v985 = vpop.permute.xlu0 %984
      %986 = vset.pattern.permute.xlu0 0
      %987 = vperm.xlu0 %986, %v926
      %v988 = vpop.permute.xlu0 %987
      %989 = vset.pattern.permute.xlu0 0
      %990 = vperm.xlu0 %989, %v927
      %v991 = vpop.permute.xlu0 %990
      %992 = vset.pattern.permute.xlu0 0
      %993 = vperm.xlu0 %992, %v928
      %v994 = vpop.permute.xlu0 %993
      %vm995 = vcmp.eq.s32.totalorder %v946, %v949
      %vm996 = vcmp.eq.s32.totalorder %v946, %v952
      %vm997 = vcmp.eq.s32.totalorder %v946, %v955
      %vm998 = vcmp.eq.s32.totalorder %v946, %v958
      %vm999 = vcmp.eq.s32.totalorder %v946, %v961
      %vm1000 = vcmp.eq.s32.totalorder %v946, %v964
      %vm1001 = vcmp.eq.s32.totalorder %v946, %v967
      %vm1002 = vcmp.eq.s32.totalorder %v946, %v970
      %vm1003 = vcmp.eq.s32.totalorder %v946, %v973
      %vm1004 = vcmp.eq.s32.totalorder %v946, %v976
      %vm1005 = vcmp.eq.s32.totalorder %v946, %v979
      %vm1006 = vcmp.eq.s32.totalorder %v946, %v982
      %vm1007 = vcmp.eq.s32.totalorder %v946, %v985
      %vm1008 = vcmp.eq.s32.totalorder %v946, %v988
      %vm1009 = vcmp.eq.s32.totalorder %v946, %v991
      %vm1010 = vcmp.eq.s32.totalorder %v946, %v994
      %v1011 = vadd.s32 %v929, 24
      %v1012 = vadd.s32 %v930, 24
      %v1013 = vadd.s32 %v931, 24
      %v1014 = vadd.s32 %v932, 24
      %v1015 = vadd.s32 %v933, 24
      %v1016 = vadd.s32 %v934, 24
      %v1017 = vadd.s32 %v935, 24
      %v1018 = vadd.s32 %v936, 24
      %v1019 = vadd.s32 %v937, 24
      %v1020 = vadd.s32 %v938, 24
      %v1021 = vadd.s32 %v939, 24
      %v1022 = vadd.s32 %v940, 24
      %v1023 = vadd.s32 %v941, 24
      %v1024 = vadd.s32 %v942, 24
      %v1025 = vadd.s32 %v943, 24
      %v1026 = vadd.s32 %v944, 24
      %1027 = vset.pattern.permute.xlu0 0
      %1028 = vperm.xlu0 %1027, %v1011
      %v1029 = vpop.permute.xlu0 %1028
      %1030 = vset.pattern.permute.xlu0 0
      %1031 = vperm.xlu0 %1030, %v1012
      %v1032 = vpop.permute.xlu0 %1031
      %1033 = vset.pattern.permute.xlu0 0
      %1034 = vperm.xlu0 %1033, %v1013
      %v1035 = vpop.permute.xlu0 %1034
      %1036 = vset.pattern.permute.xlu0 0
      %1037 = vperm.xlu0 %1036, %v1014
      %v1038 = vpop.permute.xlu0 %1037
      %1039 = vset.pattern.permute.xlu0 0
      %1040 = vperm.xlu0 %1039, %v1015
      %v1041 = vpop.permute.xlu0 %1040
      %1042 = vset.pattern.permute.xlu0 0
      %1043 = vperm.xlu0 %1042, %v1016
      %v1044 = vpop.permute.xlu0 %1043
      %1045 = vset.pattern.permute.xlu0 0
      %1046 = vperm.xlu0 %1045, %v1017
      %v1047 = vpop.permute.xlu0 %1046
      %1048 = vset.pattern.permute.xlu0 0
      %1049 = vperm.xlu0 %1048, %v1018
      %v1050 = vpop.permute.xlu0 %1049
      %1051 = vset.pattern.permute.xlu0 0
      %1052 = vperm.xlu0 %1051, %v1019
      %v1053 = vpop.permute.xlu0 %1052
      %1054 = vset.pattern.permute.xlu0 0
      %1055 = vperm.xlu0 %1054, %v1020
      %v1056 = vpop.permute.xlu0 %1055
      %1057 = vset.pattern.permute.xlu0 0
      %1058 = vperm.xlu0 %1057, %v1021
      %v1059 = vpop.permute.xlu0 %1058
      %1060 = vset.pattern.permute.xlu0 0
      %1061 = vperm.xlu0 %1060, %v1022
      %v1062 = vpop.permute.xlu0 %1061
      %1063 = vset.pattern.permute.xlu0 0
      %1064 = vperm.xlu0 %1063, %v1023
      %v1065 = vpop.permute.xlu0 %1064
      %1066 = vset.pattern.permute.xlu0 0
      %1067 = vperm.xlu0 %1066, %v1024
      %v1068 = vpop.permute.xlu0 %1067
      %1069 = vset.pattern.permute.xlu0 0
      %1070 = vperm.xlu0 %1069, %v1025
      %v1071 = vpop.permute.xlu0 %1070
      %1072 = vset.pattern.permute.xlu0 0
      %1073 = vperm.xlu0 %1072, %v1026
      %v1074 = vpop.permute.xlu0 %1073
      %vm1075 = vcmp.eq.s32.totalorder %v946, %v1029
      %vm1076 = vcmp.eq.s32.totalorder %v946, %v1032
      %vm1077 = vcmp.eq.s32.totalorder %v946, %v1035
      %vm1078 = vcmp.eq.s32.totalorder %v946, %v1038
      %vm1079 = vcmp.eq.s32.totalorder %v946, %v1041
      %vm1080 = vcmp.eq.s32.totalorder %v946, %v1044
      %vm1081 = vcmp.eq.s32.totalorder %v946, %v1047
      %vm1082 = vcmp.eq.s32.totalorder %v946, %v1050
      %vm1083 = vcmp.eq.s32.totalorder %v946, %v1053
      %vm1084 = vcmp.eq.s32.totalorder %v946, %v1056
      %vm1085 = vcmp.eq.s32.totalorder %v946, %v1059
      %vm1086 = vcmp.eq.s32.totalorder %v946, %v1062
      %vm1087 = vcmp.eq.s32.totalorder %v946, %v1065
      %vm1088 = vcmp.eq.s32.totalorder %v946, %v1068
      %vm1089 = vcmp.eq.s32.totalorder %v946, %v1071
      %vm1090 = vcmp.eq.s32.totalorder %v946, %v1074
      %vm1091 = vmor %vm995, %vm1075
      %vm1092 = vmor %vm996, %vm1076
      %vm1093 = vmor %vm997, %vm1077
      %vm1094 = vmor %vm998, %vm1078
      %vm1095 = vmor %vm999, %vm1079
      %vm1096 = vmor %vm1000, %vm1080
      %vm1097 = vmor %vm1001, %vm1081
      %vm1098 = vmor %vm1002, %vm1082
      %vm1099 = vmor %vm1003, %vm1083
      %vm1100 = vmor %vm1004, %vm1084
      %vm1101 = vmor %vm1005, %vm1085
      %vm1102 = vmor %vm1006, %vm1086
      %vm1103 = vmor %vm1007, %vm1087
      %vm1104 = vmor %vm1008, %vm1088
      %vm1105 = vmor %vm1009, %vm1089
      %vm1106 = vmor %vm1010, %vm1090
      %v1107 = vsel %vm1091, 1, 0
      %v1108 = vsel %vm1092, 1, 0
      %v1109 = vsel %vm1093, 1, 0
      %v1110 = vsel %vm1094, 1, 0
      %v1111 = vsel %vm1095, 1, 0
      %v1112 = vsel %vm1096, 1, 0
      %v1113 = vsel %vm1097, 1, 0
      %v1114 = vsel %vm1098, 1, 0
      %v1115 = vsel %vm1099, 1, 0
      %v1116 = vsel %vm1100, 1, 0
      %v1117 = vsel %vm1101, 1, 0
      %v1118 = vsel %vm1102, 1, 0
      %v1119 = vsel %vm1103, 1, 0
      %v1120 = vsel %vm1104, 1, 0
      %v1121 = vsel %vm1105, 1, 0
      %v1122 = vsel %vm1106, 1, 0
      %v1123 = vcvt.s32.f32 %v1107
      %v1124 = vcvt.s32.f32 %v1108
      %v1125 = vcvt.s32.f32 %v1109
      %v1126 = vcvt.s32.f32 %v1110
      %v1127 = vcvt.s32.f32 %v1111
      %v1128 = vcvt.s32.f32 %v1112
      %v1129 = vcvt.s32.f32 %v1113
      %v1130 = vcvt.s32.f32 %v1114
      %v1131 = vcvt.s32.f32 %v1115
      %v1132 = vcvt.s32.f32 %v1116
      %v1133 = vcvt.s32.f32 %v1117
      %v1134 = vcvt.s32.f32 %v1118
      %v1135 = vcvt.s32.f32 %v1119
      %v1136 = vcvt.s32.f32 %v1120
      %v1137 = vcvt.s32.f32 %v1121
      %v1138 = vcvt.s32.f32 %v1122
      %v1139 = vpack.c.bf16 %v1124, %v1123
      %v1140 = vpack.c.bf16 %v1126, %v1125
      %v1141 = vpack.c.bf16 %v1128, %v1127
      %v1142 = vpack.c.bf16 %v1130, %v1129
      %v1143 = vpack.c.bf16 %v1132, %v1131
      %v1144 = vpack.c.bf16 %v1134, %v1133
      %v1145 = vpack.c.bf16 %v1136, %v1135
      %v1146 = vpack.c.bf16 %v1138, %v1137
      %v1147 = vld [vmem:[#allocation2] sm:$0xf]
      %v1148 = vld [vmem:[#allocation2 + $0x4] sm:$0xf]
      %v1149 = vld [vmem:[#allocation2 + $0x8] sm:$0xf]
      %v1150 = vld [vmem:[#allocation2 + $0xc] sm:$0xf]
      %v1151 = vld [vmem:[#allocation2 + $0x10] sm:$0xf]
      %v1152 = vld [vmem:[#allocation2 + $0x14] sm:$0xf]
      %v1159 = vunpack.c.l.b16 %v1147
      %v1160 = vunpack.c.l.b16 %v1148
      %v1161 = vunpack.c.l.b16 %v1149
      %v1162 = vunpack.c.l.b16 %v1150
      %v1163 = vunpack.c.l.b16 %v1151
      %v1164 = vunpack.c.l.b16 %v1152
      %v1165 = vpack.c.b16 %v1160, %v1159
      %v1166 = vpack.c.b16 %v1162, %v1161
      %v1167 = vpack.c.b16 %v1164, %v1163
      %vm1171 = vcmask 392192
      %v1173 = vsel %vm1171, %v1139, 0
      %v1176 = vsel %vm1171, %v1140, 0
      %v1179 = vsel %vm1171, %v1141, 0
      %v1182 = vsel %vm1171, %v1142, 0
      %v1185 = vsel %vm1171, %v1143, 0
      %v1188 = vsel %vm1171, %v1144, 0
      %v1191 = vsel %vm1171, %v1145, 0
      %v1194 = vsel %vm1171, %v1146, 0
      %1196 = vmatprep.subr.bf16.mxu0 0
      %1197 = vmatpush1.bf16.msra.mxu0 0
      %1198 = vmatprep.subr.bf16.mxu0 0
      %1199 = vmatpush1.bf16.msra.mxu0 0
      %1200 = vmatprep.subr.bf16.mxu0 0
      %1201 = vmatpush1.bf16.msra.mxu0 0
      %1202 = vmatprep.subr.bf16.mxu0 0
      %1203 = vmatpush1.bf16.msra.mxu0 0
      %1204 = vmatprep.subr.bf16.mxu0 0
      %1205 = vmatpush1.bf16.msra.mxu0 0
      %1206 = vmatprep.subr.bf16.mxu0 0
      %1207 = vmatpush1.bf16.msra.mxu0 %v1167
      %1208 = vmatprep.subr.bf16.mxu0 0
      %1209 = vmatpush1.bf16.msra.mxu0 %v1166
      %1210 = vmatprep.subr.bf16.mxu0 0
      %1211 = vmatpush1.bf16.msra.mxu0 %v1165
      %1212 = vmatprep.subr.bf16.mxu0 0
      %1213 = vmatpush2.bf16.msra.mxu0 0
      %1214 = vmatprep.subr.bf16.mxu0 0
      %1215 = vmatpush2.bf16.msra.mxu0 0
      %1216 = vmatprep.subr.bf16.mxu0 0
      %1217 = vmatpush2.bf16.msra.mxu0 0
      %1218 = vmatprep.subr.bf16.mxu0 0
      %1219 = vmatpush2.bf16.msra.mxu0 0
      %1220 = vmatprep.subr.bf16.mxu0 0
      %1221 = vmatpush2.bf16.msra.mxu0 0
      %1222 = vmatprep.subr.bf16.mxu0 0
      %1223 = vmatpush2.bf16.msra.mxu0 0
      %1224 = vmatprep.subr.bf16.mxu0 0
      %1225 = vmatpush2.bf16.msra.mxu0 0
      %1226 = vmatprep.subr.bf16.mxu0 0
      %1227 = vmatpush2.bf16.msra.mxu0 0
      %1228 = vmatprep.mubr.bf16.mxu0 0
      %1229 = vmatmul.mubr.bf16.gmra.mxu0 %v1173
      %v1230 = vpop.f32.mrf.mxu0
      %v1231 = vadd.f32 0.0, %v1230
      %v1232 = vpop.f32.mrf.mxu0
      %v1233 = vpop.f32.mrf.mxu0
      %v1234 = vadd.f32 0.0, %v1233
      %v1235 = vpop.f32.mrf.mxu0
      %1236 = vmatprep.mubr.bf16.mxu0 0
      %1237 = vmatmul.mubr.bf16.gmra.mxu0 %v1176
      %v1238 = vpop.f32.mrf.mxu0
      %v1239 = vadd.f32 0.0, %v1238
      %v1240 = vpop.f32.mrf.mxu0
      %v1241 = vpop.f32.mrf.mxu0
      %v1242 = vadd.f32 0.0, %v1241
      %v1243 = vpop.f32.mrf.mxu0
      %1244 = vmatprep.mubr.bf16.mxu0 0
      %1245 = vmatmul.mubr.bf16.gmra.mxu0 %v1179
      %v1246 = vpop.f32.mrf.mxu0
      %v1247 = vadd.f32 0.0, %v1246
      %v1248 = vpop.f32.mrf.mxu0
      %v1249 = vpop.f32.mrf.mxu0
      %v1250 = vadd.f32 0.0, %v1249
      %v1251 = vpop.f32.mrf.mxu0
      %1252 = vmatprep.mubr.bf16.mxu0 0
      %1253 = vmatmul.mubr.bf16.gmra.mxu0 %v1182
      %v1254 = vpop.f32.mrf.mxu0
      %v1255 = vadd.f32 0.0, %v1254
      %v1256 = vpop.f32.mrf.mxu0
      %v1257 = vpop.f32.mrf.mxu0
      %v1258 = vadd.f32 0.0, %v1257
      %v1259 = vpop.f32.mrf.mxu0
      %1260 = vmatprep.mubr.bf16.mxu0 0
      %1261 = vmatmul.mubr.bf16.gmra.mxu0 %v1185
      %v1262 = vpop.f32.mrf.mxu0
      %v1263 = vadd.f32 0.0, %v1262
      %v1264 = vpop.f32.mrf.mxu0
      %v1265 = vpop.f32.mrf.mxu0
      %v1266 = vadd.f32 0.0, %v1265
      %v1267 = vpop.f32.mrf.mxu0
      %1268 = vmatprep.mubr.bf16.mxu0 0
      %1269 = vmatmul.mubr.bf16.gmra.mxu0 %v1188
      %v1270 = vpop.f32.mrf.mxu0
      %v1271 = vadd.f32 0.0, %v1270
      %v1272 = vpop.f32.mrf.mxu0
      %v1273 = vpop.f32.mrf.mxu0
      %v1274 = vadd.f32 0.0, %v1273
      %v1275 = vpop.f32.mrf.mxu0
      %1276 = vmatprep.mubr.bf16.mxu0 0
      %1277 = vmatmul.mubr.bf16.gmra.mxu0 %v1191
      %v1278 = vpop.f32.mrf.mxu0
      %v1279 = vadd.f32 0.0, %v1278
      %v1280 = vpop.f32.mrf.mxu0
      %v1281 = vpop.f32.mrf.mxu0
      %v1282 = vadd.f32 0.0, %v1281
      %v1283 = vpop.f32.mrf.mxu0
      %1284 = vmatprep.mubr.bf16.mxu0 0
      %1285 = vmatmul.mubr.bf16.gmra.mxu0 %v1194
      %v1286 = vpop.f32.mrf.mxu0
      %v1287 = vadd.f32 0.0, %v1286
      %v1288 = vpop.f32.mrf.mxu0
      %v1289 = vpop.f32.mrf.mxu0
      %v1290 = vadd.f32 0.0, %v1289
      %v1291 = vpop.f32.mrf.mxu0
      %1292 = vdwg.mxu0
      %v1293 = vmul.f32 %v1231, %v1231
      %v1294 = vmul.f32 %v1234, %v1234
      %v1295 = vmul.f32 %v1239, %v1239
      %v1296 = vmul.f32 %v1242, %v1242
      %v1297 = vmul.f32 %v1247, %v1247
      %v1298 = vmul.f32 %v1250, %v1250
      %v1299 = vmul.f32 %v1255, %v1255
      %v1300 = vmul.f32 %v1258, %v1258
      %v1301 = vmul.f32 %v1263, %v1263
      %v1302 = vmul.f32 %v1266, %v1266
      %v1303 = vmul.f32 %v1271, %v1271
      %v1304 = vmul.f32 %v1274, %v1274
      %v1305 = vmul.f32 %v1279, %v1279
      %v1306 = vmul.f32 %v1282, %v1282
      %v1307 = vmul.f32 %v1287, %v1287
      %v1308 = vmul.f32 %v1290, %v1290
      %1325 = vrot.lane.b32.xlu0 %v1293, 96
      %v1326 = vpop.permute.xlu0 %1325
      %1327 = vrot.lane.b32.xlu0 %v1294, 96
      %v1328 = vpop.permute.xlu0 %1327
      %1329 = vrot.lane.b32.xlu0 %v1295, 96
      %v1330 = vpop.permute.xlu0 %1329
      %1331 = vrot.lane.b32.xlu0 %v1296, 96
      %v1332 = vpop.permute.xlu0 %1331
      %1333 = vrot.lane.b32.xlu0 %v1297, 96
      %v1334 = vpop.permute.xlu0 %1333
      %1335 = vrot.lane.b32.xlu0 %v1298, 96
      %v1336 = vpop.permute.xlu0 %1335
      %1337 = vrot.lane.b32.xlu0 %v1299, 96
      %v1338 = vpop.permute.xlu0 %1337
      %1339 = vrot.lane.b32.xlu0 %v1300, 96
      %v1340 = vpop.permute.xlu0 %1339
      %1341 = vrot.lane.b32.xlu0 %v1301, 96
      %v1342 = vpop.permute.xlu0 %1341
      %1343 = vrot.lane.b32.xlu0 %v1302, 96
      %v1344 = vpop.permute.xlu0 %1343
      %1345 = vrot.lane.b32.xlu0 %v1303, 96
      %v1346 = vpop.permute.xlu0 %1345
      %1347 = vrot.lane.b32.xlu0 %v1304, 96
      %v1348 = vpop.permute.xlu0 %1347
      %1349 = vrot.lane.b32.xlu0 %v1305, 96
      %v1350 = vpop.permute.xlu0 %1349
      %1351 = vrot.lane.b32.xlu0 %v1306, 96
      %v1352 = vpop.permute.xlu0 %1351
      %1353 = vrot.lane.b32.xlu0 %v1307, 96
      %v1354 = vpop.permute.xlu0 %1353
      %1355 = vrot.lane.b32.xlu0 %v1308, 96
      %v1356 = vpop.permute.xlu0 %1355
      %vm1373 = vcmask 23552
      %v1374 = vsel %vm1373, %v1326, 0.0
      %1375 = vadd.xlane.f32.xlu0 %v1374
      %v1376 = vpop.xlane.xlu0 %1375
      %v1377 = vsel %vm1373, %v1328, 0.0
      %1378 = vadd.xlane.f32.xlu0 %v1377
      %v1379 = vpop.xlane.xlu0 %1378
      %v1380 = vsel %vm1373, %v1330, 0.0
      %1381 = vadd.xlane.f32.xlu0 %v1380
      %v1382 = vpop.xlane.xlu0 %1381
      %v1383 = vsel %vm1373, %v1332, 0.0
      %1384 = vadd.xlane.f32.xlu0 %v1383
      %v1385 = vpop.xlane.xlu0 %1384
      %v1386 = vsel %vm1373, %v1334, 0.0
      %1387 = vadd.xlane.f32.xlu0 %v1386
      %v1388 = vpop.xlane.xlu0 %1387
      %v1389 = vsel %vm1373, %v1336, 0.0
      %1390 = vadd.xlane.f32.xlu0 %v1389
      %v1391 = vpop.xlane.xlu0 %1390
      %v1392 = vsel %vm1373, %v1338, 0.0
      %1393 = vadd.xlane.f32.xlu0 %v1392
      %v1394 = vpop.xlane.xlu0 %1393
      %v1395 = vsel %vm1373, %v1340, 0.0
      %1396 = vadd.xlane.f32.xlu0 %v1395
      %v1397 = vpop.xlane.xlu0 %1396
      %v1398 = vsel %vm1373, %v1342, 0.0
      %1399 = vadd.xlane.f32.xlu0 %v1398
      %v1400 = vpop.xlane.xlu0 %1399
      %v1401 = vsel %vm1373, %v1344, 0.0
      %1402 = vadd.xlane.f32.xlu0 %v1401
      %v1403 = vpop.xlane.xlu0 %1402
      %v1404 = vsel %vm1373, %v1346, 0.0
      %1405 = vadd.xlane.f32.xlu0 %v1404
      %v1406 = vpop.xlane.xlu0 %1405
      %v1407 = vsel %vm1373, %v1348, 0.0
      %1408 = vadd.xlane.f32.xlu0 %v1407
      %v1409 = vpop.xlane.xlu0 %1408
      %v1410 = vsel %vm1373, %v1350, 0.0
      %1411 = vadd.xlane.f32.xlu0 %v1410
      %v1412 = vpop.xlane.xlu0 %1411
      %v1413 = vsel %vm1373, %v1352, 0.0
      %1414 = vadd.xlane.f32.xlu0 %v1413
      %v1415 = vpop.xlane.xlu0 %1414
      %v1416 = vsel %vm1373, %v1354, 0.0
      %1417 = vadd.xlane.f32.xlu0 %v1416
      %v1418 = vpop.xlane.xlu0 %1417
      %v1419 = vsel %vm1373, %v1356, 0.0
      %1420 = vadd.xlane.f32.xlu0 %v1419
      %v1421 = vpop.xlane.xlu0 %1420
      %v1422 = vadd.f32 %v1376, 1e-08
      %v1423 = vadd.f32 %v1379, 1e-08
      %v1424 = vadd.f32 %v1382, 1e-08
      %v1425 = vadd.f32 %v1385, 1e-08
      %v1426 = vadd.f32 %v1388, 1e-08
      %v1427 = vadd.f32 %v1391, 1e-08
      %v1428 = vadd.f32 %v1394, 1e-08
      %v1429 = vadd.f32 %v1397, 1e-08
      %v1430 = vadd.f32 %v1400, 1e-08
      %v1431 = vadd.f32 %v1403, 1e-08
      %v1432 = vadd.f32 %v1406, 1e-08
      %v1433 = vadd.f32 %v1409, 1e-08
      %v1434 = vadd.f32 %v1412, 1e-08
      %v1435 = vadd.f32 %v1415, 1e-08
      %v1436 = vadd.f32 %v1418, 1e-08
      %v1437 = vadd.f32 %v1421, 1e-08
      %v1438 = vrsqrt.pop %v1422
      %v1439 = vmul.f32 %v1422, %v1438
      %vm1440 = vcmp.eq.f32.partialorder %v1422, inf
      %v1441 = vsel %vm1440, %v1422, %v1439
      %vm1442 = vcmp.eq.f32.partialorder %v1422, 0.0
      %v1443 = vand.u32 %v1422, 2147483648
      %v1444 = vsel %vm1442, %v1443, %v1441
      %v1445 = vrsqrt.pop %v1423
      %v1446 = vmul.f32 %v1423, %v1445
      %vm1447 = vcmp.eq.f32.partialorder %v1423, inf
      %v1448 = vsel %vm1447, %v1423, %v1446
      %vm1449 = vcmp.eq.f32.partialorder %v1423, 0.0
      %v1450 = vand.u32 %v1423, 2147483648
      %v1451 = vsel %vm1449, %v1450, %v1448
      %v1452 = vrsqrt.pop %v1424
      %v1453 = vmul.f32 %v1424, %v1452
      %vm1454 = vcmp.eq.f32.partialorder %v1424, inf
      %v1455 = vsel %vm1454, %v1424, %v1453
      %vm1456 = vcmp.eq.f32.partialorder %v1424, 0.0
      %v1457 = vand.u32 %v1424, 2147483648
      %v1458 = vsel %vm1456, %v1457, %v1455
      %v1459 = vrsqrt.pop %v1425
      %v1460 = vmul.f32 %v1425, %v1459
      %vm1461 = vcmp.eq.f32.partialorder %v1425, inf
      %v1462 = vsel %vm1461, %v1425, %v1460
      %vm1463 = vcmp.eq.f32.partialorder %v1425, 0.0
      %v1464 = vand.u32 %v1425, 2147483648
      %v1465 = vsel %vm1463, %v1464, %v1462
      %v1466 = vrsqrt.pop %v1426
      %v1467 = vmul.f32 %v1426, %v1466
      %vm1468 = vcmp.eq.f32.partialorder %v1426, inf
      %v1469 = vsel %vm1468, %v1426, %v1467
      %vm1470 = vcmp.eq.f32.partialorder %v1426, 0.0
      %v1471 = vand.u32 %v1426, 2147483648
      %v1472 = vsel %vm1470, %v1471, %v1469
      %v1473 = vrsqrt.pop %v1427
      %v1474 = vmul.f32 %v1427, %v1473
      %vm1475 = vcmp.eq.f32.partialorder %v1427, inf
      %v1476 = vsel %vm1475, %v1427, %v1474
      %vm1477 = vcmp.eq.f32.partialorder %v1427, 0.0
      %v1478 = vand.u32 %v1427, 2147483648
      %v1479 = vsel %vm1477, %v1478, %v1476
      %v1480 = vrsqrt.pop %v1428
      %v1481 = vmul.f32 %v1428, %v1480
      %vm1482 = vcmp.eq.f32.partialorder %v1428, inf
      %v1483 = vsel %vm1482, %v1428, %v1481
      %vm1484 = vcmp.eq.f32.partialorder %v1428, 0.0
      %v1485 = vand.u32 %v1428, 2147483648
      %v1486 = vsel %vm1484, %v1485, %v1483
      %v1487 = vrsqrt.pop %v1429
      %v1488 = vmul.f32 %v1429, %v1487
      %vm1489 = vcmp.eq.f32.partialorder %v1429, inf
      %v1490 = vsel %vm1489, %v1429, %v1488
      %vm1491 = vcmp.eq.f32.partialorder %v1429, 0.0
      %v1492 = vand.u32 %v1429, 2147483648
      %v1493 = vsel %vm1491, %v1492, %v1490
      %v1494 = vrsqrt.pop %v1430
      %v1495 = vmul.f32 %v1430, %v1494
      %vm1496 = vcmp.eq.f32.partialorder %v1430, inf
      %v1497 = vsel %vm1496, %v1430, %v1495
      %vm1498 = vcmp.eq.f32.partialorder %v1430, 0.0
      %v1499 = vand.u32 %v1430, 2147483648
      %v1500 = vsel %vm1498, %v1499, %v1497
      %v1501 = vrsqrt.pop %v1431
      %v1502 = vmul.f32 %v1431, %v1501
      %vm1503 = vcmp.eq.f32.partialorder %v1431, inf
      %v1504 = vsel %vm1503, %v1431, %v1502
      %vm1505 = vcmp.eq.f32.partialorder %v1431, 0.0
      %v1506 = vand.u32 %v1431, 2147483648
      %v1507 = vsel %vm1505, %v1506, %v1504
      %v1508 = vrsqrt.pop %v1432
      %v1509 = vmul.f32 %v1432, %v1508
      %vm1510 = vcmp.eq.f32.partialorder %v1432, inf
      %v1511 = vsel %vm1510, %v1432, %v1509
      %vm1512 = vcmp.eq.f32.partialorder %v1432, 0.0
      %v1513 = vand.u32 %v1432, 2147483648
      %v1514 = vsel %vm1512, %v1513, %v1511
      %v1515 = vrsqrt.pop %v1433
      %v1516 = vmul.f32 %v1433, %v1515
      %vm1517 = vcmp.eq.f32.partialorder %v1433, inf
      %v1518 = vsel %vm1517, %v1433, %v1516
      %vm1519 = vcmp.eq.f32.partialorder %v1433, 0.0
      %v1520 = vand.u32 %v1433, 2147483648
      %v1521 = vsel %vm1519, %v1520, %v1518
      %v1522 = vrsqrt.pop %v1434
      %v1523 = vmul.f32 %v1434, %v1522
      %vm1524 = vcmp.eq.f32.partialorder %v1434, inf
      %v1525 = vsel %vm1524, %v1434, %v1523
      %vm1526 = vcmp.eq.f32.partialorder %v1434, 0.0
      %v1527 = vand.u32 %v1434, 2147483648
      %v1528 = vsel %vm1526, %v1527, %v1525
      %v1529 = vrsqrt.pop %v1435
      %v1530 = vmul.f32 %v1435, %v1529
      %vm1531 = vcmp.eq.f32.partialorder %v1435, inf
      %v1532 = vsel %vm1531, %v1435, %v1530
      %vm1533 = vcmp.eq.f32.partialorder %v1435, 0.0
      %v1534 = vand.u32 %v1435, 2147483648
      %v1535 = vsel %vm1533, %v1534, %v1532
      %v1536 = vrsqrt.pop %v1436
      %v1537 = vmul.f32 %v1436, %v1536
      %vm1538 = vcmp.eq.f32.partialorder %v1436, inf
      %v1539 = vsel %vm1538, %v1436, %v1537
      %vm1540 = vcmp.eq.f32.partialorder %v1436, 0.0
      %v1541 = vand.u32 %v1436, 2147483648
      %v1542 = vsel %vm1540, %v1541, %v1539
      %v1543 = vrsqrt.pop %v1437
      %v1544 = vmul.f32 %v1437, %v1543
      %vm1545 = vcmp.eq.f32.partialorder %v1437, inf
      %v1546 = vsel %vm1545, %v1437, %v1544
      %vm1547 = vcmp.eq.f32.partialorder %v1437, 0.0
      %v1548 = vand.u32 %v1437, 2147483648
      %v1549 = vsel %vm1547, %v1548, %v1546
      %v1550 = vadd.f32 %v1444, 1.0
      %v1551 = vadd.f32 %v1451, 1.0
      %v1552 = vadd.f32 %v1458, 1.0
      %v1553 = vadd.f32 %v1465, 1.0
      %v1554 = vadd.f32 %v1472, 1.0
      %v1555 = vadd.f32 %v1479, 1.0
      %v1556 = vadd.f32 %v1486, 1.0
      %v1557 = vadd.f32 %v1493, 1.0
      %v1558 = vadd.f32 %v1500, 1.0
      %v1559 = vadd.f32 %v1507, 1.0
      %v1560 = vadd.f32 %v1514, 1.0
      %v1561 = vadd.f32 %v1521, 1.0
      %v1562 = vadd.f32 %v1528, 1.0
      %v1563 = vadd.f32 %v1535, 1.0
      %v1564 = vadd.f32 %v1542, 1.0
      %v1565 = vadd.f32 %v1549, 1.0
      %v1566 = vrcp.pop %v1550
      %v1567 = vrcp.pop %v1551
      %v1568 = vrcp.pop %v1552
      %v1569 = vrcp.pop %v1553
      %v1570 = vrcp.pop %v1554
      %v1571 = vrcp.pop %v1555
      %v1572 = vrcp.pop %v1556
      %v1573 = vrcp.pop %v1557
      %v1574 = vrcp.pop %v1558
      %v1575 = vrcp.pop %v1559
      %v1576 = vrcp.pop %v1560
      %v1577 = vrcp.pop %v1561
      %v1578 = vrcp.pop %v1562
      %v1579 = vrcp.pop %v1563
      %v1580 = vrcp.pop %v1564
      %v1581 = vrcp.pop %v1565
      %v1582 = vmul.f32 %v1231, %v1566
      %v1583 = vmul.f32 %v1234, %v1567
      %v1584 = vmul.f32 %v1239, %v1568
      %v1585 = vmul.f32 %v1242, %v1569
      %v1586 = vmul.f32 %v1247, %v1570
      %v1587 = vmul.f32 %v1250, %v1571
      %v1588 = vmul.f32 %v1255, %v1572
      %v1589 = vmul.f32 %v1258, %v1573
      %v1590 = vmul.f32 %v1263, %v1574
      %v1591 = vmul.f32 %v1266, %v1575
      %v1592 = vmul.f32 %v1271, %v1576
      %v1593 = vmul.f32 %v1274, %v1577
      %v1594 = vmul.f32 %v1279, %v1578
      %v1595 = vmul.f32 %v1282, %v1579
      %v1596 = vmul.f32 %v1287, %v1580
      %v1597 = vmul.f32 %v1290, %v1581
      %v1598 = vld [vmem:[%s7] sm:$0x1]
      %v1600 = vlaneseq
      %v1601 = vshrl.u32 %v1600, 7
      %v1602 = vsub.s32 0, %v1601
      %v1603 = vrot.slane %v1598, %v1602
      %v1605 = vmul.f32 %v1376, %v1603
      %v1606 = vmul.f32 %v1379, %v1603
      %v1607 = vmul.f32 %v1382, %v1603
      %v1608 = vmul.f32 %v1385, %v1603
      %v1609 = vmul.f32 %v1388, %v1603
      %v1610 = vmul.f32 %v1391, %v1603
      %v1611 = vmul.f32 %v1394, %v1603
      %v1612 = vmul.f32 %v1397, %v1603
      %v1613 = vmul.f32 %v1400, %v1603
      %v1614 = vmul.f32 %v1403, %v1603
      %v1615 = vmul.f32 %v1406, %v1603
      %v1616 = vmul.f32 %v1409, %v1603
      %v1617 = vmul.f32 %v1412, %v1603
      %v1618 = vmul.f32 %v1415, %v1603
      %v1619 = vmul.f32 %v1418, %v1603
      %v1620 = vmul.f32 %v1421, %v1603
      %v1621 = vadd.f32 %v1231, %v1605
      %v1622 = vadd.f32 %v1234, %v1606
      %v1623 = vadd.f32 %v1239, %v1607
      %v1624 = vadd.f32 %v1242, %v1608
      %v1625 = vadd.f32 %v1247, %v1609
      %v1626 = vadd.f32 %v1250, %v1610
      %v1627 = vadd.f32 %v1255, %v1611
      %v1628 = vadd.f32 %v1258, %v1612
      %v1629 = vadd.f32 %v1263, %v1613
      %v1630 = vadd.f32 %v1266, %v1614
      %v1631 = vadd.f32 %v1271, %v1615
      %v1632 = vadd.f32 %v1274, %v1616
      %v1633 = vadd.f32 %v1279, %v1617
      %v1634 = vadd.f32 %v1282, %v1618
      %v1635 = vadd.f32 %v1287, %v1619
      %v1636 = vadd.f32 %v1290, %v1620
      %v1637 = vld [vmem:[%s8] sm:$0x1]
      %v1639 = vlaneseq
      %v1640 = vshrl.u32 %v1639, 7
      %v1641 = vsub.s32 0, %v1640
      %v1642 = vrot.slane %v1637, %v1641
      %v1644 = vadd.f32 %v1621, %v1642
      %v1645 = vadd.f32 %v1622, %v1642
      %v1646 = vadd.f32 %v1623, %v1642
      %v1647 = vadd.f32 %v1624, %v1642
      %v1648 = vadd.f32 %v1625, %v1642
      %v1649 = vadd.f32 %v1626, %v1642
      %v1650 = vadd.f32 %v1627, %v1642
      %v1651 = vadd.f32 %v1628, %v1642
      %v1652 = vadd.f32 %v1629, %v1642
      %v1653 = vadd.f32 %v1630, %v1642
      %v1654 = vadd.f32 %v1631, %v1642
      %v1655 = vadd.f32 %v1632, %v1642
      %v1656 = vadd.f32 %v1633, %v1642
      %v1657 = vadd.f32 %v1634, %v1642
      %v1658 = vadd.f32 %v1635, %v1642
      %v1659 = vadd.f32 %v1636, %v1642
      %v1660 = vxor.u32 %v1644, 2147483648
      %v1661 = vxor.u32 %v1645, 2147483648
      %v1662 = vxor.u32 %v1646, 2147483648
      %v1663 = vxor.u32 %v1647, 2147483648
      %v1664 = vxor.u32 %v1648, 2147483648
      %v1665 = vxor.u32 %v1649, 2147483648
      %v1666 = vxor.u32 %v1650, 2147483648
      %v1667 = vxor.u32 %v1651, 2147483648
      %v1668 = vxor.u32 %v1652, 2147483648
      %v1669 = vxor.u32 %v1653, 2147483648
      %v1670 = vxor.u32 %v1654, 2147483648
      %v1671 = vxor.u32 %v1655, 2147483648
      %v1672 = vxor.u32 %v1656, 2147483648
      %v1673 = vxor.u32 %v1657, 2147483648
      %v1674 = vxor.u32 %v1658, 2147483648
      %v1675 = vxor.u32 %v1659, 2147483648
      %v1676 = vmul.f32 %v1660, 1.442695
      %v1677 = vpow.pop %v1676
      %v1678 = vmul.f32 %v1661, 1.442695
      %v1679 = vpow.pop %v1678
      %v1680 = vmul.f32 %v1662, 1.442695
      %v1681 = vpow.pop %v1680
      %v1682 = vmul.f32 %v1663, 1.442695
      %v1683 = vpow.pop %v1682
      %v1684 = vmul.f32 %v1664, 1.442695
      %v1685 = vpow.pop %v1684
      %v1686 = vmul.f32 %v1665, 1.442695
      %v1687 = vpow.pop %v1686
      %v1688 = vmul.f32 %v1666, 1.442695
      %v1689 = vpow.pop %v1688
      %v1690 = vmul.f32 %v1667, 1.442695
      %v1691 = vpow.pop %v1690
      %v1692 = vmul.f32 %v1668, 1.442695
      %v1693 = vpow.pop %v1692
      %v1694 = vmul.f32 %v1669, 1.442695
      %v1695 = vpow.pop %v1694
      %v1696 = vmul.f32 %v1670, 1.442695
      %v1697 = vpow.pop %v1696
      %v1698 = vmul.f32 %v1671, 1.442695
      %v1699 = vpow.pop %v1698
      %v1700 = vmul.f32 %v1672, 1.442695
      %v1701 = vpow.pop %v1700
      %v1702 = vmul.f32 %v1673, 1.442695
      %v1703 = vpow.pop %v1702
      %v1704 = vmul.f32 %v1674, 1.442695
      %v1705 = vpow.pop %v1704
      %v1706 = vmul.f32 %v1675, 1.442695
      %v1707 = vpow.pop %v1706
      %v1708 = vadd.f32 %v1677, 1.0
      %v1709 = vadd.f32 %v1679, 1.0
      %v1710 = vadd.f32 %v1681, 1.0
      %v1711 = vadd.f32 %v1683, 1.0
      %v1712 = vadd.f32 %v1685, 1.0
      %v1713 = vadd.f32 %v1687, 1.0
      %v1714 = vadd.f32 %v1689, 1.0
      %v1715 = vadd.f32 %v1691, 1.0
      %v1716 = vadd.f32 %v1693, 1.0
      %v1717 = vadd.f32 %v1695, 1.0
      %v1718 = vadd.f32 %v1697, 1.0
      %v1719 = vadd.f32 %v1699, 1.0
      %v1720 = vadd.f32 %v1701, 1.0
      %v1721 = vadd.f32 %v1703, 1.0
      %v1722 = vadd.f32 %v1705, 1.0
      %v1723 = vadd.f32 %v1707, 1.0
      %v1724 = vrcp.pop %v1708
      %v1725 = vmul.f32 1.0, %v1724
      %v1726 = vrcp.pop %v1709
      %v1727 = vmul.f32 1.0, %v1726
      %v1728 = vrcp.pop %v1710
      %v1729 = vmul.f32 1.0, %v1728
      %v1730 = vrcp.pop %v1711
      %v1731 = vmul.f32 1.0, %v1730
      %v1732 = vrcp.pop %v1712
      %v1733 = vmul.f32 1.0, %v1732
      %v1734 = vrcp.pop %v1713
      %v1735 = vmul.f32 1.0, %v1734
      %v1736 = vrcp.pop %v1714
      %v1737 = vmul.f32 1.0, %v1736
      %v1738 = vrcp.pop %v1715
      %v1739 = vmul.f32 1.0, %v1738
      %v1740 = vrcp.pop %v1716
      %v1741 = vmul.f32 1.0, %v1740
      %v1742 = vrcp.pop %v1717
      %v1743 = vmul.f32 1.0, %v1742
      %v1744 = vrcp.pop %v1718
      %v1745 = vmul.f32 1.0, %v1744
      %v1746 = vrcp.pop %v1719
      %v1747 = vmul.f32 1.0, %v1746
      %v1748 = vrcp.pop %v1720
      %v1749 = vmul.f32 1.0, %v1748
      %v1750 = vrcp.pop %v1721
      %v1751 = vmul.f32 1.0, %v1750
      %v1752 = vrcp.pop %v1722
      %v1753 = vmul.f32 1.0, %v1752
      %v1754 = vrcp.pop %v1723
      %v1755 = vmul.f32 1.0, %v1754
      %v1756 = vmul.f32 %v1644, %v1725
      %v1757 = vmul.f32 %v1645, %v1727
      %v1758 = vmul.f32 %v1646, %v1729
      %v1759 = vmul.f32 %v1647, %v1731
      %v1760 = vmul.f32 %v1648, %v1733
      %v1761 = vmul.f32 %v1649, %v1735
      %v1762 = vmul.f32 %v1650, %v1737
      %v1763 = vmul.f32 %v1651, %v1739
      %v1764 = vmul.f32 %v1652, %v1741
      %v1765 = vmul.f32 %v1653, %v1743
      %v1766 = vmul.f32 %v1654, %v1745
      %v1767 = vmul.f32 %v1655, %v1747
      %v1768 = vmul.f32 %v1656, %v1749
      %v1769 = vmul.f32 %v1657, %v1751
      %v1770 = vmul.f32 %v1658, %v1753
      %v1771 = vmul.f32 %v1659, %v1755
      %v1772 = vld [vmem:[%s9] sm:$0xff]
      %v1773 = vld [vmem:[%s9 + $0x8] sm:$0xff]
      %v1774 = vld [vmem:[%s9 + $0x10] sm:$0xff]
      %v1775 = vld [vmem:[%s9 + $0x18] sm:$0xff]
      %v1776 = vld [vmem:[%s10] sm:$0x1]
      %v1778 = vlaneseq
      %v1779 = vshrl.u32 %v1778, 7
      %v1780 = vsub.s32 0, %v1779
      %v1781 = vrot.slane %v1776, %v1780
      %vm1783 = vcmask 261120
      %v1785 = vsel %vm1783, %v1756, 0
      %v1788 = vsel %vm1783, %v1757, 0
      %v1791 = vsel %vm1783, %v1758, 0
      %v1794 = vsel %vm1783, %v1759, 0
      %v1797 = vsel %vm1783, %v1760, 0
      %v1800 = vsel %vm1783, %v1761, 0
      %v1803 = vsel %vm1783, %v1762, 0
      %v1806 = vsel %vm1783, %v1763, 0
      %v1809 = vsel %vm1783, %v1764, 0
      %v1812 = vsel %vm1783, %v1765, 0
      %v1815 = vsel %vm1783, %v1766, 0
      %v1818 = vsel %vm1783, %v1767, 0
      %v1821 = vsel %vm1783, %v1768, 0
      %v1824 = vsel %vm1783, %v1769, 0
      %v1827 = vsel %vm1783, %v1770, 0
      %v1830 = vsel %vm1783, %v1771, 0
      %1832 = vmatprep.subr.mxu0 0.0
      %1833 = vmatpush1.msra.mxu0 0.0
      %1834 = vmatprep.subr.mxu0 0.0
      %1835 = vmatpush1.msra.mxu0 0.0
      %1836 = vmatprep.subr.mxu0 0.0
      %1837 = vmatpush1.msra.mxu0 0.0
      %1838 = vmatprep.subr.mxu0 0.0
      %1839 = vmatpush1.msra.mxu0 0.0
      %1840 = vmatprep.subr.mxu0 0.0
      %1841 = vmatpush1.msra.mxu0 0.0
      %1842 = vmatprep.subr.mxu0 0.0
      %1843 = vmatpush1.msra.mxu0 0.0
      %1844 = vmatprep.subr.mxu0 0.0
      %1845 = vmatpush1.msra.mxu0 0.0
      %1846 = vmatprep.subr.mxu0 0.0
      %1847 = vmatpush1.msra.mxu0 0.0
      %1848 = vmatprep.subr.mxu0 0.0
      %1849 = vmatpush1.msra.mxu0 0.0
      %1850 = vmatprep.subr.mxu0 0.0
      %1851 = vmatpush1.msra.mxu0 0.0
      %1852 = vmatprep.subr.mxu0 0.0
      %1853 = vmatpush1.msra.mxu0 0.0
      %1854 = vmatprep.subr.mxu0 0.0
      %1855 = vmatpush1.msra.mxu0 0.0
      %1856 = vmatprep.subr.mxu0 0.0
      %1857 = vmatpush1.msra.mxu0 %v1775
      %1858 = vmatprep.subr.mxu0 0.0
      %1859 = vmatpush1.msra.mxu0 %v1774
      %1860 = vmatprep.subr.mxu0 0.0
      %1861 = vmatpush1.msra.mxu0 %v1773
      %1862 = vmatprep.subr.mxu0 0.0
      %1863 = vmatpush1.msra.mxu0 %v1772
      %1864 = vmatprep.subr.mxu0 0.0
      %1865 = vmatpush2.msra.mxu0 0.0
      %1866 = vmatprep.subr.mxu0 0.0
      %1867 = vmatpush2.msra.mxu0 0.0
      %1868 = vmatprep.subr.mxu0 0.0
      %1869 = vmatpush2.msra.mxu0 0.0
      %1870 = vmatprep.subr.mxu0 0.0
      %1871 = vmatpush2.msra.mxu0 0.0
      %1872 = vmatprep.subr.mxu0 0.0
      %1873 = vmatpush2.msra.mxu0 0.0
      %1874 = vmatprep.subr.mxu0 0.0
      %1875 = vmatpush2.msra.mxu0 0.0
      %1876 = vmatprep.subr.mxu0 0.0
      %1877 = vmatpush2.msra.mxu0 0.0
      %1878 = vmatprep.subr.mxu0 0.0
      %1879 = vmatpush2.msra.mxu0 0.0
      %1880 = vmatprep.subr.mxu0 0.0
      %1881 = vmatpush2.msra.mxu0 0.0
      %1882 = vmatprep.subr.mxu0 0.0
      %1883 = vmatpush2.msra.mxu0 0.0
      %1884 = vmatprep.subr.mxu0 0.0
      %1885 = vmatpush2.msra.mxu0 0.0
      %1886 = vmatprep.subr.mxu0 0.0
      %1887 = vmatpush2.msra.mxu0 0.0
      %1888 = vmatprep.subr.mxu0 0.0
      %1889 = vmatpush2.msra.mxu0 0.0
      %1890 = vmatprep.subr.mxu0 0.0
      %1891 = vmatpush2.msra.mxu0 0.0
      %1892 = vmatprep.subr.mxu0 0.0
      %1893 = vmatpush2.msra.mxu0 0.0
      %1894 = vmatprep.subr.mxu0 0.0
      %1895 = vmatpush2.msra.mxu0 0.0
      %1896 = vmatprep.mubr.f32.mxu0 0.0
      %1897 = vmatmul.mubr.f32.gmra.mxu0 %v1785
      %v1898 = vpop.f32.mrf.mxu0
      %v1899 = vadd.f32 %v1781, %v1898
      %v1900 = vpop.f32.mrf.mxu0
      %1901 = vmatprep.mubr.f32.mxu0 0.0
      %1902 = vmatmul.mubr.f32.gmra.mxu0 %v1788
      %v1903 = vpop.f32.mrf.mxu0
      %v1904 = vadd.f32 %v1781, %v1903
      %v1905 = vpop.f32.mrf.mxu0
      %1906 = vmatprep.mubr.f32.mxu0 0.0
      %1907 = vmatmul.mubr.f32.gmra.mxu0 %v1791
      %v1908 = vpop.f32.mrf.mxu0
      %v1909 = vadd.f32 %v1781, %v1908
      %v1910 = vpop.f32.mrf.mxu0
      %1911 = vmatprep.mubr.f32.mxu0 0.0
      %1912 = vmatmul.mubr.f32.gmra.mxu0 %v1794
      %v1913 = vpop.f32.mrf.mxu0
      %v1914 = vadd.f32 %v1781, %v1913
      %v1915 = vpop.f32.mrf.mxu0
      %1916 = vmatprep.mubr.f32.mxu0 0.0
      %1917 = vmatmul.mubr.f32.gmra.mxu0 %v1797
      %v1918 = vpop.f32.mrf.mxu0
      %v1919 = vadd.f32 %v1781, %v1918
      %v1920 = vpop.f32.mrf.mxu0
      %1921 = vmatprep.mubr.f32.mxu0 0.0
      %1922 = vmatmul.mubr.f32.gmra.mxu0 %v1800
      %v1923 = vpop.f32.mrf.mxu0
      %v1924 = vadd.f32 %v1781, %v1923
      %v1925 = vpop.f32.mrf.mxu0
      %1926 = vmatprep.mubr.f32.mxu0 0.0
      %1927 = vmatmul.mubr.f32.gmra.mxu0 %v1803
      %v1928 = vpop.f32.mrf.mxu0
      %v1929 = vadd.f32 %v1781, %v1928
      %v1930 = vpop.f32.mrf.mxu0
      %1931 = vmatprep.mubr.f32.mxu0 0.0
      %1932 = vmatmul.mubr.f32.gmra.mxu0 %v1806
      %v1933 = vpop.f32.mrf.mxu0
      %v1934 = vadd.f32 %v1781, %v1933
      %v1935 = vpop.f32.mrf.mxu0
      %1936 = vmatprep.mubr.f32.mxu0 0.0
      %1937 = vmatmul.mubr.f32.gmra.mxu0 %v1809
      %v1938 = vpop.f32.mrf.mxu0
      %v1939 = vadd.f32 %v1781, %v1938
      %v1940 = vpop.f32.mrf.mxu0
      %1941 = vmatprep.mubr.f32.mxu0 0.0
      %1942 = vmatmul.mubr.f32.gmra.mxu0 %v1812
      %v1943 = vpop.f32.mrf.mxu0
      %v1944 = vadd.f32 %v1781, %v1943
      %v1945 = vpop.f32.mrf.mxu0
      %1946 = vmatprep.mubr.f32.mxu0 0.0
      %1947 = vmatmul.mubr.f32.gmra.mxu0 %v1815
      %v1948 = vpop.f32.mrf.mxu0
      %v1949 = vadd.f32 %v1781, %v1948
      %v1950 = vpop.f32.mrf.mxu0
      %1951 = vmatprep.mubr.f32.mxu0 0.0
      %1952 = vmatmul.mubr.f32.gmra.mxu0 %v1818
      %v1953 = vpop.f32.mrf.mxu0
      %v1954 = vadd.f32 %v1781, %v1953
      %v1955 = vpop.f32.mrf.mxu0
      %1956 = vmatprep.mubr.f32.mxu0 0.0
      %1957 = vmatmul.mubr.f32.gmra.mxu0 %v1821
      %v1958 = vpop.f32.mrf.mxu0
      %v1959 = vadd.f32 %v1781, %v1958
      %v1960 = vpop.f32.mrf.mxu0
      %1961 = vmatprep.mubr.f32.mxu0 0.0
      %1962 = vmatmul.mubr.f32.gmra.mxu0 %v1824
      %v1963 = vpop.f32.mrf.mxu0
      %v1964 = vadd.f32 %v1781, %v1963
      %v1965 = vpop.f32.mrf.mxu0
      %1966 = vmatprep.mubr.f32.mxu0 0.0
      %1967 = vmatmul.mubr.f32.gmra.mxu0 %v1827
      %v1968 = vpop.f32.mrf.mxu0
      %v1969 = vadd.f32 %v1781, %v1968
      %v1970 = vpop.f32.mrf.mxu0
      %1971 = vmatprep.mubr.f32.mxu0 0.0
      %1972 = vmatmul.mubr.f32.gmra.mxu0 %v1830
      %v1973 = vpop.f32.mrf.mxu0
      %v1974 = vadd.f32 %v1781, %v1973
      %v1975 = vpop.f32.mrf.mxu0
      %1976 = vdwg.mxu0
      %v1977 = vxor.u32 %v1899, 2147483648
      %v1978 = vxor.u32 %v1904, 2147483648
      %v1979 = vxor.u32 %v1909, 2147483648
      %v1980 = vxor.u32 %v1914, 2147483648
      %v1981 = vxor.u32 %v1919, 2147483648
      %v1982 = vxor.u32 %v1924, 2147483648
      %v1983 = vxor.u32 %v1929, 2147483648
      %v1984 = vxor.u32 %v1934, 2147483648
      %v1985 = vxor.u32 %v1939, 2147483648
      %v1986 = vxor.u32 %v1944, 2147483648
      %v1987 = vxor.u32 %v1949, 2147483648
      %v1988 = vxor.u32 %v1954, 2147483648
      %v1989 = vxor.u32 %v1959, 2147483648
      %v1990 = vxor.u32 %v1964, 2147483648
      %v1991 = vxor.u32 %v1969, 2147483648
      %v1992 = vxor.u32 %v1974, 2147483648
      %v1993 = vmul.f32 %v1977, 1.442695
      %v1994 = vpow.pop %v1993
      %v1995 = vmul.f32 %v1978, 1.442695
      %v1996 = vpow.pop %v1995
      %v1997 = vmul.f32 %v1979, 1.442695
      %v1998 = vpow.pop %v1997
      %v1999 = vmul.f32 %v1980, 1.442695
      %v2000 = vpow.pop %v1999
      %v2001 = vmul.f32 %v1981, 1.442695
      %v2002 = vpow.pop %v2001
      %v2003 = vmul.f32 %v1982, 1.442695
      %v2004 = vpow.pop %v2003
      %v2005 = vmul.f32 %v1983, 1.442695
      %v2006 = vpow.pop %v2005
      %v2007 = vmul.f32 %v1984, 1.442695
      %v2008 = vpow.pop %v2007
      %v2009 = vmul.f32 %v1985, 1.442695
      %v2010 = vpow.pop %v2009
      %v2011 = vmul.f32 %v1986, 1.442695
      %v2012 = vpow.pop %v2011
      %v2013 = vmul.f32 %v1987, 1.442695
      %v2014 = vpow.pop %v2013
      %v2015 = vmul.f32 %v1988, 1.442695
      %v2016 = vpow.pop %v2015
      %v2017 = vmul.f32 %v1989, 1.442695
      %v2018 = vpow.pop %v2017
      %v2019 = vmul.f32 %v1990, 1.442695
      %v2020 = vpow.pop %v2019
      %v2021 = vmul.f32 %v1991, 1.442695
      %v2022 = vpow.pop %v2021
      %v2023 = vmul.f32 %v1992, 1.442695
      %v2024 = vpow.pop %v2023
      %v2025 = vadd.f32 %v1994, 1.0
      %v2026 = vadd.f32 %v1996, 1.0
      %v2027 = vadd.f32 %v1998, 1.0
      %v2028 = vadd.f32 %v2000, 1.0
      %v2029 = vadd.f32 %v2002, 1.0
      %v2030 = vadd.f32 %v2004, 1.0
      %v2031 = vadd.f32 %v2006, 1.0
      %v2032 = vadd.f32 %v2008, 1.0
      %v2033 = vadd.f32 %v2010, 1.0
      %v2034 = vadd.f32 %v2012, 1.0
      %v2035 = vadd.f32 %v2014, 1.0
      %v2036 = vadd.f32 %v2016, 1.0
      %v2037 = vadd.f32 %v2018, 1.0
      %v2038 = vadd.f32 %v2020, 1.0
      %v2039 = vadd.f32 %v2022, 1.0
      %v2040 = vadd.f32 %v2024, 1.0
      %v2041 = vrcp.pop %v2025
      %v2042 = vmul.f32 1.0, %v2041
      %v2043 = vrcp.pop %v2026
      %v2044 = vmul.f32 1.0, %v2043
      %v2045 = vrcp.pop %v2027
      %v2046 = vmul.f32 1.0, %v2045
      %v2047 = vrcp.pop %v2028
      %v2048 = vmul.f32 1.0, %v2047
      %v2049 = vrcp.pop %v2029
      %v2050 = vmul.f32 1.0, %v2049
      %v2051 = vrcp.pop %v2030
      %v2052 = vmul.f32 1.0, %v2051
      %v2053 = vrcp.pop %v2031
      %v2054 = vmul.f32 1.0, %v2053
      %v2055 = vrcp.pop %v2032
      %v2056 = vmul.f32 1.0, %v2055
      %v2057 = vrcp.pop %v2033
      %v2058 = vmul.f32 1.0, %v2057
      %v2059 = vrcp.pop %v2034
      %v2060 = vmul.f32 1.0, %v2059
      %v2061 = vrcp.pop %v2035
      %v2062 = vmul.f32 1.0, %v2061
      %v2063 = vrcp.pop %v2036
      %v2064 = vmul.f32 1.0, %v2063
      %v2065 = vrcp.pop %v2037
      %v2066 = vmul.f32 1.0, %v2065
      %v2067 = vrcp.pop %v2038
      %v2068 = vmul.f32 1.0, %v2067
      %v2069 = vrcp.pop %v2039
      %v2070 = vmul.f32 1.0, %v2069
      %v2071 = vrcp.pop %v2040
      %v2072 = vmul.f32 1.0, %v2071
      %v2073 = vmul.f32 %v1899, %v2042
      %v2074 = vmul.f32 %v1904, %v2044
      %v2075 = vmul.f32 %v1909, %v2046
      %v2076 = vmul.f32 %v1914, %v2048
      %v2077 = vmul.f32 %v1919, %v2050
      %v2078 = vmul.f32 %v1924, %v2052
      %v2079 = vmul.f32 %v1929, %v2054
      %v2080 = vmul.f32 %v1934, %v2056
      %v2081 = vmul.f32 %v1939, %v2058
      %v2082 = vmul.f32 %v1944, %v2060
      %v2083 = vmul.f32 %v1949, %v2062
      %v2084 = vmul.f32 %v1954, %v2064
      %v2085 = vmul.f32 %v1959, %v2066
      %v2086 = vmul.f32 %v1964, %v2068
      %v2087 = vmul.f32 %v1969, %v2070
      %v2088 = vmul.f32 %v1974, %v2072
      %v2089 = vld [vmem:[%s11] sm:$0xff]
      %v2090 = vld [vmem:[%s11 + $0x8] sm:$0xff]
      %v2091 = vld [vmem:[%s11 + $0x10] sm:$0xff]
      %v2092 = vld [vmem:[%s11 + $0x18] sm:$0xff]
      %v2093 = vld [vmem:[%s12] sm:$0x1]
      %v2095 = vlaneseq
      %v2096 = vshrl.u32 %v2095, 7
      %v2097 = vsub.s32 0, %v2096
      %v2098 = vrot.slane %v2093, %v2097
      %v2101 = vsel %vm1783, %v2073, 0
      %v2104 = vsel %vm1783, %v2074, 0
      %v2107 = vsel %vm1783, %v2075, 0
      %v2110 = vsel %vm1783, %v2076, 0
      %v2113 = vsel %vm1783, %v2077, 0
      %v2116 = vsel %vm1783, %v2078, 0
      %v2119 = vsel %vm1783, %v2079, 0
      %v2122 = vsel %vm1783, %v2080, 0
      %v2125 = vsel %vm1783, %v2081, 0
      %v2128 = vsel %vm1783, %v2082, 0
      %v2131 = vsel %vm1783, %v2083, 0
      %v2134 = vsel %vm1783, %v2084, 0
      %v2137 = vsel %vm1783, %v2085, 0
      %v2140 = vsel %vm1783, %v2086, 0
      %v2143 = vsel %vm1783, %v2087, 0
      %v2146 = vsel %vm1783, %v2088, 0
      %2148 = vmatprep.subr.mxu0 0.0
      %2149 = vmatpush1.msra.mxu0 0.0
      %2150 = vmatprep.subr.mxu0 0.0
      %2151 = vmatpush1.msra.mxu0 0.0
      %2152 = vmatprep.subr.mxu0 0.0
      %2153 = vmatpush1.msra.mxu0 0.0
      %2154 = vmatprep.subr.mxu0 0.0
      %2155 = vmatpush1.msra.mxu0 0.0
      %2156 = vmatprep.subr.mxu0 0.0
      %2157 = vmatpush1.msra.mxu0 0.0
      %2158 = vmatprep.subr.mxu0 0.0
      %2159 = vmatpush1.msra.mxu0 0.0
      %2160 = vmatprep.subr.mxu0 0.0
      %2161 = vmatpush1.msra.mxu0 0.0
      %2162 = vmatprep.subr.mxu0 0.0
      %2163 = vmatpush1.msra.mxu0 0.0
      %2164 = vmatprep.subr.mxu0 0.0
      %2165 = vmatpush1.msra.mxu0 0.0
      %2166 = vmatprep.subr.mxu0 0.0
      %2167 = vmatpush1.msra.mxu0 0.0
      %2168 = vmatprep.subr.mxu0 0.0
      %2169 = vmatpush1.msra.mxu0 0.0
      %2170 = vmatprep.subr.mxu0 0.0
      %2171 = vmatpush1.msra.mxu0 0.0
      %2172 = vmatprep.subr.mxu0 0.0
      %2173 = vmatpush1.msra.mxu0 %v2092
      %2174 = vmatprep.subr.mxu0 0.0
      %2175 = vmatpush1.msra.mxu0 %v2091
      %2176 = vmatprep.subr.mxu0 0.0
      %2177 = vmatpush1.msra.mxu0 %v2090
      %2178 = vmatprep.subr.mxu0 0.0
      %2179 = vmatpush1.msra.mxu0 %v2089
      %2180 = vmatprep.subr.mxu0 0.0
      %2181 = vmatpush2.msra.mxu0 0.0
      %2182 = vmatprep.subr.mxu0 0.0
      %2183 = vmatpush2.msra.mxu0 0.0
      %2184 = vmatprep.subr.mxu0 0.0
      %2185 = vmatpush2.msra.mxu0 0.0
      %2186 = vmatprep.subr.mxu0 0.0
      %2187 = vmatpush2.msra.mxu0 0.0
      %2188 = vmatprep.subr.mxu0 0.0
      %2189 = vmatpush2.msra.mxu0 0.0
      %2190 = vmatprep.subr.mxu0 0.0
      %2191 = vmatpush2.msra.mxu0 0.0
      %2192 = vmatprep.subr.mxu0 0.0
      %2193 = vmatpush2.msra.mxu0 0.0
      %2194 = vmatprep.subr.mxu0 0.0
      %2195 = vmatpush2.msra.mxu0 0.0
      %2196 = vmatprep.subr.mxu0 0.0
      %2197 = vmatpush2.msra.mxu0 0.0
      %2198 = vmatprep.subr.mxu0 0.0
      %2199 = vmatpush2.msra.mxu0 0.0
      %2200 = vmatprep.subr.mxu0 0.0
      %2201 = vmatpush2.msra.mxu0 0.0
      %2202 = vmatprep.subr.mxu0 0.0
      %2203 = vmatpush2.msra.mxu0 0.0
      %2204 = vmatprep.subr.mxu0 0.0
      %2205 = vmatpush2.msra.mxu0 0.0
      %2206 = vmatprep.subr.mxu0 0.0
      %2207 = vmatpush2.msra.mxu0 0.0
      %2208 = vmatprep.subr.mxu0 0.0
      %2209 = vmatpush2.msra.mxu0 0.0
      %2210 = vmatprep.subr.mxu0 0.0
      %2211 = vmatpush2.msra.mxu0 0.0
      %2212 = vmatprep.mubr.f32.mxu0 0.0
      %2213 = vmatmul.mubr.f32.gmra.mxu0 %v2101
      %v2214 = vpop.f32.mrf.mxu0
      %v2215 = vadd.f32 %v2098, %v2214
      %v2216 = vpop.f32.mrf.mxu0
      %2217 = vmatprep.mubr.f32.mxu0 0.0
      %2218 = vmatmul.mubr.f32.gmra.mxu0 %v2104
      %v2219 = vpop.f32.mrf.mxu0
      %v2220 = vadd.f32 %v2098, %v2219
      %v2221 = vpop.f32.mrf.mxu0
      %2222 = vmatprep.mubr.f32.mxu0 0.0
      %2223 = vmatmul.mubr.f32.gmra.mxu0 %v2107
      %v2224 = vpop.f32.mrf.mxu0
      %v2225 = vadd.f32 %v2098, %v2224
      %v2226 = vpop.f32.mrf.mxu0
      %2227 = vmatprep.mubr.f32.mxu0 0.0
      %2228 = vmatmul.mubr.f32.gmra.mxu0 %v2110
      %v2229 = vpop.f32.mrf.mxu0
      %v2230 = vadd.f32 %v2098, %v2229
      %v2231 = vpop.f32.mrf.mxu0
      %2232 = vmatprep.mubr.f32.mxu0 0.0
      %2233 = vmatmul.mubr.f32.gmra.mxu0 %v2113
      %v2234 = vpop.f32.mrf.mxu0
      %v2235 = vadd.f32 %v2098, %v2234
      %v2236 = vpop.f32.mrf.mxu0
      %2237 = vmatprep.mubr.f32.mxu0 0.0
      %2238 = vmatmul.mubr.f32.gmra.mxu0 %v2116
      %v2239 = vpop.f32.mrf.mxu0
      %v2240 = vadd.f32 %v2098, %v2239
      %v2241 = vpop.f32.mrf.mxu0
      %2242 = vmatprep.mubr.f32.mxu0 0.0
      %2243 = vmatmul.mubr.f32.gmra.mxu0 %v2119
      %v2244 = vpop.f32.mrf.mxu0
      %v2245 = vadd.f32 %v2098, %v2244
      %v2246 = vpop.f32.mrf.mxu0
      %2247 = vmatprep.mubr.f32.mxu0 0.0
      %2248 = vmatmul.mubr.f32.gmra.mxu0 %v2122
      %v2249 = vpop.f32.mrf.mxu0
      %v2250 = vadd.f32 %v2098, %v2249
      %v2251 = vpop.f32.mrf.mxu0
      %2252 = vmatprep.mubr.f32.mxu0 0.0
      %2253 = vmatmul.mubr.f32.gmra.mxu0 %v2125
      %v2254 = vpop.f32.mrf.mxu0
      %v2255 = vadd.f32 %v2098, %v2254
      %v2256 = vpop.f32.mrf.mxu0
      %2257 = vmatprep.mubr.f32.mxu0 0.0
      %2258 = vmatmul.mubr.f32.gmra.mxu0 %v2128
      %v2259 = vpop.f32.mrf.mxu0
      %v2260 = vadd.f32 %v2098, %v2259
      %v2261 = vpop.f32.mrf.mxu0
      %2262 = vmatprep.mubr.f32.mxu0 0.0
      %2263 = vmatmul.mubr.f32.gmra.mxu0 %v2131
      %v2264 = vpop.f32.mrf.mxu0
      %v2265 = vadd.f32 %v2098, %v2264
      %v2266 = vpop.f32.mrf.mxu0
      %2267 = vmatprep.mubr.f32.mxu0 0.0
      %2268 = vmatmul.mubr.f32.gmra.mxu0 %v2134
      %v2269 = vpop.f32.mrf.mxu0
      %v2270 = vadd.f32 %v2098, %v2269
      %v2271 = vpop.f32.mrf.mxu0
      %2272 = vmatprep.mubr.f32.mxu0 0.0
      %2273 = vmatmul.mubr.f32.gmra.mxu0 %v2137
      %v2274 = vpop.f32.mrf.mxu0
      %v2275 = vadd.f32 %v2098, %v2274
      %v2276 = vpop.f32.mrf.mxu0
      %2277 = vmatprep.mubr.f32.mxu0 0.0
      %2278 = vmatmul.mubr.f32.gmra.mxu0 %v2140
      %v2279 = vpop.f32.mrf.mxu0
      %v2280 = vadd.f32 %v2098, %v2279
      %v2281 = vpop.f32.mrf.mxu0
      %2282 = vmatprep.mubr.f32.mxu0 0.0
      %2283 = vmatmul.mubr.f32.gmra.mxu0 %v2143
      %v2284 = vpop.f32.mrf.mxu0
      %v2285 = vadd.f32 %v2098, %v2284
      %v2286 = vpop.f32.mrf.mxu0
      %2287 = vmatprep.mubr.f32.mxu0 0.0
      %2288 = vmatmul.mubr.f32.gmra.mxu0 %v2146
      %v2289 = vpop.f32.mrf.mxu0
      %v2290 = vadd.f32 %v2098, %v2289
      %v2291 = vpop.f32.mrf.mxu0
      %2292 = vdwg.mxu0
      %v2293 = vxor.u32 %v2215, 2147483648
      %v2294 = vxor.u32 %v2220, 2147483648
      %v2295 = vxor.u32 %v2225, 2147483648
      %v2296 = vxor.u32 %v2230, 2147483648
      %v2297 = vxor.u32 %v2235, 2147483648
      %v2298 = vxor.u32 %v2240, 2147483648
      %v2299 = vxor.u32 %v2245, 2147483648
      %v2300 = vxor.u32 %v2250, 2147483648
      %v2301 = vxor.u32 %v2255, 2147483648
      %v2302 = vxor.u32 %v2260, 2147483648
      %v2303 = vxor.u32 %v2265, 2147483648
      %v2304 = vxor.u32 %v2270, 2147483648
      %v2305 = vxor.u32 %v2275, 2147483648
      %v2306 = vxor.u32 %v2280, 2147483648
      %v2307 = vxor.u32 %v2285, 2147483648
      %v2308 = vxor.u32 %v2290, 2147483648
      %v2309 = vmul.f32 %v2293, 1.442695
      %v2310 = vpow.pop %v2309
      %v2311 = vmul.f32 %v2294, 1.442695
      %v2312 = vpow.pop %v2311
      %v2313 = vmul.f32 %v2295, 1.442695
      %v2314 = vpow.pop %v2313
      %v2315 = vmul.f32 %v2296, 1.442695
      %v2316 = vpow.pop %v2315
      %v2317 = vmul.f32 %v2297, 1.442695
      %v2318 = vpow.pop %v2317
      %v2319 = vmul.f32 %v2298, 1.442695
      %v2320 = vpow.pop %v2319
      %v2321 = vmul.f32 %v2299, 1.442695
      %v2322 = vpow.pop %v2321
      %v2323 = vmul.f32 %v2300, 1.442695
      %v2324 = vpow.pop %v2323
      %v2325 = vmul.f32 %v2301, 1.442695
      %v2326 = vpow.pop %v2325
      %v2327 = vmul.f32 %v2302, 1.442695
      %v2328 = vpow.pop %v2327
      %v2329 = vmul.f32 %v2303, 1.442695
      %v2330 = vpow.pop %v2329
      %v2331 = vmul.f32 %v2304, 1.442695
      %v2332 = vpow.pop %v2331
      %v2333 = vmul.f32 %v2305, 1.442695
      %v2334 = vpow.pop %v2333
      %v2335 = vmul.f32 %v2306, 1.442695
      %v2336 = vpow.pop %v2335
      %v2337 = vmul.f32 %v2307, 1.442695
      %v2338 = vpow.pop %v2337
      %v2339 = vmul.f32 %v2308, 1.442695
      %v2340 = vpow.pop %v2339
      %v2341 = vadd.f32 %v2310, 1.0
      %v2342 = vadd.f32 %v2312, 1.0
      %v2343 = vadd.f32 %v2314, 1.0
      %v2344 = vadd.f32 %v2316, 1.0
      %v2345 = vadd.f32 %v2318, 1.0
      %v2346 = vadd.f32 %v2320, 1.0
      %v2347 = vadd.f32 %v2322, 1.0
      %v2348 = vadd.f32 %v2324, 1.0
      %v2349 = vadd.f32 %v2326, 1.0
      %v2350 = vadd.f32 %v2328, 1.0
      %v2351 = vadd.f32 %v2330, 1.0
      %v2352 = vadd.f32 %v2332, 1.0
      %v2353 = vadd.f32 %v2334, 1.0
      %v2354 = vadd.f32 %v2336, 1.0
      %v2355 = vadd.f32 %v2338, 1.0
      %v2356 = vadd.f32 %v2340, 1.0
      %v2357 = vrcp.pop %v2341
      %v2358 = vmul.f32 1.0, %v2357
      %v2359 = vrcp.pop %v2342
      %v2360 = vmul.f32 1.0, %v2359
      %v2361 = vrcp.pop %v2343
      %v2362 = vmul.f32 1.0, %v2361
      %v2363 = vrcp.pop %v2344
      %v2364 = vmul.f32 1.0, %v2363
      %v2365 = vrcp.pop %v2345
      %v2366 = vmul.f32 1.0, %v2365
      %v2367 = vrcp.pop %v2346
      %v2368 = vmul.f32 1.0, %v2367
      %v2369 = vrcp.pop %v2347
      %v2370 = vmul.f32 1.0, %v2369
      %v2371 = vrcp.pop %v2348
      %v2372 = vmul.f32 1.0, %v2371
      %v2373 = vrcp.pop %v2349
      %v2374 = vmul.f32 1.0, %v2373
      %v2375 = vrcp.pop %v2350
      %v2376 = vmul.f32 1.0, %v2375
      %v2377 = vrcp.pop %v2351
      %v2378 = vmul.f32 1.0, %v2377
      %v2379 = vrcp.pop %v2352
      %v2380 = vmul.f32 1.0, %v2379
      %v2381 = vrcp.pop %v2353
      %v2382 = vmul.f32 1.0, %v2381
      %v2383 = vrcp.pop %v2354
      %v2384 = vmul.f32 1.0, %v2383
      %v2385 = vrcp.pop %v2355
      %v2386 = vmul.f32 1.0, %v2385
      %v2387 = vrcp.pop %v2356
      %v2388 = vmul.f32 1.0, %v2387
      %v2389 = vmul.f32 %v2215, %v2358
      %v2390 = vmul.f32 %v2220, %v2360
      %v2391 = vmul.f32 %v2225, %v2362
      %v2392 = vmul.f32 %v2230, %v2364
      %v2393 = vmul.f32 %v2235, %v2366
      %v2394 = vmul.f32 %v2240, %v2368
      %v2395 = vmul.f32 %v2245, %v2370
      %v2396 = vmul.f32 %v2250, %v2372
      %v2397 = vmul.f32 %v2255, %v2374
      %v2398 = vmul.f32 %v2260, %v2376
      %v2399 = vmul.f32 %v2265, %v2378
      %v2400 = vmul.f32 %v2270, %v2380
      %v2401 = vmul.f32 %v2275, %v2382
      %v2402 = vmul.f32 %v2280, %v2384
      %v2403 = vmul.f32 %v2285, %v2386
      %v2404 = vmul.f32 %v2290, %v2388
      %v2405 = vld [vmem:[%s13] sm:$0x1]
      %v2407 = vlaneseq
      %v2408 = vshrl.u32 %v2407, 7
      %v2409 = vsub.s32 0, %v2408
      %v2410 = vrot.slane %v2405, %v2409
      %v2412 = vmul.f32 %v2389, %v2410
      %v2413 = vmul.f32 %v2390, %v2410
      %v2414 = vmul.f32 %v2391, %v2410
      %v2415 = vmul.f32 %v2392, %v2410
      %v2416 = vmul.f32 %v2393, %v2410
      %v2417 = vmul.f32 %v2394, %v2410
      %v2418 = vmul.f32 %v2395, %v2410
      %v2419 = vmul.f32 %v2396, %v2410
      %v2420 = vmul.f32 %v2397, %v2410
      %v2421 = vmul.f32 %v2398, %v2410
      %v2422 = vmul.f32 %v2399, %v2410
      %v2423 = vmul.f32 %v2400, %v2410
      %v2424 = vmul.f32 %v2401, %v2410
      %v2425 = vmul.f32 %v2402, %v2410
      %v2426 = vmul.f32 %v2403, %v2410
      %v2427 = vmul.f32 %v2404, %v2410
      %v2428 = vsel %vm1783, %v2412, 0.0
      %2429 = vadd.xlane.f32.xlu0 %v2428
      %v2430 = vpop.xlane.xlu0 %2429
      %v2431 = vsel %vm1783, %v2413, 0.0
      %2432 = vadd.xlane.f32.xlu0 %v2431
      %v2433 = vpop.xlane.xlu0 %2432
      %v2434 = vsel %vm1783, %v2414, 0.0
      %2435 = vadd.xlane.f32.xlu0 %v2434
      %v2436 = vpop.xlane.xlu0 %2435
      %v2437 = vsel %vm1783, %v2415, 0.0
      %2438 = vadd.xlane.f32.xlu0 %v2437
      %v2439 = vpop.xlane.xlu0 %2438
      %v2440 = vsel %vm1783, %v2416, 0.0
      %2441 = vadd.xlane.f32.xlu0 %v2440
      %v2442 = vpop.xlane.xlu0 %2441
      %v2443 = vsel %vm1783, %v2417, 0.0
      %2444 = vadd.xlane.f32.xlu0 %v2443
      %v2445 = vpop.xlane.xlu0 %2444
      %v2446 = vsel %vm1783, %v2418, 0.0
      %2447 = vadd.xlane.f32.xlu0 %v2446
      %v2448 = vpop.xlane.xlu0 %2447
      %v2449 = vsel %vm1783, %v2419, 0.0
      %2450 = vadd.xlane.f32.xlu0 %v2449
      %v2451 = vpop.xlane.xlu0 %2450
      %v2452 = vsel %vm1783, %v2420, 0.0
      %2453 = vadd.xlane.f32.xlu0 %v2452
      %v2454 = vpop.xlane.xlu0 %2453
      %v2455 = vsel %vm1783, %v2421, 0.0
      %2456 = vadd.xlane.f32.xlu0 %v2455
      %v2457 = vpop.xlane.xlu0 %2456
      %v2458 = vsel %vm1783, %v2422, 0.0
      %2459 = vadd.xlane.f32.xlu0 %v2458
      %v2460 = vpop.xlane.xlu0 %2459
      %v2461 = vsel %vm1783, %v2423, 0.0
      %2462 = vadd.xlane.f32.xlu0 %v2461
      %v2463 = vpop.xlane.xlu0 %2462
      %v2464 = vsel %vm1783, %v2424, 0.0
      %2465 = vadd.xlane.f32.xlu0 %v2464
      %v2466 = vpop.xlane.xlu0 %2465
      %v2467 = vsel %vm1783, %v2425, 0.0
      %2468 = vadd.xlane.f32.xlu0 %v2467
      %v2469 = vpop.xlane.xlu0 %2468
      %v2470 = vsel %vm1783, %v2426, 0.0
      %2471 = vadd.xlane.f32.xlu0 %v2470
      %v2472 = vpop.xlane.xlu0 %2471
      %v2473 = vsel %vm1783, %v2427, 0.0
      %2474 = vadd.xlane.f32.xlu0 %v2473
      %v2475 = vpop.xlane.xlu0 %2474
      %v2476 = vmul.f32 %v1582, %v2430
      %v2477 = vmul.f32 %v1583, %v2433
      %v2478 = vmul.f32 %v1584, %v2436
      %v2479 = vmul.f32 %v1585, %v2439
      %v2480 = vmul.f32 %v1586, %v2442
      %v2481 = vmul.f32 %v1587, %v2445
      %v2482 = vmul.f32 %v1588, %v2448
      %v2483 = vmul.f32 %v1589, %v2451
      %v2484 = vmul.f32 %v1590, %v2454
      %v2485 = vmul.f32 %v1591, %v2457
      %v2486 = vmul.f32 %v1592, %v2460
      %v2487 = vmul.f32 %v1593, %v2463
      %v2488 = vmul.f32 %v1594, %v2466
      %v2489 = vmul.f32 %v1595, %v2469
      %v2490 = vmul.f32 %v1596, %v2472
      %v2491 = vmul.f32 %v1597, %v2475
      %v2492 = vld [vmem:[%s650] sm:$0x1]
      %v2493 = vlaneseq
      %v2494 = vshrl.u32 %v2493, 7
      %v2495 = vadd.s32 %v2494, 8
      %v2496 = vadd.s32 %v2494, 16
      %v2497 = vlaneseq
      %v2498 = vshrl.u32 %v2497, 7
      %v2499 = vsub.s32 0, %v2498
      %v2500 = vrot.slane %v2492, %v2499
      %vm2501 = vcmp.eq.s32.totalorder %v2494, %v2500
      %vm2502 = vcmp.eq.s32.totalorder %v2495, %v2500
      %vm2503 = vcmp.eq.s32.totalorder %v2496, %v2500
      %v2504 = vsel %vm2501, 1, 0
      %v2505 = vsel %vm2502, 1, 0
      %v2506 = vsel %vm2503, 1, 0
      %v2507 = vcvt.s32.f32 %v2504
      %v2508 = vcvt.s32.f32 %v2505
      %v2509 = vcvt.s32.f32 %v2506
      %v2510 = vpack.c.bf16 %v2508, %v2507
      %v2511 = vpack.c.bf16 %v2509, %v2509
      %v2512 = vsel %vm1783, %v2073, %v2476
      %v2513 = vsel %vm1783, %v2074, %v2477
      %v2514 = vsel %vm1783, %v2075, %v2478
      %v2515 = vsel %vm1783, %v2076, %v2479
      %v2516 = vsel %vm1783, %v2077, %v2480
      %v2517 = vsel %vm1783, %v2078, %v2481
      %v2518 = vsel %vm1783, %v2079, %v2482
      %v2519 = vsel %vm1783, %v2080, %v2483
      %v2520 = vsel %vm1783, %v2081, %v2484
      %v2521 = vsel %vm1783, %v2082, %v2485
      %v2522 = vsel %vm1783, %v2083, %v2486
      %v2523 = vsel %vm1783, %v2084, %v2487
      %v2524 = vsel %vm1783, %v2085, %v2488
      %v2525 = vsel %vm1783, %v2086, %v2489
      %v2526 = vsel %vm1783, %v2087, %v2490
      %v2527 = vsel %vm1783, %v2088, %v2491
      %vm2528 = vcmask 285696
      %v2529 = vsel %vm2528, %v2512, 0.0
      %v2530 = vsel %vm2528, %v2513, 0.0
      %v2531 = vsel %vm2528, %v2514, 0.0
      %v2532 = vsel %vm2528, %v2515, 0.0
      %v2533 = vsel %vm2528, %v2516, 0.0
      %v2534 = vsel %vm2528, %v2517, 0.0
      %v2535 = vsel %vm2528, %v2518, 0.0
      %v2536 = vsel %vm2528, %v2519, 0.0
      %v2537 = vsel %vm2528, %v2520, 0.0
      %v2538 = vsel %vm2528, %v2521, 0.0
      %v2539 = vsel %vm2528, %v2522, 0.0
      %v2540 = vsel %vm2528, %v2523, 0.0
      %v2541 = vsel %vm2528, %v2524, 0.0
      %v2542 = vsel %vm2528, %v2525, 0.0
      %v2543 = vsel %vm2528, %v2526, 0.0
      %v2544 = vsel %vm2528, %v2527, 0.0
      %v2545 = vpack.c.bf16 %v2530, %v2529
      %v2546 = vpack.c.bf16 %v2532, %v2531
      %v2547 = vpack.c.bf16 %v2534, %v2533
      %v2548 = vpack.c.bf16 %v2536, %v2535
      %v2549 = vpack.c.bf16 %v2538, %v2537
      %v2550 = vpack.c.bf16 %v2540, %v2539
      %v2551 = vpack.c.bf16 %v2542, %v2541
      %v2552 = vpack.c.bf16 %v2544, %v2543
      %v2553 = vld [vmem:[#allocation3] sm:$0xff]
      %v2554 = vld [vmem:[#allocation3 + $0x8] sm:$0xff]
      %v2555 = vld [vmem:[#allocation3 + $0x10] sm:$0xff]
      %2556 = vmatprep.subr.bf16.mxu0 0
      %2557 = vmatpush1.bf16.msra.mxu0 %v2552
      %2558 = vmatprep.subr.bf16.mxu0 0
      %2559 = vmatpush1.bf16.msra.mxu0 %v2551
      %2560 = vmatprep.subr.bf16.mxu0 0
      %2561 = vmatpush1.bf16.msra.mxu0 %v2550
      %2562 = vmatprep.subr.bf16.mxu0 0
      %2563 = vmatpush1.bf16.msra.mxu0 %v2549
      %2564 = vmatprep.subr.bf16.mxu0 0
      %2565 = vmatpush1.bf16.msra.mxu0 %v2548
      %2566 = vmatprep.subr.bf16.mxu0 0
      %2567 = vmatpush1.bf16.msra.mxu0 %v2547
      %2568 = vmatprep.subr.bf16.mxu0 0
      %2569 = vmatpush1.bf16.msra.mxu0 %v2546
      %2570 = vmatprep.subr.bf16.mxu0 0
      %2571 = vmatpush1.bf16.msra.mxu0 %v2545
      %2572 = vmatprep.subr.bf16.mxu0 0
      %2573 = vmatpush2.bf16.msra.mxu0 0
      %2574 = vmatprep.subr.bf16.mxu0 0
      %2575 = vmatpush2.bf16.msra.mxu0 0
      %2576 = vmatprep.subr.bf16.mxu0 0
      %2577 = vmatpush2.bf16.msra.mxu0 0
      %2578 = vmatprep.subr.bf16.mxu0 0
      %2579 = vmatpush2.bf16.msra.mxu0 0
      %2580 = vmatprep.subr.bf16.mxu0 0
      %2581 = vmatpush2.bf16.msra.mxu0 0
      %2582 = vmatprep.subr.bf16.mxu0 0
      %2583 = vmatpush2.bf16.msra.mxu0 0
      %2584 = vmatprep.subr.bf16.mxu0 0
      %2585 = vmatpush2.bf16.msra.mxu0 0
      %2586 = vmatprep.subr.bf16.mxu0 0
      %2587 = vmatpush2.bf16.msra.mxu0 0
      %2588 = vmatprep.mubr.bf16.mxu0 0
      %2589 = vmatmul.mubr.bf16.gmra.mxu0 %v2510
      %v2590 = vpop.f32.mrf.mxu0
      %v2591 = vadd.f32 0.0, %v2590
      %v2592 = vpop.f32.mrf.mxu0
      %v2593 = vpop.f32.mrf.mxu0
      %v2594 = vadd.f32 0.0, %v2593
      %v2595 = vpop.f32.mrf.mxu0
      %2596 = vmatprep.mubr.bf16.mxu0 0
      %2597 = vmatmul.mubr.bf16.gmra.mxu0 %v2511
      %v2598 = vpop.f32.mrf.mxu0
      %v2599 = vadd.f32 0.0, %v2598
      %v2600 = vpop.f32.mrf.mxu0
      %v2601 = vpop.f32.mrf.mxu0
      %v2602 = vpop.f32.mrf.mxu0
      %2603 = vdwg.mxu0
      %v2604 = vadd.f32 %v2553, %v2591
      %v2605 = vadd.f32 %v2554, %v2594
      %v2606 = vadd.f32 %v2555, %v2599
      %2607 = vst [vmem:[#allocation3] sm:$0xff] %v2604
      %2608 = vst [vmem:[#allocation3 + $0x8] sm:$0xff] %v2605
      %2609 = vst [vmem:[#allocation3 + $0x10] sm:$0xff] %v2606
      %p2610 = scmp.eq.s32.totalorder %s32, 4
      // Predicated region
      $region101: #{egcl_forward.1} parent=95 // pred_check
        %p2611 = pneg %p2610
      $region102: #{egcl_forward.1} parent=95 // pred_check_branch
        %2613 = sbr.rel (%p2611) target = $region104
      $region103: #{egcl_forward.1} parent=95 // pred_region
        %v2614 = vld [vmem:[%s0] sm:$0xff]
        %v2615 = vld [vmem:[%s0 + $0x8] sm:$0xff]
        %v2616 = vld [vmem:[%s0 + $0x10] sm:$0xff]
        %v2617 = vld [vmem:[#allocation3] sm:$0xff]
        %v2618 = vld [vmem:[#allocation3 + $0x8] sm:$0xff]
        %v2619 = vld [vmem:[#allocation3 + $0x10] sm:$0xff]
        %v2620 = vld [vmem:[%s14] sm:$0xff]
        %v2621 = vld [vmem:[%s14 + $0x8] sm:$0xff]
        %v2622 = vld [vmem:[%s14 + $0x10] sm:$0xff]
        %v2623 = vld [vmem:[%s14 + $0x18] sm:$0xff]
        %v2624 = vld [vmem:[%s15] sm:$0xff]
        %v2625 = vld [vmem:[%s15 + $0x8] sm:$0xff]
        %v2626 = vld [vmem:[%s15 + $0x10] sm:$0xff]
        %v2627 = vld [vmem:[%s15 + $0x18] sm:$0xff]
        %v2629 = vsel %vm1783, %v2617, 0
        %v2632 = vsel %vm1783, %v2618, 0
        %v2635 = vsel %vm1783, %v2619, 0
        %2637 = vmatprep.subr.mxu0 0.0
        %2638 = vmatpush1.msra.mxu0 0.0
        %2639 = vmatprep.subr.mxu0 0.0
        %2640 = vmatpush1.msra.mxu0 0.0
        %2641 = vmatprep.subr.mxu0 0.0
        %2642 = vmatpush1.msra.mxu0 0.0
        %2643 = vmatprep.subr.mxu0 0.0
        %2644 = vmatpush1.msra.mxu0 0.0
        %2645 = vmatprep.subr.mxu0 0.0
        %2646 = vmatpush1.msra.mxu0 0.0
        %2647 = vmatprep.subr.mxu0 0.0
        %2648 = vmatpush1.msra.mxu0 0.0
        %2649 = vmatprep.subr.mxu0 0.0
        %2650 = vmatpush1.msra.mxu0 0.0
        %2651 = vmatprep.subr.mxu0 0.0
        %2652 = vmatpush1.msra.mxu0 0.0
        %2653 = vmatprep.subr.mxu0 0.0
        %2654 = vmatpush1.msra.mxu0 0.0
        %2655 = vmatprep.subr.mxu0 0.0
        %2656 = vmatpush1.msra.mxu0 0.0
        %2657 = vmatprep.subr.mxu0 0.0
        %2658 = vmatpush1.msra.mxu0 0.0
        %2659 = vmatprep.subr.mxu0 0.0
        %2660 = vmatpush1.msra.mxu0 0.0
        %2661 = vmatprep.subr.mxu0 0.0
        %2662 = vmatpush1.msra.mxu0 %v2627
        %2663 = vmatprep.subr.mxu0 0.0
        %2664 = vmatpush1.msra.mxu0 %v2626
        %2665 = vmatprep.subr.mxu0 0.0
        %2666 = vmatpush1.msra.mxu0 %v2625
        %2667 = vmatprep.subr.mxu0 0.0
        %2668 = vmatpush1.msra.mxu0 %v2624
        %2669 = vmatprep.subr.mxu0 0.0
        %2670 = vmatpush2.msra.mxu0 0.0
        %2671 = vmatprep.subr.mxu0 0.0
        %2672 = vmatpush2.msra.mxu0 0.0
        %2673 = vmatprep.subr.mxu0 0.0
        %2674 = vmatpush2.msra.mxu0 0.0
        %2675 = vmatprep.subr.mxu0 0.0
        %2676 = vmatpush2.msra.mxu0 0.0
        %2677 = vmatprep.subr.mxu0 0.0
        %2678 = vmatpush2.msra.mxu0 0.0
        %2679 = vmatprep.subr.mxu0 0.0
        %2680 = vmatpush2.msra.mxu0 0.0
        %2681 = vmatprep.subr.mxu0 0.0
        %2682 = vmatpush2.msra.mxu0 0.0
        %2683 = vmatprep.subr.mxu0 0.0
        %2684 = vmatpush2.msra.mxu0 0.0
        %2685 = vmatprep.subr.mxu0 0.0
        %2686 = vmatpush2.msra.mxu0 0.0
        %2687 = vmatprep.subr.mxu0 0.0
        %2688 = vmatpush2.msra.mxu0 0.0
        %2689 = vmatprep.subr.mxu0 0.0
        %2690 = vmatpush2.msra.mxu0 0.0
        %2691 = vmatprep.subr.mxu0 0.0
        %2692 = vmatpush2.msra.mxu0 0.0
        %2693 = vmatprep.subr.mxu0 0.0
        %2694 = vmatpush2.msra.mxu0 0.0
        %2695 = vmatprep.subr.mxu0 0.0
        %2696 = vmatpush2.msra.mxu0 0.0
        %2697 = vmatprep.subr.mxu0 0.0
        %2698 = vmatpush2.msra.mxu0 0.0
        %2699 = vmatprep.subr.mxu0 0.0
        %2700 = vmatpush2.msra.mxu0 0.0
        %2701 = vmatprep.mubr.f32.mxu0 0.0
        %2702 = vmatmul.mubr.f32.gmra.mxu0 %v2629
        %v2703 = vpop.f32.mrf.mxu0
        %v2704 = vadd.f32 0.0, %v2703
        %v2705 = vpop.f32.mrf.mxu0
        %2706 = vmatprep.mubr.f32.mxu0 0.0
        %2707 = vmatmul.mubr.f32.gmra.mxu0 %v2632
        %v2708 = vpop.f32.mrf.mxu0
        %v2709 = vadd.f32 0.0, %v2708
        %v2710 = vpop.f32.mrf.mxu0
        %2711 = vmatprep.mubr.f32.mxu0 0.0
        %2712 = vmatmul.mubr.f32.gmra.mxu0 %v2635
        %v2713 = vpop.f32.mrf.mxu0
        %v2714 = vadd.f32 0.0, %v2713
        %v2715 = vpop.f32.mrf.mxu0
        %2716 = vdwg.mxu0
        %v2718 = vsel %vm1783, %v2614, 0
        %v2721 = vsel %vm1783, %v2615, 0
        %v2724 = vsel %vm1783, %v2616, 0
        %2726 = vmatprep.subr.mxu0 0.0
        %2727 = vmatpush1.msra.mxu0 0.0
        %2728 = vmatprep.subr.mxu0 0.0
        %2729 = vmatpush1.msra.mxu0 0.0
        %2730 = vmatprep.subr.mxu0 0.0
        %2731 = vmatpush1.msra.mxu0 0.0
        %2732 = vmatprep.subr.mxu0 0.0
        %2733 = vmatpush1.msra.mxu0 0.0
        %2734 = vmatprep.subr.mxu0 0.0
        %2735 = vmatpush1.msra.mxu0 0.0
        %2736 = vmatprep.subr.mxu0 0.0
        %2737 = vmatpush1.msra.mxu0 0.0
        %2738 = vmatprep.subr.mxu0 0.0
        %2739 = vmatpush1.msra.mxu0 0.0
        %2740 = vmatprep.subr.mxu0 0.0
        %2741 = vmatpush1.msra.mxu0 0.0
        %2742 = vmatprep.subr.mxu0 0.0
        %2743 = vmatpush1.msra.mxu0 0.0
        %2744 = vmatprep.subr.mxu0 0.0
        %2745 = vmatpush1.msra.mxu0 0.0
        %2746 = vmatprep.subr.mxu0 0.0
        %2747 = vmatpush1.msra.mxu0 0.0
        %2748 = vmatprep.subr.mxu0 0.0
        %2749 = vmatpush1.msra.mxu0 0.0
        %2750 = vmatprep.subr.mxu0 0.0
        %2751 = vmatpush1.msra.mxu0 %v2623
        %2752 = vmatprep.subr.mxu0 0.0
        %2753 = vmatpush1.msra.mxu0 %v2622
        %2754 = vmatprep.subr.mxu0 0.0
        %2755 = vmatpush1.msra.mxu0 %v2621
        %2756 = vmatprep.subr.mxu0 0.0
        %2757 = vmatpush1.msra.mxu0 %v2620
        %2758 = vmatprep.subr.mxu0 0.0
        %2759 = vmatpush2.msra.mxu0 0.0
        %2760 = vmatprep.subr.mxu0 0.0
        %2761 = vmatpush2.msra.mxu0 0.0
        %2762 = vmatprep.subr.mxu0 0.0
        %2763 = vmatpush2.msra.mxu0 0.0
        %2764 = vmatprep.subr.mxu0 0.0
        %2765 = vmatpush2.msra.mxu0 0.0
        %2766 = vmatprep.subr.mxu0 0.0
        %2767 = vmatpush2.msra.mxu0 0.0
        %2768 = vmatprep.subr.mxu0 0.0
        %2769 = vmatpush2.msra.mxu0 0.0
        %2770 = vmatprep.subr.mxu0 0.0
        %2771 = vmatpush2.msra.mxu0 0.0
        %2772 = vmatprep.subr.mxu0 0.0
        %2773 = vmatpush2.msra.mxu0 0.0
        %2774 = vmatprep.subr.mxu0 0.0
        %2775 = vmatpush2.msra.mxu0 0.0
        %2776 = vmatprep.subr.mxu0 0.0
        %2777 = vmatpush2.msra.mxu0 0.0
        %2778 = vmatprep.subr.mxu0 0.0
        %2779 = vmatpush2.msra.mxu0 0.0
        %2780 = vmatprep.subr.mxu0 0.0
        %2781 = vmatpush2.msra.mxu0 0.0
        %2782 = vmatprep.subr.mxu0 0.0
        %2783 = vmatpush2.msra.mxu0 0.0
        %2784 = vmatprep.subr.mxu0 0.0
        %2785 = vmatpush2.msra.mxu0 0.0
        %2786 = vmatprep.subr.mxu0 0.0
        %2787 = vmatpush2.msra.mxu0 0.0
        %2788 = vmatprep.subr.mxu0 0.0
        %2789 = vmatpush2.msra.mxu0 0.0
        %2790 = vmatprep.mubr.f32.mxu0 0.0
        %2791 = vmatmul.mubr.f32.gmra.mxu0 %v2718
        %v2792 = vpop.f32.mrf.mxu0
        %v2793 = vadd.f32 %v2704, %v2792
        %v2794 = vpop.f32.mrf.mxu0
        %2795 = vmatprep.mubr.f32.mxu0 0.0
        %2796 = vmatmul.mubr.f32.gmra.mxu0 %v2721
        %v2797 = vpop.f32.mrf.mxu0
        %v2798 = vadd.f32 %v2709, %v2797
        %v2799 = vpop.f32.mrf.mxu0
        %2800 = vmatprep.mubr.f32.mxu0 0.0
        %2801 = vmatmul.mubr.f32.gmra.mxu0 %v2724
        %v2802 = vpop.f32.mrf.mxu0
        %v2803 = vadd.f32 %v2714, %v2802
        %v2804 = vpop.f32.mrf.mxu0
        %2805 = vdwg.mxu0
        %v2806 = vld [vmem:[%s16] sm:$0x1]
        %v2808 = vlaneseq
        %v2809 = vshrl.u32 %v2808, 7
        %v2810 = vsub.s32 0, %v2809
        %v2811 = vrot.slane %v2806, %v2810
        %v2813 = vadd.f32 %v2793, %v2811
        %v2814 = vadd.f32 %v2798, %v2811
        %v2815 = vadd.f32 %v2803, %v2811
        %v2816 = vxor.u32 %v2813, 2147483648
        %v2817 = vxor.u32 %v2814, 2147483648
        %v2818 = vxor.u32 %v2815, 2147483648
        %v2819 = vmul.f32 %v2816, 1.442695
        %v2820 = vpow.pop %v2819
        %v2821 = vmul.f32 %v2817, 1.442695
        %v2822 = vpow.pop %v2821
        %v2823 = vmul.f32 %v2818, 1.442695
        %v2824 = vpow.pop %v2823
        %v2825 = vadd.f32 %v2820, 1.0
        %v2826 = vadd.f32 %v2822, 1.0
        %v2827 = vadd.f32 %v2824, 1.0
        %v2828 = vrcp.pop %v2825
        %v2829 = vmul.f32 1.0, %v2828
        %v2830 = vrcp.pop %v2826
        %v2831 = vmul.f32 1.0, %v2830
        %v2832 = vrcp.pop %v2827
        %v2833 = vmul.f32 1.0, %v2832
        %v2834 = vmul.f32 %v2813, %v2829
        %v2835 = vmul.f32 %v2814, %v2831
        %v2836 = vmul.f32 %v2815, %v2833
        %v2837 = vld [vmem:[%s17] sm:$0xff]
        %v2838 = vld [vmem:[%s17 + $0x8] sm:$0xff]
        %v2839 = vld [vmem:[%s17 + $0x10] sm:$0xff]
        %v2840 = vld [vmem:[%s17 + $0x18] sm:$0xff]
        %v2841 = vld [vmem:[%s18] sm:$0x1]
        %v2843 = vlaneseq
        %v2844 = vshrl.u32 %v2843, 7
        %v2845 = vsub.s32 0, %v2844
        %v2846 = vrot.slane %v2841, %v2845
        %v2849 = vsel %vm1783, %v2834, 0
        %v2852 = vsel %vm1783, %v2835, 0
        %v2855 = vsel %vm1783, %v2836, 0
        %2857 = vmatprep.subr.mxu0 0.0
        %2858 = vmatpush1.msra.mxu0 0.0
        %2859 = vmatprep.subr.mxu0 0.0
        %2860 = vmatpush1.msra.mxu0 0.0
        %2861 = vmatprep.subr.mxu0 0.0
        %2862 = vmatpush1.msra.mxu0 0.0
        %2863 = vmatprep.subr.mxu0 0.0
        %2864 = vmatpush1.msra.mxu0 0.0
        %2865 = vmatprep.subr.mxu0 0.0
        %2866 = vmatpush1.msra.mxu0 0.0
        %2867 = vmatprep.subr.mxu0 0.0
        %2868 = vmatpush1.msra.mxu0 0.0
        %2869 = vmatprep.subr.mxu0 0.0
        %2870 = vmatpush1.msra.mxu0 0.0
        %2871 = vmatprep.subr.mxu0 0.0
        %2872 = vmatpush1.msra.mxu0 0.0
        %2873 = vmatprep.subr.mxu0 0.0
        %2874 = vmatpush1.msra.mxu0 0.0
        %2875 = vmatprep.subr.mxu0 0.0
        %2876 = vmatpush1.msra.mxu0 0.0
        %2877 = vmatprep.subr.mxu0 0.0
        %2878 = vmatpush1.msra.mxu0 0.0
        %2879 = vmatprep.subr.mxu0 0.0
        %2880 = vmatpush1.msra.mxu0 0.0
        %2881 = vmatprep.subr.mxu0 0.0
        %2882 = vmatpush1.msra.mxu0 %v2840
        %2883 = vmatprep.subr.mxu0 0.0
        %2884 = vmatpush1.msra.mxu0 %v2839
        %2885 = vmatprep.subr.mxu0 0.0
        %2886 = vmatpush1.msra.mxu0 %v2838
        %2887 = vmatprep.subr.mxu0 0.0
        %2888 = vmatpush1.msra.mxu0 %v2837
        %2889 = vmatprep.subr.mxu0 0.0
        %2890 = vmatpush2.msra.mxu0 0.0
        %2891 = vmatprep.subr.mxu0 0.0
        %2892 = vmatpush2.msra.mxu0 0.0
        %2893 = vmatprep.subr.mxu0 0.0
        %2894 = vmatpush2.msra.mxu0 0.0
        %2895 = vmatprep.subr.mxu0 0.0
        %2896 = vmatpush2.msra.mxu0 0.0
        %2897 = vmatprep.subr.mxu0 0.0
        %2898 = vmatpush2.msra.mxu0 0.0
        %2899 = vmatprep.subr.mxu0 0.0
        %2900 = vmatpush2.msra.mxu0 0.0
        %2901 = vmatprep.subr.mxu0 0.0
        %2902 = vmatpush2.msra.mxu0 0.0
        %2903 = vmatprep.subr.mxu0 0.0
        %2904 = vmatpush2.msra.mxu0 0.0
        %2905 = vmatprep.subr.mxu0 0.0
        %2906 = vmatpush2.msra.mxu0 0.0
        %2907 = vmatprep.subr.mxu0 0.0
        %2908 = vmatpush2.msra.mxu0 0.0
        %2909 = vmatprep.subr.mxu0 0.0
        %2910 = vmatpush2.msra.mxu0 0.0
        %2911 = vmatprep.subr.mxu0 0.0
        %2912 = vmatpush2.msra.mxu0 0.0
        %2913 = vmatprep.subr.mxu0 0.0
        %2914 = vmatpush2.msra.mxu0 0.0
        %2915 = vmatprep.subr.mxu0 0.0
        %2916 = vmatpush2.msra.mxu0 0.0
        %2917 = vmatprep.subr.mxu0 0.0
        %2918 = vmatpush2.msra.mxu0 0.0
        %2919 = vmatprep.subr.mxu0 0.0
        %2920 = vmatpush2.msra.mxu0 0.0
        %2921 = vmatprep.mubr.f32.mxu0 0.0
        %2922 = vmatmul.mubr.f32.gmra.mxu0 %v2849
        %v2923 = vpop.f32.mrf.mxu0
        %v2924 = vadd.f32 %v2846, %v2923
        %v2925 = vpop.f32.mrf.mxu0
        %2926 = vmatprep.mubr.f32.mxu0 0.0
        %2927 = vmatmul.mubr.f32.gmra.mxu0 %v2852
        %v2928 = vpop.f32.mrf.mxu0
        %v2929 = vadd.f32 %v2846, %v2928
        %v2930 = vpop.f32.mrf.mxu0
        %2931 = vmatprep.mubr.f32.mxu0 0.0
        %2932 = vmatmul.mubr.f32.gmra.mxu0 %v2855
        %v2933 = vpop.f32.mrf.mxu0
        %v2934 = vadd.f32 %v2846, %v2933
        %v2935 = vpop.f32.mrf.mxu0
        %2936 = vdwg.mxu0
        %v2937 = vadd.f32 %v2614, %v2924
        %v2938 = vadd.f32 %v2615, %v2929
        %v2939 = vadd.f32 %v2616, %v2934
        %2940 = vst.msk [vmem:[%s19] sm:$0xff] %vm1783, %v2937
        %2941 = vst.msk [vmem:[%s19 + $0x8] sm:$0xff] %vm1783, %v2938
        %2942 = vst.msk [vmem:[%s19 + $0x10] sm:$0xff] %vm1783, %v2939
        %v2943 = vld [vmem:[%s1] sm:$0xff]
        %v2944 = vld [vmem:[%s1 + $0x8] sm:$0xff]
        %v2945 = vld [vmem:[%s1 + $0x10] sm:$0xff]
        %2946 = vrot.lane.b32.xlu0 %v2617, 96
        %v2947 = vpop.permute.xlu0 %2946
        %2948 = vrot.lane.b32.xlu0 %v2618, 96
        %v2949 = vpop.permute.xlu0 %2948
        %2950 = vrot.lane.b32.xlu0 %v2619, 96
        %v2951 = vpop.permute.xlu0 %2950
        %v2955 = vadd.f32 %v2943, %v2947
        %v2956 = vadd.f32 %v2944, %v2949
        %v2957 = vadd.f32 %v2945, %v2951
        %2958 = vst.msk [vmem:[%s20] sm:$0xff] %vm1373, %v2955
        %2959 = vst.msk [vmem:[%s20 + $0x8] sm:$0xff] %vm1373, %v2956
        %2960 = vst.msk [vmem:[%s20 + $0x10] sm:$0xff] %vm1373, %v2957
      $region104: #{egcl_forward.1} parent=95 // pred_fallthru
        _
      // Predicated region
      $region105: #{egcl_forward.1} parent=95 // pred_check
        %p2961 = pneg %p459
      $region106: #{egcl_forward.1} parent=95 // pred_check_branch
        %2963 = sbr.rel (%p2961) target = $region108
      $region107: #{egcl_forward.1} parent=95 // pred_region
        _
      $region108: #{egcl_forward.1} parent=95 // pred_fallthru
        _
      // Predicated region
      $region109: #{egcl_forward.1} parent=95 // pred_check
        %p2964 = pneg %p480
      $region110: #{egcl_forward.1} parent=95 // pred_check_branch
        %2966 = sbr.rel (%p2964) target = $region112
      $region111: #{egcl_forward.1} parent=95 // pred_region
        _
      $region112: #{egcl_forward.1} parent=95 // pred_fallthru
        _
      // Predicated region
      $region113: #{egcl_forward.1} parent=95 // pred_check
        %p2967 = pneg %p459
      $region114: #{egcl_forward.1} parent=95 // pred_check_branch
        %2969 = sbr.rel (%p2967) target = $region116
      $region115: #{egcl_forward.1} parent=95 // pred_region
        _
      $region116: #{egcl_forward.1} parent=95 // pred_fallthru
        _
      // Predicated region
      $region117: #{egcl_forward.1} parent=95 // pred_check
        %p2970 = pneg %p480
      $region118: #{egcl_forward.1} parent=95 // pred_check_branch
        %2972 = sbr.rel (%p2970) target = $region120
      $region119: #{egcl_forward.1} parent=95 // pred_region
        _
      $region120: #{egcl_forward.1} parent=95 // pred_fallthru
        _
    $region96: #{egcl_forward.1} parent=5 // pred_fallthru
      _
    %p2973 = scmp.le.s32.totalorder 2, %s27
    // Predicated region
    $region121: #{egcl_forward.1} parent=5 // pred_check
      %p2974 = pneg %p2973
    $region122: #{egcl_forward.1} parent=5 // pred_check_branch
      %2976 = sbr.rel (%p2974) target = $region124
    $region123: #{egcl_forward.1} parent=5 // pred_region
      %s2977 = ssub.s32 %s27, 2
    $region124: #{egcl_forward.1} parent=5 // pred_fallthru
      _
  $region6: #{egcl_forward.1} parent=0 // loop_footer
    %s31 = sadd.s32 1, %s27
  $region7: #{egcl_forward.1} parent=0 // loop_footer_branch
    %26 = sbr.rel target = $region3
  $region8: #{egcl_forward.1} parent=0 // loop_exit
    _

</llo_original>
